<compile_context>
chip_gen: v7x
topology: tpu7x:2x2x1
jax: 0.10.0
libtpu: 0.0.40
codegen_flags: <defaults>
</compile_context>

<pallas_src>
import functools
import math

import jax
import jax.numpy as jnp
from jax import lax
from jax.experimental import pallas as pl
from jax.experimental.pallas import tpu as pltpu


def _attention_kernel(num_heads, x_ref, wqkv_ref, bqkv_ref, wo_ref, bo_ref,
                      mask_ref, o_ref):
    """One batch element per grid step.

    x_ref    : (1, N, C)  bf16 tokens
    wqkv_ref : (C, 3C)    bf16 fused QKV weight, transposed (x @ W); softmax
                          scale pre-folded into the Q columns
    bqkv_ref : (1, 3C)    f32 fused QKV bias (Q part pre-scaled)
    wo_ref   : (C, C)     bf16 output projection (transposed)
    bo_ref   : (1, C)     f32 output projection bias
    mask_ref : (H, C)     f32 per-head lane mask: mask[h, c] = (c // D == h)
    o_ref    : (1, N, C)  output block
    """
    N = x_ref.shape[1]
    C = x_ref.shape[2]
    H = num_heads

    x = x_ref[0]                                                # (N, C) bf16

    # Fused QKV projection: single full-depth MXU matmul + bias (f32 acc).
    qkv = jnp.dot(x, wqkv_ref[...],
                  preferred_element_type=jnp.float32) + bqkv_ref[...]  # (N, 3C)

    q = qkv[:, :C]                          # f32; scale already folded into Wq
    k = qkv[:, C:2 * C].astype(jnp.bfloat16)
    v = qkv[:, 2 * C:].astype(jnp.bfloat16)

    # Heads-batched scores without per-head lane slicing: replicate q over a
    # leading head axis, zero the lanes outside each head, and fold (H, N)
    # into the sublane axis.  Row (h*N + n) of the big matmul then sees only
    # head h's columns of q and therefore contracts only head h's columns of k.
    mask = mask_ref[...]                                        # (H, C) f32
    qb = (q[None, :, :] * mask[:, None, :]).astype(jnp.bfloat16)   # (H, N, C)
    qb = qb.reshape(H * N, C)

    s = lax.dot_general(qb, k, (((1,), (1,)), ((), ())),
                        preferred_element_type=jnp.float32)     # (H*N, N)
    s = s - jnp.max(s, axis=-1, keepdims=True)
    p = jnp.exp(s)
    denom = jnp.sum(p, axis=-1, keepdims=True)                  # (H*N, 1)

    # Deferred normalization: unnormalized p @ v first (f32 accumulation),
    # normalize the context afterwards, still in f32, then cast to bf16.
    ctx_all = jnp.dot(p.astype(jnp.bfloat16), v,
                      preferred_element_type=jnp.float32)       # (H*N, C)
    ctx_all = ctx_all * pl.reciprocal(denom, approx=True)

    # Per-head column select: in row block h only head h's D columns are the
    # wanted context; mask and sum the head blocks back into one lane-dense
    # (N, C) context slab.
    ctx = jnp.sum(ctx_all.reshape(H, N, C) * mask[:, None, :],
                  axis=0).astype(jnp.bfloat16)                  # (N, C)

    # Single full-depth output projection + bias.
    out = jnp.dot(ctx, wo_ref[...], preferred_element_type=jnp.float32)
    o_ref[0] = (out + bo_ref[...]).astype(o_ref.dtype)


def attention_imagenet(x, w_qkv, b_qkv, w_proj, b_proj, num_heads):
    """x: (B, N, C) f32; w_qkv: (3C, C); b_qkv: (3C,); w_proj: (C, C); b_proj: (C,)."""
    B, N, C = x.shape
    assert C % num_heads == 0
    head_dim = C // num_heads
    scale = head_dim ** -0.5
    out_dtype = x.dtype

    # Wrapper-side prep (once, off the hot path): fuse QKV weight/bias, fold
    # the softmax scale into the Q part, transpose so the kernel does x @ W,
    # cast matmul operands to bf16, build the per-head lane mask.
    w_fused = jnp.concatenate(
        [w_qkv[:C, :].T * scale, w_qkv[C:2 * C, :].T, w_qkv[2 * C:, :].T],
        axis=1).astype(jnp.bfloat16)                            # (C, 3C)
    b_fused = jnp.concatenate(
        [b_qkv[:C] * scale, b_qkv[C:]]).reshape(1, 3 * C).astype(jnp.float32)
    w_o = w_proj.T.astype(jnp.bfloat16)                         # (C, C)
    b_o = b_proj.reshape(1, C).astype(jnp.float32)              # (1, C)
    head_ids = jnp.arange(C, dtype=jnp.int32) // head_dim
    head_mask = (head_ids[None, :] ==
                 jnp.arange(num_heads, dtype=jnp.int32)[:, None]
                 ).astype(jnp.float32)                          # (H, C)
    x_bf = x.astype(jnp.bfloat16)

    kernel = functools.partial(_attention_kernel, num_heads)

    def run(single_buffer_weights):
        def const_spec(shape):
            idx = lambda b: (0,) * len(shape)
            if single_buffer_weights:
                # Grid-invariant operands: a single buffer halves their VMEM
                # footprint (matters at real ViT sizes on v7x's 64 MiB VMEM).
                return pl.BlockSpec(shape, idx, pipeline_mode=pl.Buffered(1))
            return pl.BlockSpec(shape, idx)

        return pl.pallas_call(
            kernel,
            out_shape=jax.ShapeDtypeStruct((B, N, C), out_dtype),
            grid_spec=pltpu.PrefetchScalarGridSpec(
                num_scalar_prefetch=0,
                grid=(B,),
                in_specs=[
                    pl.BlockSpec((1, N, C), lambda b: (b, 0, 0)),  # x
                    const_spec((C, 3 * C)),                        # fused Wqkv
                    const_spec((1, 3 * C)),                        # fused bqkv
                    const_spec((C, C)),                            # Wo
                    const_spec((1, C)),                            # bo
                    const_spec((num_heads, C)),                    # head mask
                ],
                out_specs=pl.BlockSpec((1, N, C), lambda b: (b, 0, 0)),
            ),
            compiler_params=pltpu.CompilerParams(
                dimension_semantics=("parallel",),
                vmem_limit_bytes=32 * 1024 * 1024),
        )(x_bf, w_fused, b_fused, w_o, b_o, head_mask)

    try:
        return run(single_buffer_weights=True)
    except (TypeError, ValueError, NotImplementedError, pltpu.LoweringException):
        # Narrow fallback only for Pallas builds that reject single-buffered
        # (pipeline_mode=Buffered(1)) BlockSpecs; numerically identical, just
        # default double-buffered weights.  Runtime/OOM errors still propagate.
        return run(single_buffer_weights=False)


def _reference(x, w_qkv, b_qkv, w_proj, b_proj, num_heads):
    """Pure-JAX (f32) replica of the PyTorch AttentionImageNet forward (eval)."""
    B, N, C = x.shape
    D = C // num_heads
    scale = D ** -0.5
    qkv = x @ w_qkv.T + b_qkv                               # (B, N, 3C)
    qkv = qkv.reshape(B, N, 3, num_heads, D).transpose(2, 0, 3, 1, 4)
    q, k, v = qkv[0], qkv[1], qkv[2]                        # (B, H, N, D)
    attn = jnp.einsum('bhnd,bhmd->bhnm', q, k) * scale
    attn = jax.nn.softmax(attn, axis=-1)
    out = jnp.einsum('bhnm,bhmd->bhnd', attn, v)            # (B, H, N, D)
    out = out.transpose(0, 2, 1, 3).reshape(B, N, C)
    return out @ w_proj.T + b_proj


if __name__ == "__main__":
    # Small but lane-dense demo shapes (N, C multiples of 128; B=2 keeps both
    # v7x TensorCores busy on the parallel batch grid).
    B, N, C = 2, 128, 128
    num_heads = 8

    key = jax.random.PRNGKey(0)
    kx, kqkv, kbq, kproj, kb = jax.random.split(key, 5)

    x = jax.random.normal(kx, (B, N, C), dtype=jnp.float32)
    bound = 1.0 / math.sqrt(C)     # PyTorch-Linear-like uniform init range
    w_qkv = jax.random.uniform(kqkv, (3 * C, C), jnp.float32, -bound, bound)
    b_qkv = jax.random.uniform(kbq, (3 * C,), jnp.float32, -bound, bound)
    w_proj = jax.random.uniform(kproj, (C, C), jnp.float32, -bound, bound)
    b_proj = jax.random.uniform(kb, (C,), jnp.float32, -bound, bound)

    out = attention_imagenet(x, w_qkv, b_qkv, w_proj, b_proj, num_heads)
    out = jax.block_until_ready(out)

    ref = _reference(x, w_qkv, b_qkv, w_proj, b_proj, num_heads)
    assert out.shape == (B, N, C)
    max_err = float(jnp.max(jnp.abs(out - ref)))
    # bf16 matmul operands + approx reciprocal -> looser-than-f32 tolerance.
    assert jnp.allclose(out, ref, atol=2e-2, rtol=2e-2), (
        f"mismatch vs reference (max abs err {max_err:.4e})")
    print("KERNEL_OK")
</pallas_src>

<mosaic_0001>
module attributes {stable_mosaic.version = 11 : i64} {
  func.func @_attention_kernel(%arg0: i32, %arg1: memref<1x128x128xbf16, #tpu.memory_space<vmem>>, %arg2: memref<128x384xbf16, #tpu.memory_space<vmem>>, %arg3: memref<1x384xf32, #tpu.memory_space<vmem>>, %arg4: memref<128x128xbf16, #tpu.memory_space<vmem>>, %arg5: memref<1x128xf32, #tpu.memory_space<vmem>>, %arg6: memref<8x128xf32, #tpu.memory_space<vmem>>, %arg7: memref<1x128x128xf32, #tpu.memory_space<vmem>>) attributes {dimension_semantics = [#tpu.dimension_semantics<parallel>], iteration_bounds = array<i64: 2>, scalar_prefetch = 0 : i64, scratch_operands = 0 : i64, tpu.core_type = #tpu.core_type<tc>, window_params = [{transform_indices = @transform_0, window_bounds = array<i64: 1, 128, 128>}, {pipeline_mode = #tpu.pipeline_mode<synchronous>, transform_indices = @transform_1, window_bounds = array<i64: 128, 384>}, {pipeline_mode = #tpu.pipeline_mode<synchronous>, transform_indices = @transform_2, window_bounds = array<i64: 1, 384>}, {pipeline_mode = #tpu.pipeline_mode<synchronous>, transform_indices = @transform_3, window_bounds = array<i64: 128, 128>}, {pipeline_mode = #tpu.pipeline_mode<synchronous>, transform_indices = @transform_4, window_bounds = array<i64: 1, 128>}, {pipeline_mode = #tpu.pipeline_mode<synchronous>, transform_indices = @transform_5, window_bounds = array<i64: 8, 128>}, {transform_indices = @transform_6, window_bounds = array<i64: 1, 128, 128>}]} {
    %c0 = arith.constant 0 : index
    %c0_0 = arith.constant 0 : index
    %c0_1 = arith.constant 0 : index
    %0 = vector.load %arg1[%c0, %c0_0, %c0_1] : memref<1x128x128xbf16, #tpu.memory_space<vmem>>, vector<1x128x128xbf16>
    %1 = vector.shape_cast %0 : vector<1x128x128xbf16> to vector<128x128xbf16>
    %c0_2 = arith.constant 0 : index
    %c0_3 = arith.constant 0 : index
    %2 = vector.load %arg2[%c0_2, %c0_3] : memref<128x384xbf16, #tpu.memory_space<vmem>>, vector<128x384xbf16>
    %cst = arith.constant dense<0.000000e+00> : vector<128x384xf32>
    %3 = tpu.matmul %1, %2, %cst {dimension_numbers = #tpu.dot_dimension_numbers<[1], [0], [0], [1], [0, 0, 1, 1], [], []>} : vector<128x128xbf16>, vector<128x384xbf16>, vector<128x384xf32> -> vector<128x384xf32>
    %c0_4 = arith.constant 0 : index
    %c0_5 = arith.constant 0 : index
    %4 = vector.load %arg3[%c0_4, %c0_5] : memref<1x384xf32, #tpu.memory_space<vmem>>, vector<1x384xf32>
    %5 = vector.broadcast %4 : vector<1x384xf32> to vector<128x384xf32>
    %6 = arith.addf %3, %5 : vector<128x384xf32>
    %7 = vector.extract_strided_slice %6 {offsets = [0, 0], sizes = [128, 128], strides = [1, 1]} : vector<128x384xf32> to vector<128x128xf32>
    %8 = vector.extract_strided_slice %6 {offsets = [0, 128], sizes = [128, 128], strides = [1, 1]} : vector<128x384xf32> to vector<128x128xf32>
    %9 = arith.truncf %8 : vector<128x128xf32> to vector<128x128xbf16>
    %10 = vector.extract_strided_slice %6 {offsets = [0, 256], sizes = [128, 128], strides = [1, 1]} : vector<128x384xf32> to vector<128x128xf32>
    %11 = arith.truncf %10 : vector<128x128xf32> to vector<128x128xbf16>
    %c0_6 = arith.constant 0 : index
    %c0_7 = arith.constant 0 : index
    %12 = vector.load %arg6[%c0_6, %c0_7] : memref<8x128xf32, #tpu.memory_space<vmem>>, vector<8x128xf32>
    %13 = vector.shape_cast %7 : vector<128x128xf32> to vector<1x128x128xf32>
    %14 = vector.shape_cast %12 : vector<8x128xf32> to vector<8x1x128xf32>
    %15 = vector.broadcast %13 : vector<1x128x128xf32> to vector<8x128x128xf32>
    %16 = vector.broadcast %14 : vector<8x1x128xf32> to vector<8x128x128xf32>
    %17 = arith.mulf %15, %16 : vector<8x128x128xf32>
    %18 = arith.truncf %17 : vector<8x128x128xf32> to vector<8x128x128xbf16>
    %19 = vector.shape_cast %18 : vector<8x128x128xbf16> to vector<1024x128xbf16>
    %cst_8 = arith.constant dense<0.000000e+00> : vector<1024x128xf32>
    %20 = tpu.matmul %19, %9, %cst_8 {dimension_numbers = #tpu.dot_dimension_numbers<[1], [1], [0], [0], [0, 0, 1, 0], [], []>} : vector<1024x128xbf16>, vector<128x128xbf16>, vector<1024x128xf32> -> vector<1024x128xf32>
    %cst_9 = arith.constant dense<0xFF800000> : vector<1024xf32>
    %21 = vector.multi_reduction <maximumf>, %20, %cst_9 [1] : vector<1024x128xf32> to vector<1024xf32>
    %22 = vector.shape_cast %21 : vector<1024xf32> to vector<1024x1xf32>
    %23 = vector.broadcast %22 : vector<1024x1xf32> to vector<1024x128xf32>
    %24 = arith.subf %20, %23 : vector<1024x128xf32>
    %25 = math.exp %24 : vector<1024x128xf32>
    %cst_10 = arith.constant dense<0.000000e+00> : vector<1024xf32>
    %26 = vector.multi_reduction <add>, %25, %cst_10 [1] : vector<1024x128xf32> to vector<1024xf32>
    %27 = vector.shape_cast %26 : vector<1024xf32> to vector<1024x1xf32>
    %28 = arith.truncf %25 : vector<1024x128xf32> to vector<1024x128xbf16>
    %cst_11 = arith.constant dense<0.000000e+00> : vector<1024x128xf32>
    %29 = tpu.matmul %28, %11, %cst_11 {dimension_numbers = #tpu.dot_dimension_numbers<[1], [0], [0], [1], [0, 0, 1, 1], [], []>} : vector<1024x128xbf16>, vector<128x128xbf16>, vector<1024x128xf32> -> vector<1024x128xf32>
    %30 = tpu.reciprocal %27 {approx = true} : vector<1024x1xf32> -> vector<1024x1xf32>
    %31 = vector.broadcast %30 : vector<1024x1xf32> to vector<1024x128xf32>
    %32 = arith.mulf %29, %31 : vector<1024x128xf32>
    %33 = vector.shape_cast %32 : vector<1024x128xf32> to vector<8x128x128xf32>
    %34 = vector.shape_cast %12 : vector<8x128xf32> to vector<8x1x128xf32>
    %35 = vector.broadcast %34 : vector<8x1x128xf32> to vector<8x128x128xf32>
    %36 = arith.mulf %33, %35 : vector<8x128x128xf32>
    %cst_12 = arith.constant dense<0.000000e+00> : vector<128x128xf32>
    %37 = vector.multi_reduction <add>, %36, %cst_12 [0] : vector<8x128x128xf32> to vector<128x128xf32>
    %38 = arith.truncf %37 : vector<128x128xf32> to vector<128x128xbf16>
    %c0_13 = arith.constant 0 : index
    %c0_14 = arith.constant 0 : index
    %39 = vector.load %arg4[%c0_13, %c0_14] : memref<128x128xbf16, #tpu.memory_space<vmem>>, vector<128x128xbf16>
    %cst_15 = arith.constant dense<0.000000e+00> : vector<128x128xf32>
    %40 = tpu.matmul %38, %39, %cst_15 {dimension_numbers = #tpu.dot_dimension_numbers<[1], [0], [0], [1], [0, 0, 1, 1], [], []>} : vector<128x128xbf16>, vector<128x128xbf16>, vector<128x128xf32> -> vector<128x128xf32>
    %c0_16 = arith.constant 0 : index
    %c0_17 = arith.constant 0 : index
    %41 = vector.load %arg5[%c0_16, %c0_17] : memref<1x128xf32, #tpu.memory_space<vmem>>, vector<1x128xf32>
    %42 = vector.broadcast %41 : vector<1x128xf32> to vector<128x128xf32>
    %43 = arith.addf %40, %42 : vector<128x128xf32>
    %c0_18 = arith.constant 0 : index
    %c0_19 = arith.constant 0 : index
    %c0_20 = arith.constant 0 : index
    %44 = vector.load %arg7[%c0_18, %c0_19, %c0_20] : memref<1x128x128xf32, #tpu.memory_space<vmem>>, vector<1x128x128xf32>
    %45 = vector.shape_cast %44 : vector<1x128x128xf32> to vector<128x128xf32>
    %46 = vector.shape_cast %43 : vector<128x128xf32> to vector<1x128x128xf32>
    tpu.vector_store %arg7[%c0_18, %c0_19, %c0_20], %46 {strides = array<i32>} : memref<1x128x128xf32, #tpu.memory_space<vmem>>, vector<1x128x128xf32>,
    return
  }
  func.func @transform_0(%arg0: i32) -> (i32, i32, i32) {
    %c0_i32 = arith.constant 0 : i32
    %c0_i32_0 = arith.constant 0 : i32
    %c0_i32_1 = arith.constant 0 : i32
    return %arg0, %c0_i32, %c0_i32_0 : i32, i32, i32
  }
  func.func @transform_1(%arg0: i32) -> (i32, i32) {
    %c0_i32 = arith.constant 0 : i32
    %c0_i32_0 = arith.constant 0 : i32
    %c0_i32_1 = arith.constant 0 : i32
    return %c0_i32, %c0_i32_0 : i32, i32
  }
  func.func @transform_2(%arg0: i32) -> (i32, i32) {
    %c0_i32 = arith.constant 0 : i32
    %c0_i32_0 = arith.constant 0 : i32
    %c0_i32_1 = arith.constant 0 : i32
    return %c0_i32, %c0_i32_0 : i32, i32
  }
  func.func @transform_3(%arg0: i32) -> (i32, i32) {
    %c0_i32 = arith.constant 0 : i32
    %c0_i32_0 = arith.constant 0 : i32
    %c0_i32_1 = arith.constant 0 : i32
    return %c0_i32, %c0_i32_0 : i32, i32
  }
  func.func @transform_4(%arg0: i32) -> (i32, i32) {
    %c0_i32 = arith.constant 0 : i32
    %c0_i32_0 = arith.constant 0 : i32
    %c0_i32_1 = arith.constant 0 : i32
    return %c0_i32, %c0_i32_0 : i32, i32
  }
  func.func @transform_5(%arg0: i32) -> (i32, i32) {
    %c0_i32 = arith.constant 0 : i32
    %c0_i32_0 = arith.constant 0 : i32
    %c0_i32_1 = arith.constant 0 : i32
    return %c0_i32, %c0_i32_0 : i32, i32
  }
  func.func @transform_6(%arg0: i32) -> (i32, i32, i32) {
    %c0_i32 = arith.constant 0 : i32
    %c0_i32_0 = arith.constant 0 : i32
    %c0_i32_1 = arith.constant 0 : i32
    return %arg0, %c0_i32, %c0_i32_0 : i32, i32, i32
  }
}

</mosaic_0001>

<llo_original>
// kernel: tpu_custom_call.1
$region0: #{tpu_custom_call.1}
  #allocation0 [shape = 'u32[]', space=smem, size = 0x4, offset = 0x4, fixed_abs, tag = 'smem constant byte address 0x4 - core index']
  #allocation1 [shape = 'u32[144,128]{1,0:T(1,128)}', space=vmem, size = 0x12000, scoped, tag = 'internal scratch']
  %s0 = inlined_call_operand.hbm [shape: bf16[2,128,128], index: 0, kind: input, shape index: {}]
  %s1 = inlined_call_operand.hbm [shape: bf16[128,384], index: 1, kind: input, shape index: {}]
  %s2 = inlined_call_operand.vmem [shape: f32[1,384], index: 2, kind: input, shape index: {}]
  %s3 = inlined_call_operand.hbm [shape: bf16[128,128], index: 3, kind: input, shape index: {}]
  %s4 = inlined_call_operand.vmem [shape: f32[1,128], index: 4, kind: input, shape index: {}]
  %s5 = inlined_call_operand.vmem [shape: f32[8,128], index: 5, kind: input, shape index: {}]
  %s6 = inlined_call_operand.hbm [shape: f32[2,128,128], index: 6, kind: output, shape index: {}]
  %s7 = sld [smem:[#allocation0]]
  $region69: #{tpu_custom_call.1} parent=0
    _
  %s9 = ssub.s32 1, %s7
  %s10 = scalar_select 0, %s9, %s7
  $region1: #{tpu_custom_call.1} parent=0
    #allocation2 [shape = 'u8[65536]{0}', space=vmem, size = 0x10000, scoped, tag = 'input window, operand 0']
    #allocation3 [shape = 's32[2]{0}', space=sflag, size = 0x8, scoped, tag = 'scoped memory for tpu_custom_call.1']
    #allocation4 [shape = 's32[2]{0}', space=sflag, size = 0x8, scoped, tag = 'scoped memory for tpu_custom_call.1']
    #allocation5 [shape = 'u8[98304]{0}', space=vmem, size = 0x18000, scoped, tag = 'input window, operand 1, single buffered']
    #allocation6 [shape = 's32[1]{0}', space=sflag, size = 0x4, scoped, tag = 'scoped memory for tpu_custom_call.1']
    #allocation7 [shape = 'u8[32768]{0}', space=vmem, size = 0x8000, scoped, tag = 'input window, operand 3, single buffered']
    #allocation8 [shape = 'u8[131072]{0}', space=vmem, size = 0x20000, scoped, tag = 'output window, operand 0']
    %11 = vsyncpa [#allocation3], 0
    %s12 = scalar_lea.sflag [#allocation3], 1
    %13 = vsyncpa %s12, 0
    %14 = vsyncpa [#allocation6], 0
    %15 = vsyncpa [#allocation4], 0
    %s16 = scalar_lea.sflag [#allocation4], 1
    %17 = vsyncpa %s16, 0
    loop: start=0, step=1, limit=4
    $region2: #{tpu_custom_call.1} parent=1 // loop_pre_header
      _
    $region3: #{tpu_custom_call.1} parent=1 // loop_header
      %s19 = sphi 0, %s23
      %p20 = scmp.ge.s32.totalorder %s19, 4
      %s29 = sphi 0, %s31
      %s32 = sphi 0, %s29
      %s33 = sphi 0, %s32
      %s49 = sphi 0, %s33
      %s53 = sphi 0, %s53
      %s55 = sphi 0, %s53
      %s56 = sphi 0, %s55
      %s70 = sphi 0, %s56
      %s74 = sphi 0, %s74
      %s76 = sphi 0, %s74
      %s77 = sphi 0, %s76
      %s91 = sphi 0, %s77
      %s95 = sphi 0, %s95
      %s97 = sphi 0, %s95
      %s98 = sphi 0, %s97
      %s112 = sphi 0, %s98
      %s116 = sphi 0, %s116
      %s118 = sphi 0, %s116
      %s119 = sphi 0, %s118
      %s133 = sphi 0, %s119
      %s137 = sphi 0, %s137
      %s139 = sphi 0, %s137
      %s140 = sphi 0, %s139
      %s154 = sphi 0, %s140
      %s160 = sphi 0, %s162
      %s163 = sphi 0, %s160
      %s164 = sphi 0, %s163
      %s180 = sphi 0, %s164
    $region4: #{tpu_custom_call.1} parent=1 // loop_header_branch
      %22 = sbr.rel (%p20) target = $region8
    $region5: #{tpu_custom_call.1} parent=1 // loop_body
      %s24 = ssub.s32 %s19, 1
      %s25 = ssub.s32 %s19, 2
      %s26 = sadd.s32 %s19, 1
      %s27 = ssub.s32 %s19, %s26
      %p28 = scmp.eq.s32.totalorder %s27, 0
      %s30 = sadd.s32 %s29, 1
      %s31 = scalar_select %p28, %s29, %s30
      %p34 = pneg %p28
      %p35 = scmp.eq.s32.totalorder %s19, 1
      %p36 = por %p34, %p35
      %p37 = scmp.ne.s32.totalorder %s29, %s32
      %p38 = scmp.eq.s32.totalorder %s19, 0
      %p39 = por %p37, %p38
      %p40 = scmp.ne.s32.totalorder %s29, %s32
      %p41 = scmp.eq.s32.totalorder %s24, 1
      %p42 = por %p40, %p41
      %p43 = scmp.ne.s32.totalorder %s32, %s33
      %p44 = scmp.eq.s32.totalorder %s24, 0
      %p45 = por %p43, %p44
      %p46 = scmp.ne.s32.totalorder %s32, %s33
      %p47 = scmp.eq.s32.totalorder %s25, 1
      %p48 = por %p46, %p47
      %p50 = scmp.ne.s32.totalorder %s33, %s49
      %p51 = scmp.eq.s32.totalorder %s25, 0
      %p52 = por %p50, %p51
      %s54 = sadd.s32 %s53, 1
      %p57 = scmp.eq.s32.totalorder %s19, 1
      %p58 = scmp.ne.s32.totalorder %s53, %s55
      %p59 = scmp.eq.s32.totalorder %s19, 0
      %p60 = por %p58, %p59
      %p61 = scmp.ne.s32.totalorder %s53, %s55
      %p62 = scmp.eq.s32.totalorder %s24, 1
      %p63 = por %p61, %p62
      %p64 = scmp.ne.s32.totalorder %s55, %s56
      %p65 = scmp.eq.s32.totalorder %s24, 0
      %p66 = por %p64, %p65
      %p67 = scmp.ne.s32.totalorder %s55, %s56
      %p68 = scmp.eq.s32.totalorder %s25, 1
      %p69 = por %p67, %p68
      %p71 = scmp.ne.s32.totalorder %s56, %s70
      %p72 = scmp.eq.s32.totalorder %s25, 0
      %p73 = por %p71, %p72
      %s75 = sadd.s32 %s74, 1
      %p78 = scmp.eq.s32.totalorder %s19, 1
      %p79 = scmp.ne.s32.totalorder %s74, %s76
      %p80 = scmp.eq.s32.totalorder %s19, 0
      %p81 = por %p79, %p80
      %p82 = scmp.ne.s32.totalorder %s74, %s76
      %p83 = scmp.eq.s32.totalorder %s24, 1
      %p84 = por %p82, %p83
      %p85 = scmp.ne.s32.totalorder %s76, %s77
      %p86 = scmp.eq.s32.totalorder %s24, 0
      %p87 = por %p85, %p86
      %p88 = scmp.ne.s32.totalorder %s76, %s77
      %p89 = scmp.eq.s32.totalorder %s25, 1
      %p90 = por %p88, %p89
      %p92 = scmp.ne.s32.totalorder %s77, %s91
      %p93 = scmp.eq.s32.totalorder %s25, 0
      %p94 = por %p92, %p93
      %s96 = sadd.s32 %s95, 1
      %p99 = scmp.eq.s32.totalorder %s19, 1
      %p100 = scmp.ne.s32.totalorder %s95, %s97
      %p101 = scmp.eq.s32.totalorder %s19, 0
      %p102 = por %p100, %p101
      %p103 = scmp.ne.s32.totalorder %s95, %s97
      %p104 = scmp.eq.s32.totalorder %s24, 1
      %p105 = por %p103, %p104
      %p106 = scmp.ne.s32.totalorder %s97, %s98
      %p107 = scmp.eq.s32.totalorder %s24, 0
      %p108 = por %p106, %p107
      %p109 = scmp.ne.s32.totalorder %s97, %s98
      %p110 = scmp.eq.s32.totalorder %s25, 1
      %p111 = por %p109, %p110
      %p113 = scmp.ne.s32.totalorder %s98, %s112
      %p114 = scmp.eq.s32.totalorder %s25, 0
      %p115 = por %p113, %p114
      %s117 = sadd.s32 %s116, 1
      %p120 = scmp.eq.s32.totalorder %s19, 1
      %p121 = scmp.ne.s32.totalorder %s116, %s118
      %p122 = scmp.eq.s32.totalorder %s19, 0
      %p123 = por %p121, %p122
      %p124 = scmp.ne.s32.totalorder %s116, %s118
      %p125 = scmp.eq.s32.totalorder %s24, 1
      %p126 = por %p124, %p125
      %p127 = scmp.ne.s32.totalorder %s118, %s119
      %p128 = scmp.eq.s32.totalorder %s24, 0
      %p129 = por %p127, %p128
      %p130 = scmp.ne.s32.totalorder %s118, %s119
      %p131 = scmp.eq.s32.totalorder %s25, 1
      %p132 = por %p130, %p131
      %p134 = scmp.ne.s32.totalorder %s119, %s133
      %p135 = scmp.eq.s32.totalorder %s25, 0
      %p136 = por %p134, %p135
      %s138 = sadd.s32 %s137, 1
      %p141 = scmp.eq.s32.totalorder %s19, 1
      %p142 = scmp.ne.s32.totalorder %s137, %s139
      %p143 = scmp.eq.s32.totalorder %s19, 0
      %p144 = por %p142, %p143
      %p145 = scmp.ne.s32.totalorder %s137, %s139
      %p146 = scmp.eq.s32.totalorder %s24, 1
      %p147 = por %p145, %p146
      %p148 = scmp.ne.s32.totalorder %s139, %s140
      %p149 = scmp.eq.s32.totalorder %s24, 0
      %p150 = por %p148, %p149
      %p151 = scmp.ne.s32.totalorder %s139, %s140
      %p152 = scmp.eq.s32.totalorder %s25, 1
      %p153 = por %p151, %p152
      %p155 = scmp.ne.s32.totalorder %s140, %s154
      %p156 = scmp.eq.s32.totalorder %s25, 0
      %p157 = por %p155, %p156
      %s158 = ssub.s32 %s19, %s26
      %p159 = scmp.eq.s32.totalorder %s158, 0
      %s161 = sadd.s32 %s160, 1
      %s162 = scalar_select %p159, %s160, %s161
      %p165 = pneg %p159
      %p166 = scmp.eq.s32.totalorder %s19, 1
      %p167 = por %p165, %p166
      %p168 = scmp.ne.s32.totalorder %s160, %s163
      %p169 = scmp.eq.s32.totalorder %s19, 0
      %p170 = por %p168, %p169
      %p171 = scmp.ne.s32.totalorder %s160, %s163
      %p172 = scmp.eq.s32.totalorder %s24, 1
      %p173 = por %p171, %p172
      %p174 = scmp.ne.s32.totalorder %s163, %s164
      %p175 = scmp.eq.s32.totalorder %s24, 0
      %p176 = por %p174, %p175
      %p177 = scmp.ne.s32.totalorder %s163, %s164
      %p178 = scmp.eq.s32.totalorder %s25, 1
      %p179 = por %p177, %p178
      %p181 = scmp.ne.s32.totalorder %s164, %s180
      %p182 = scmp.eq.s32.totalorder %s25, 0
      %p183 = por %p181, %p182
      %p184 = scmp.le.s32.totalorder 1, %s19
      %p185 = scmp.lt.s32.totalorder %s19, 3
      %p186 = pnand %p184, %p185
      %p187 = pneg %p186
      // Predicated region
      $region9: #{tpu_custom_call.1} parent=5 // pred_check
        _
      $region10: #{tpu_custom_call.1} parent=5 // pred_check_branch
        %189 = sbr.rel (%p186) target = $region12
      $region11: #{tpu_custom_call.1} parent=5 // pred_region
        %s190 = ssub.s32 %s19, 1
        // Predicated region
        $region13: #{tpu_custom_call.1} parent=11 // pred_check
          %p191 = pneg %p66
        $region14: #{tpu_custom_call.1} parent=11 // pred_check_branch
          %193 = sbr.rel (%p191) target = $region16
        $region15: #{tpu_custom_call.1} parent=11 // pred_region
          %s195 = ssub.s32 3072, 3072
          %196 = vsyncadd [#allocation6], %s195
          %s197 = sshll.u32 [#allocation5], 4
          %s198 = int_to_ptr.vmem [resolvable:$true] %s197
          %203 = dma.hbm_to_vmem [thread:$0]  %s1, 3072, %s198, [#allocation6], 192, 192, 12
        $region16: #{tpu_custom_call.1} parent=11 // pred_fallthru
          _
        // Predicated region
        $region17: #{tpu_custom_call.1} parent=11 // pred_check
          %p204 = pneg %p87
        $region18: #{tpu_custom_call.1} parent=11 // pred_check_branch
          %206 = sbr.rel (%p204) target = $region20
        $region19: #{tpu_custom_call.1} parent=11 // pred_region
          _
        $region20: #{tpu_custom_call.1} parent=11 // pred_fallthru
          _
        // Predicated region
        $region21: #{tpu_custom_call.1} parent=11 // pred_check
          %p207 = pneg %p108
        $region22: #{tpu_custom_call.1} parent=11 // pred_check_branch
          %209 = sbr.rel (%p207) target = $region24
        $region23: #{tpu_custom_call.1} parent=11 // pred_region
          %s211 = ssub.s32 1024, 1024
          %212 = vsyncadd [#allocation6], %s211
          %s213 = sshll.u32 [#allocation7], 4
          %s214 = int_to_ptr.vmem [resolvable:$true] %s213
          %219 = dma.hbm_to_vmem [thread:$0]  %s3, 1024, %s214, [#allocation6], 64, 64, 4
        $region24: #{tpu_custom_call.1} parent=11 // pred_fallthru
          _
        // Predicated region
        $region25: #{tpu_custom_call.1} parent=11 // pred_check
          %p220 = pneg %p129
        $region26: #{tpu_custom_call.1} parent=11 // pred_check_branch
          %222 = sbr.rel (%p220) target = $region28
        $region27: #{tpu_custom_call.1} parent=11 // pred_region
          _
        $region28: #{tpu_custom_call.1} parent=11 // pred_fallthru
          _
        // Predicated region
        $region29: #{tpu_custom_call.1} parent=11 // pred_check
          %p223 = pneg %p150
        $region30: #{tpu_custom_call.1} parent=11 // pred_check_branch
          %225 = sbr.rel (%p223) target = $region32
        $region31: #{tpu_custom_call.1} parent=11 // pred_region
          _
        $region32: #{tpu_custom_call.1} parent=11 // pred_fallthru
          _
      $region12: #{tpu_custom_call.1} parent=5 // pred_fallthru
        _
      %p226 = scmp.lt.s32.totalorder %s19, 2
      // Predicated region
      $region33: #{tpu_custom_call.1} parent=5 // pred_check
        %p227 = pneg %p226
      $region34: #{tpu_custom_call.1} parent=5 // pred_check_branch
        %229 = sbr.rel (%p227) target = $region36
      $region35: #{tpu_custom_call.1} parent=5 // pred_region
        // Predicated region
        $region37: #{tpu_custom_call.1} parent=35 // pred_check
          %p230 = pneg %p39
        $region38: #{tpu_custom_call.1} parent=35 // pred_check_branch
          %232 = sbr.rel (%p230) target = $region40
        $region39: #{tpu_custom_call.1} parent=35 // pred_region
          %s233 = sand.u32 %s29, 1
          %s234 = scalar_lea.sflag [#allocation3], %s233
          %s235 = sand.u32 %s29, 1
          %s236 = smul.addr %s235, 64
          %s237 = scalar_lea.vmem [#allocation2], %s236
          %s239 = ssub.s32 1024, 1024
          %240 = vsyncadd %s234, %s239
          %s241 = smul.addr %s19, 16
          %s242 = smul.addr %s241, 64
          %s243 = scalar_lea.hbm %s0, %s242
          %s244 = sshll.u32 %s237, 4
          %s245 = int_to_ptr.vmem [resolvable:$true] %s244
          %250 = dma.hbm_to_vmem [thread:$0]  %s243, 1024, %s245, %s234, 64, 64, 4
        $region40: #{tpu_custom_call.1} parent=35 // pred_fallthru
          _
      $region36: #{tpu_custom_call.1} parent=5 // pred_fallthru
        _
      %p251 = scmp.le.s32.totalorder 1, %s19
      %p252 = scmp.lt.s32.totalorder %s19, 3
      %p253 = pnand %p251, %p252
      %p254 = pneg %p253
      // Predicated region
      $region41: #{tpu_custom_call.1} parent=5 // pred_check
        _
      $region42: #{tpu_custom_call.1} parent=5 // pred_check_branch
        %256 = sbr.rel (%p253) target = $region44
      $region43: #{tpu_custom_call.1} parent=5 // pred_region
        %s257 = ssub.s32 %s19, 1
        %s258 = sand.u32 %s32, 1
        %s259 = scalar_lea.sflag [#allocation3], %s258
        %s260 = sand.u32 %s32, 1
        %s261 = smul.addr %s260, 64
        %s262 = scalar_lea.vmem [#allocation2], %s261
        // Predicated region
        $region45: #{tpu_custom_call.1} parent=43 // pred_check
          %p263 = pneg %p45
        $region46: #{tpu_custom_call.1} parent=43 // pred_check_branch
          %265 = sbr.rel (%p263) target = $region48
        $region47: #{tpu_custom_call.1} parent=43 // pred_region
          %266 = dma.done %s259, 1024
        $region48: #{tpu_custom_call.1} parent=43 // pred_fallthru
          _
        // Predicated region
        $region49: #{tpu_custom_call.1} parent=43 // pred_check
          %p267 = pneg %p66
        $region50: #{tpu_custom_call.1} parent=43 // pred_check_branch
          %269 = sbr.rel (%p267) target = $region52
        $region51: #{tpu_custom_call.1} parent=43 // pred_region
          %270 = dma.done [#allocation6], 3072
        $region52: #{tpu_custom_call.1} parent=43 // pred_fallthru
          _
        // Predicated region
        $region53: #{tpu_custom_call.1} parent=43 // pred_check
          %p271 = pneg %p108
        $region54: #{tpu_custom_call.1} parent=43 // pred_check_branch
          %273 = sbr.rel (%p271) target = $region56
        $region55: #{tpu_custom_call.1} parent=43 // pred_region
          %274 = dma.done [#allocation6], 1024
        $region56: #{tpu_custom_call.1} parent=43 // pred_fallthru
          _
        %s275 = sand.u32 %s32, 1
        %s276 = scalar_lea.sflag [#allocation3], %s275
        %s277 = sand.u32 %s32, 1
        %s278 = smul.addr %s277, 64
        %s279 = scalar_lea.vmem [#allocation2], %s278
        %p280 = pneg %p45
        %p281 = pneg %p42
        %p282 = pneg %p66
        %p283 = pneg %p63
        %p284 = pneg %p87
        %p285 = pneg %p84
        %p286 = pneg %p108
        %p287 = pneg %p105
        %p288 = pneg %p129
        %p289 = pneg %p126
        %p290 = pneg %p150
        %p291 = pneg %p147
        %p292 = pneg %p176
        %p293 = pneg %p173
        %s294 = sand.u32 %s163, 1
        %s295 = scalar_lea.sflag [#allocation4], %s294
        %s296 = sand.u32 %s163, 1
        %s297 = smul.addr %s296, 128
        %s298 = scalar_lea.vmem [#allocation8], %s297
        %v300 = vld [vmem:[%s262] sm:$0xf]
        %v301 = vld [vmem:[%s262 + $0x4] sm:$0xf]
        %v302 = vld [vmem:[%s262 + $0x8] sm:$0xf]
        %v303 = vld [vmem:[%s262 + $0xc] sm:$0xf]
        %v304 = vld [vmem:[%s262 + $0x10] sm:$0xf]
        %v305 = vld [vmem:[%s262 + $0x14] sm:$0xf]
        %v306 = vld [vmem:[%s262 + $0x18] sm:$0xf]
        %v307 = vld [vmem:[%s262 + $0x1c] sm:$0xf]
        %v308 = vld [vmem:[%s262 + $0x20] sm:$0xf]
        %v309 = vld [vmem:[%s262 + $0x24] sm:$0xf]
        %v310 = vld [vmem:[%s262 + $0x28] sm:$0xf]
        %v311 = vld [vmem:[%s262 + $0x2c] sm:$0xf]
        %v312 = vld [vmem:[%s262 + $0x30] sm:$0xf]
        %v313 = vld [vmem:[%s262 + $0x34] sm:$0xf]
        %v314 = vld [vmem:[%s262 + $0x38] sm:$0xf]
        %v315 = vld [vmem:[%s262 + $0x3c] sm:$0xf]
        %v316 = vld [vmem:[#allocation5] sm:$0xff]
        %v317 = vld [vmem:[#allocation5 + $0x8] sm:$0xf]
        %v318 = vld [vmem:[#allocation5 + $0xc] sm:$0xff]
        %v319 = vld [vmem:[#allocation5 + $0x14] sm:$0xf]
        %v320 = vld [vmem:[#allocation5 + $0x18] sm:$0xff]
        %v321 = vld [vmem:[#allocation5 + $0x20] sm:$0xf]
        %v322 = vld [vmem:[#allocation5 + $0x24] sm:$0xff]
        %v323 = vld [vmem:[#allocation5 + $0x2c] sm:$0xf]
        %v324 = vld [vmem:[#allocation5 + $0x30] sm:$0xff]
        %v325 = vld [vmem:[#allocation5 + $0x38] sm:$0xf]
        %v326 = vld [vmem:[#allocation5 + $0x3c] sm:$0xff]
        %v327 = vld [vmem:[#allocation5 + $0x44] sm:$0xf]
        %v328 = vld [vmem:[#allocation5 + $0x48] sm:$0xff]
        %v329 = vld [vmem:[#allocation5 + $0x50] sm:$0xf]
        %v330 = vld [vmem:[#allocation5 + $0x54] sm:$0xff]
        %v331 = vld [vmem:[#allocation5 + $0x5c] sm:$0xf]
        %v332 = vld [vmem:[#allocation5 + $0x60] sm:$0xff]
        %v333 = vld [vmem:[#allocation5 + $0x68] sm:$0xf]
        %v334 = vld [vmem:[#allocation5 + $0x6c] sm:$0xff]
        %v335 = vld [vmem:[#allocation5 + $0x74] sm:$0xf]
        %v336 = vld [vmem:[#allocation5 + $0x78] sm:$0xff]
        %v337 = vld [vmem:[#allocation5 + $0x80] sm:$0xf]
        %v338 = vld [vmem:[#allocation5 + $0x84] sm:$0xff]
        %v339 = vld [vmem:[#allocation5 + $0x8c] sm:$0xf]
        %v340 = vld [vmem:[#allocation5 + $0x90] sm:$0xff]
        %v341 = vld [vmem:[#allocation5 + $0x98] sm:$0xf]
        %v342 = vld [vmem:[#allocation5 + $0x9c] sm:$0xff]
        %v343 = vld [vmem:[#allocation5 + $0xa4] sm:$0xf]
        %v344 = vld [vmem:[#allocation5 + $0xa8] sm:$0xff]
        %v345 = vld [vmem:[#allocation5 + $0xb0] sm:$0xf]
        %v346 = vld [vmem:[#allocation5 + $0xb4] sm:$0xff]
        %v347 = vld [vmem:[#allocation5 + $0xbc] sm:$0xf]
        %v348 = vld [vmem:[%s2] sm:$0x7]
        %v350 = vlaneseq
        %v351 = vshrl.u32 %v350, 7
        %v352 = vsub.s32 0, %v351
        %v353 = vrot.slane %v348, %v352
        %v354 = vlaneseq
        %v355 = vshrl.u32 %v354, 7
        %v356 = vsub.s32 1, %v355
        %v357 = vrot.slane %v348, %v356
        %v358 = vlaneseq
        %v359 = vshrl.u32 %v358, 7
        %v360 = vsub.s32 2, %v359
        %v361 = vrot.slane %v348, %v360
        %v381 = vunpack.c.l.b16 %v300
        %v382 = vunpack.c.l.b16 %v301
        %v383 = vunpack.c.l.b16 %v302
        %v384 = vunpack.c.l.b16 %v303
        %v385 = vunpack.c.l.b16 %v304
        %v386 = vunpack.c.l.b16 %v305
        %v387 = vunpack.c.l.b16 %v306
        %v388 = vunpack.c.l.b16 %v307
        %v389 = vunpack.c.l.b16 %v308
        %v390 = vunpack.c.l.b16 %v309
        %v391 = vunpack.c.l.b16 %v310
        %v392 = vunpack.c.l.b16 %v311
        %v393 = vunpack.c.l.b16 %v312
        %v394 = vunpack.c.l.b16 %v313
        %v395 = vunpack.c.l.b16 %v314
        %v396 = vunpack.c.l.b16 %v315
        %v397 = vpack.c.b16 %v382, %v381
        %v398 = vpack.c.b16 %v384, %v383
        %v399 = vpack.c.b16 %v386, %v385
        %v400 = vpack.c.b16 %v388, %v387
        %v401 = vpack.c.b16 %v390, %v389
        %v402 = vpack.c.b16 %v392, %v391
        %v403 = vpack.c.b16 %v394, %v393
        %v404 = vpack.c.b16 %v396, %v395
        %v445 = vunpack.c.l.b16 %v316
        %v446 = vunpack.c.h.b16 %v316
        %v447 = vunpack.c.l.b16 %v317
        %v448 = vunpack.c.l.b16 %v318
        %v449 = vunpack.c.h.b16 %v318
        %v450 = vunpack.c.l.b16 %v319
        %v451 = vunpack.c.l.b16 %v320
        %v452 = vunpack.c.h.b16 %v320
        %v453 = vunpack.c.l.b16 %v321
        %v454 = vunpack.c.l.b16 %v322
        %v455 = vunpack.c.h.b16 %v322
        %v456 = vunpack.c.l.b16 %v323
        %v457 = vunpack.c.l.b16 %v324
        %v458 = vunpack.c.h.b16 %v324
        %v459 = vunpack.c.l.b16 %v325
        %v460 = vunpack.c.l.b16 %v326
        %v461 = vunpack.c.h.b16 %v326
        %v462 = vunpack.c.l.b16 %v327
        %v463 = vunpack.c.l.b16 %v328
        %v464 = vunpack.c.h.b16 %v328
        %v465 = vunpack.c.l.b16 %v329
        %v466 = vunpack.c.l.b16 %v330
        %v467 = vunpack.c.h.b16 %v330
        %v468 = vunpack.c.l.b16 %v331
        %v469 = vunpack.c.l.b16 %v332
        %v470 = vunpack.c.h.b16 %v332
        %v471 = vunpack.c.l.b16 %v333
        %v472 = vunpack.c.l.b16 %v334
        %v473 = vunpack.c.h.b16 %v334
        %v474 = vunpack.c.l.b16 %v335
        %v475 = vunpack.c.l.b16 %v336
        %v476 = vunpack.c.h.b16 %v336
        %v477 = vunpack.c.l.b16 %v337
        %v478 = vunpack.c.l.b16 %v338
        %v479 = vunpack.c.h.b16 %v338
        %v480 = vunpack.c.l.b16 %v339
        %v481 = vunpack.c.l.b16 %v340
        %v482 = vunpack.c.h.b16 %v340
        %v483 = vunpack.c.l.b16 %v341
        %v484 = vunpack.c.l.b16 %v342
        %v485 = vunpack.c.h.b16 %v342
        %v486 = vunpack.c.l.b16 %v343
        %v487 = vunpack.c.l.b16 %v344
        %v488 = vunpack.c.h.b16 %v344
        %v489 = vunpack.c.l.b16 %v345
        %v490 = vunpack.c.l.b16 %v346
        %v491 = vunpack.c.h.b16 %v346
        %v492 = vunpack.c.l.b16 %v347
        %v493 = vpack.c.b16 %v448, %v445
        %v494 = vpack.c.b16 %v449, %v446
        %v495 = vpack.c.b16 %v450, %v447
        %v496 = vpack.c.b16 %v454, %v451
        %v497 = vpack.c.b16 %v455, %v452
        %v498 = vpack.c.b16 %v456, %v453
        %v499 = vpack.c.b16 %v460, %v457
        %v500 = vpack.c.b16 %v461, %v458
        %v501 = vpack.c.b16 %v462, %v459
        %v502 = vpack.c.b16 %v466, %v463
        %v503 = vpack.c.b16 %v467, %v464
        %v504 = vpack.c.b16 %v468, %v465
        %v505 = vpack.c.b16 %v472, %v469
        %v506 = vpack.c.b16 %v473, %v470
        %v507 = vpack.c.b16 %v474, %v471
        %v508 = vpack.c.b16 %v478, %v475
        %v509 = vpack.c.b16 %v479, %v476
        %v510 = vpack.c.b16 %v480, %v477
        %v511 = vpack.c.b16 %v484, %v481
        %v512 = vpack.c.b16 %v485, %v482
        %v513 = vpack.c.b16 %v486, %v483
        %v514 = vpack.c.b16 %v490, %v487
        %v515 = vpack.c.b16 %v491, %v488
        %v516 = vpack.c.b16 %v492, %v489
        %541 = vmatprep.subr.bf16.mxu0 %v494
        %542 = vmatpush1.bf16.msra.mxu0 %v493
        %543 = vmatprep.subr.bf16.mxu0 %v497
        %544 = vmatpush1.bf16.msra.mxu0 %v496
        %545 = vmatprep.subr.bf16.mxu0 %v500
        %546 = vmatpush1.bf16.msra.mxu0 %v499
        %547 = vmatprep.subr.bf16.mxu0 %v503
        %548 = vmatpush1.bf16.msra.mxu0 %v502
        %549 = vmatprep.subr.bf16.mxu0 %v506
        %550 = vmatpush1.bf16.msra.mxu0 %v505
        %551 = vmatprep.subr.bf16.mxu0 %v509
        %552 = vmatpush1.bf16.msra.mxu0 %v508
        %553 = vmatprep.subr.bf16.mxu0 %v512
        %554 = vmatpush1.bf16.msra.mxu0 %v511
        %555 = vmatprep.subr.bf16.mxu0 %v515
        %556 = vmatpush1.bf16.msra.mxu0 %v514
        %557 = vmatprep.subr.bf16.mxu0 0
        %558 = vmatpush1.bf16.msra.mxu0 0
        %559 = vmatprep.subr.bf16.mxu0 0
        %560 = vmatpush1.bf16.msra.mxu0 0
        %561 = vmatprep.subr.bf16.mxu0 0
        %562 = vmatpush1.bf16.msra.mxu0 0
        %563 = vmatprep.subr.bf16.mxu0 0
        %564 = vmatpush1.bf16.msra.mxu0 0
        %565 = vmatprep.subr.bf16.mxu0 0
        %566 = vmatpush1.bf16.msra.mxu0 0
        %567 = vmatprep.subr.bf16.mxu0 0
        %568 = vmatpush1.bf16.msra.mxu0 0
        %569 = vmatprep.subr.bf16.mxu0 0
        %570 = vmatpush1.bf16.msra.mxu0 0
        %571 = vmatprep.subr.bf16.mxu0 0
        %572 = vmatpush1.bf16.msra.mxu0 0
        %573 = vmatprep.mubr.bf16.mxu0 0
        %574 = vmatmul.mubr.bf16.gmra.mrb[0].mxu0 %v397
        %v575 = vpop.f32.mrb[0].mxu0
        %v576 = vadd.f32 %v353, %v575
        %v577 = vpop.f32.mrb[0].mxu0
        %v578 = vadd.f32 %v357, %v577
        %v579 = vpop.f32.mrb[0].mxu0
        %v580 = vadd.f32 %v353, %v579
        %v581 = vpop.f32.mrb[0].mxu0
        %v582 = vadd.f32 %v357, %v581
        %583 = vmatprep.mubr.bf16.mxu0 0
        %584 = vmatmul.mubr.bf16.gmra.mrb[0].mxu0 %v398
        %v585 = vpop.f32.mrb[0].mxu0
        %v586 = vadd.f32 %v353, %v585
        %v587 = vpop.f32.mrb[0].mxu0
        %v588 = vadd.f32 %v357, %v587
        %v589 = vpop.f32.mrb[0].mxu0
        %v590 = vadd.f32 %v353, %v589
        %v591 = vpop.f32.mrb[0].mxu0
        %v592 = vadd.f32 %v357, %v591
        %593 = vmatprep.mubr.bf16.mxu0 0
        %594 = vmatmul.mubr.bf16.gmra.mrb[0].mxu0 %v399
        %v595 = vpop.f32.mrb[0].mxu0
        %v596 = vadd.f32 %v353, %v595
        %v597 = vpop.f32.mrb[0].mxu0
        %v598 = vadd.f32 %v357, %v597
        %v599 = vpop.f32.mrb[0].mxu0
        %v600 = vadd.f32 %v353, %v599
        %v601 = vpop.f32.mrb[0].mxu0
        %v602 = vadd.f32 %v357, %v601
        %603 = vmatprep.mubr.bf16.mxu0 0
        %604 = vmatmul.mubr.bf16.gmra.mrb[0].mxu0 %v400
        %v605 = vpop.f32.mrb[0].mxu0
        %v606 = vadd.f32 %v353, %v605
        %v607 = vpop.f32.mrb[0].mxu0
        %v608 = vadd.f32 %v357, %v607
        %v609 = vpop.f32.mrb[0].mxu0
        %v610 = vadd.f32 %v353, %v609
        %v611 = vpop.f32.mrb[0].mxu0
        %v612 = vadd.f32 %v357, %v611
        %613 = vmatprep.mubr.bf16.mxu0 0
        %614 = vmatmul.mubr.bf16.gmra.mrb[0].mxu0 %v401
        %v615 = vpop.f32.mrb[0].mxu0
        %v616 = vadd.f32 %v353, %v615
        %v617 = vpop.f32.mrb[0].mxu0
        %v618 = vadd.f32 %v357, %v617
        %v619 = vpop.f32.mrb[0].mxu0
        %v620 = vadd.f32 %v353, %v619
        %v621 = vpop.f32.mrb[0].mxu0
        %v622 = vadd.f32 %v357, %v621
        %623 = vmatprep.mubr.bf16.mxu0 0
        %624 = vmatmul.mubr.bf16.gmra.mrb[0].mxu0 %v402
        %v625 = vpop.f32.mrb[0].mxu0
        %v626 = vadd.f32 %v353, %v625
        %v627 = vpop.f32.mrb[0].mxu0
        %v628 = vadd.f32 %v357, %v627
        %v629 = vpop.f32.mrb[0].mxu0
        %v630 = vadd.f32 %v353, %v629
        %v631 = vpop.f32.mrb[0].mxu0
        %v632 = vadd.f32 %v357, %v631
        %633 = vmatprep.mubr.bf16.mxu0 0
        %634 = vmatmul.mubr.bf16.gmra.mrb[0].mxu0 %v403
        %v635 = vpop.f32.mrb[0].mxu0
        %v636 = vadd.f32 %v353, %v635
        %v637 = vpop.f32.mrb[0].mxu0
        %v638 = vadd.f32 %v357, %v637
        %v639 = vpop.f32.mrb[0].mxu0
        %v640 = vadd.f32 %v353, %v639
        %v641 = vpop.f32.mrb[0].mxu0
        %v642 = vadd.f32 %v357, %v641
        %643 = vmatprep.mubr.bf16.mxu0 0
        %644 = vmatmul.mubr.bf16.gmra.mrb[0].mxu0 %v404
        %v645 = vpop.f32.mrb[0].mxu0
        %v646 = vadd.f32 %v353, %v645
        %v647 = vpop.f32.mrb[0].mxu0
        %v648 = vadd.f32 %v357, %v647
        %v649 = vpop.f32.mrb[0].mxu0
        %v650 = vadd.f32 %v353, %v649
        %v651 = vpop.f32.mrb[0].mxu0
        %v652 = vadd.f32 %v357, %v651
        %653 = vdwg.mxu0
        %654 = vmatprep.subr.bf16.mxu0 0
        %655 = vmatpush1.bf16.msra.mxu0 %v495
        %656 = vmatprep.subr.bf16.mxu0 0
        %657 = vmatpush1.bf16.msra.mxu0 %v498
        %658 = vmatprep.subr.bf16.mxu0 0
        %659 = vmatpush1.bf16.msra.mxu0 %v501
        %660 = vmatprep.subr.bf16.mxu0 0
        %661 = vmatpush1.bf16.msra.mxu0 %v504
        %662 = vmatprep.subr.bf16.mxu0 0
        %663 = vmatpush1.bf16.msra.mxu0 %v507
        %664 = vmatprep.subr.bf16.mxu0 0
        %665 = vmatpush1.bf16.msra.mxu0 %v510
        %666 = vmatprep.subr.bf16.mxu0 0
        %667 = vmatpush1.bf16.msra.mxu0 %v513
        %668 = vmatprep.subr.bf16.mxu0 0
        %669 = vmatpush1.bf16.msra.mxu0 %v516
        %670 = vmatprep.subr.bf16.mxu0 0
        %671 = vmatpush1.bf16.msra.mxu0 0
        %672 = vmatprep.subr.bf16.mxu0 0
        %673 = vmatpush1.bf16.msra.mxu0 0
        %674 = vmatprep.subr.bf16.mxu0 0
        %675 = vmatpush1.bf16.msra.mxu0 0
        %676 = vmatprep.subr.bf16.mxu0 0
        %677 = vmatpush1.bf16.msra.mxu0 0
        %678 = vmatprep.subr.bf16.mxu0 0
        %679 = vmatpush1.bf16.msra.mxu0 0
        %680 = vmatprep.subr.bf16.mxu0 0
        %681 = vmatpush1.bf16.msra.mxu0 0
        %682 = vmatprep.subr.bf16.mxu0 0
        %683 = vmatpush1.bf16.msra.mxu0 0
        %684 = vmatprep.subr.bf16.mxu0 0
        %685 = vmatpush1.bf16.msra.mxu0 0
        %686 = vmatprep.mubr.bf16.mxu0 0
        %687 = vmatmul.mubr.bf16.gmra.mrb[0].mxu0 %v397
        %v688 = vpop.f32.mrb[0].mxu0
        %v689 = vadd.f32 %v361, %v688
        %v690 = vpop.f32.mrb[0].mxu0
        %v691 = vpop.f32.mrb[0].mxu0
        %v692 = vadd.f32 %v361, %v691
        %v693 = vpop.f32.mrb[0].mxu0
        %694 = vmatprep.mubr.bf16.mxu0 0
        %695 = vmatmul.mubr.bf16.gmra.mrb[0].mxu0 %v398
        %v696 = vpop.f32.mrb[0].mxu0
        %v697 = vadd.f32 %v361, %v696
        %v698 = vpop.f32.mrb[0].mxu0
        %v699 = vpop.f32.mrb[0].mxu0
        %v700 = vadd.f32 %v361, %v699
        %v701 = vpop.f32.mrb[0].mxu0
        %702 = vmatprep.mubr.bf16.mxu0 0
        %703 = vmatmul.mubr.bf16.gmra.mrb[0].mxu0 %v399
        %v704 = vpop.f32.mrb[0].mxu0
        %v705 = vadd.f32 %v361, %v704
        %v706 = vpop.f32.mrb[0].mxu0
        %v707 = vpop.f32.mrb[0].mxu0
        %v708 = vadd.f32 %v361, %v707
        %v709 = vpop.f32.mrb[0].mxu0
        %710 = vmatprep.mubr.bf16.mxu0 0
        %711 = vmatmul.mubr.bf16.gmra.mrb[0].mxu0 %v400
        %v712 = vpop.f32.mrb[0].mxu0
        %v713 = vadd.f32 %v361, %v712
        %v714 = vpop.f32.mrb[0].mxu0
        %v715 = vpop.f32.mrb[0].mxu0
        %v716 = vadd.f32 %v361, %v715
        %v717 = vpop.f32.mrb[0].mxu0
        %718 = vmatprep.mubr.bf16.mxu0 0
        %719 = vmatmul.mubr.bf16.gmra.mrb[0].mxu0 %v401
        %v720 = vpop.f32.mrb[0].mxu0
        %v721 = vadd.f32 %v361, %v720
        %v722 = vpop.f32.mrb[0].mxu0
        %v723 = vpop.f32.mrb[0].mxu0
        %v724 = vadd.f32 %v361, %v723
        %v725 = vpop.f32.mrb[0].mxu0
        %726 = vmatprep.mubr.bf16.mxu0 0
        %727 = vmatmul.mubr.bf16.gmra.mrb[0].mxu0 %v402
        %v728 = vpop.f32.mrb[0].mxu0
        %v729 = vadd.f32 %v361, %v728
        %v730 = vpop.f32.mrb[0].mxu0
        %v731 = vpop.f32.mrb[0].mxu0
        %v732 = vadd.f32 %v361, %v731
        %v733 = vpop.f32.mrb[0].mxu0
        %734 = vmatprep.mubr.bf16.mxu0 0
        %735 = vmatmul.mubr.bf16.gmra.mrb[0].mxu0 %v403
        %v736 = vpop.f32.mrb[0].mxu0
        %v737 = vadd.f32 %v361, %v736
        %v738 = vpop.f32.mrb[0].mxu0
        %v739 = vpop.f32.mrb[0].mxu0
        %v740 = vadd.f32 %v361, %v739
        %v741 = vpop.f32.mrb[0].mxu0
        %742 = vmatprep.mubr.bf16.mxu0 0
        %743 = vmatmul.mubr.bf16.gmra.mrb[0].mxu0 %v404
        %v744 = vpop.f32.mrb[0].mxu0
        %v745 = vadd.f32 %v361, %v744
        %v746 = vpop.f32.mrb[0].mxu0
        %v747 = vpop.f32.mrb[0].mxu0
        %v748 = vadd.f32 %v361, %v747
        %v749 = vpop.f32.mrb[0].mxu0
        %750 = vdwg.mxu0
        %v751 = vpack.c.bf16 %v582, %v578
        %v752 = vpack.c.bf16 %v592, %v588
        %v753 = vpack.c.bf16 %v602, %v598
        %v754 = vpack.c.bf16 %v612, %v608
        %v755 = vpack.c.bf16 %v622, %v618
        %v756 = vpack.c.bf16 %v632, %v628
        %v757 = vpack.c.bf16 %v642, %v638
        %v758 = vpack.c.bf16 %v652, %v648
        %v759 = vpack.c.bf16 %v692, %v689
        %v760 = vpack.c.bf16 %v700, %v697
        %v761 = vpack.c.bf16 %v708, %v705
        %v762 = vpack.c.bf16 %v716, %v713
        %v763 = vpack.c.bf16 %v724, %v721
        %v764 = vpack.c.bf16 %v732, %v729
        %v765 = vpack.c.bf16 %v740, %v737
        %v766 = vpack.c.bf16 %v748, %v745
        %v767 = vld [vmem:[%s5] sm:$0xff]
        %v769 = vcombine.high %v767, %v767
        %v771 = vunpack.c.l.s4 1966171168
        %v772 = vunpack.c.0.s8 %v771
        %v773 = vlaneseq
        %v774 = vshrl.u32 %v773, 7
        %v775 = vsub.s32 %v772, %v774
        %v776 = vrot.slane %v767, %v775
        %v778 = vunpack.c.l.s4 1966171168
        %v779 = vunpack.c.0.s8 %v778
        %v780 = vlaneseq
        %v781 = vshrl.u32 %v780, 7
        %v782 = vsub.s32 %v779, %v781
        %v783 = vrot.slane %v769, %v782
        %v784 = vcombine.high %v776, %v776
        %v785 = vcombine.high %v783, %v783
        %v787 = vunpack.c.l.s4 1966171168
        %v788 = vunpack.c.0.s8 %v787
        %v789 = vlaneseq
        %v790 = vshrl.u32 %v789, 7
        %v791 = vsub.s32 %v788, %v790
        %v792 = vrot.slane %v776, %v791
        %v794 = vunpack.c.l.s4 1966171168
        %v795 = vunpack.c.0.s8 %v794
        %v796 = vlaneseq
        %v797 = vshrl.u32 %v796, 7
        %v798 = vsub.s32 %v795, %v797
        %v799 = vrot.slane %v783, %v798
        %v801 = vunpack.c.l.s4 1966171168
        %v802 = vunpack.c.0.s8 %v801
        %v803 = vlaneseq
        %v804 = vshrl.u32 %v803, 7
        %v805 = vsub.s32 %v802, %v804
        %v806 = vrot.slane %v784, %v805
        %v808 = vunpack.c.l.s4 1966171168
        %v809 = vunpack.c.0.s8 %v808
        %v810 = vlaneseq
        %v811 = vshrl.u32 %v810, 7
        %v812 = vsub.s32 %v809, %v811
        %v813 = vrot.slane %v785, %v812
        %v814 = vcombine.high %v792, %v792
        %v815 = vcombine.high %v799, %v799
        %v816 = vcombine.high %v806, %v806
        %v817 = vcombine.high %v813, %v813
        %v818 = vlaneseq
        %v819 = vshrl.u32 %v818, 7
        %v820 = vsub.s32 0, %v819
        %v821 = vrot.slane %v792, %v820
        %v822 = vlaneseq
        %v823 = vshrl.u32 %v822, 7
        %v824 = vsub.s32 0, %v823
        %v825 = vrot.slane %v806, %v824
        %v826 = vlaneseq
        %v827 = vshrl.u32 %v826, 7
        %v828 = vsub.s32 0, %v827
        %v829 = vrot.slane %v814, %v828
        %v830 = vlaneseq
        %v831 = vshrl.u32 %v830, 7
        %v832 = vsub.s32 0, %v831
        %v833 = vrot.slane %v816, %v832
        %v834 = vlaneseq
        %v835 = vshrl.u32 %v834, 7
        %v836 = vsub.s32 0, %v835
        %v837 = vrot.slane %v799, %v836
        %v838 = vlaneseq
        %v839 = vshrl.u32 %v838, 7
        %v840 = vsub.s32 0, %v839
        %v841 = vrot.slane %v813, %v840
        %v842 = vlaneseq
        %v843 = vshrl.u32 %v842, 7
        %v844 = vsub.s32 0, %v843
        %v845 = vrot.slane %v815, %v844
        %v846 = vlaneseq
        %v847 = vshrl.u32 %v846, 7
        %v848 = vsub.s32 0, %v847
        %v849 = vrot.slane %v817, %v848
        %v858 = vmul.f32 %v576, %v821
        %v859 = vmul.f32 %v580, %v821
        %v860 = vmul.f32 %v586, %v821
        %v861 = vmul.f32 %v590, %v821
        %v862 = vmul.f32 %v596, %v821
        %v863 = vmul.f32 %v600, %v821
        %v864 = vmul.f32 %v606, %v821
        %v865 = vmul.f32 %v610, %v821
        %v866 = vmul.f32 %v616, %v821
        %v867 = vmul.f32 %v620, %v821
        %v868 = vmul.f32 %v626, %v821
        %v869 = vmul.f32 %v630, %v821
        %v870 = vmul.f32 %v636, %v821
        %v871 = vmul.f32 %v640, %v821
        %v872 = vmul.f32 %v646, %v821
        %v873 = vmul.f32 %v650, %v821
        %v874 = vmul.f32 %v576, %v825
        %v875 = vmul.f32 %v580, %v825
        %v876 = vmul.f32 %v586, %v825
        %v877 = vmul.f32 %v590, %v825
        %v878 = vmul.f32 %v596, %v825
        %v879 = vmul.f32 %v600, %v825
        %v880 = vmul.f32 %v606, %v825
        %v881 = vmul.f32 %v610, %v825
        %v882 = vmul.f32 %v616, %v825
        %v883 = vmul.f32 %v620, %v825
        %v884 = vmul.f32 %v626, %v825
        %v885 = vmul.f32 %v630, %v825
        %v886 = vmul.f32 %v636, %v825
        %v887 = vmul.f32 %v640, %v825
        %v888 = vmul.f32 %v646, %v825
        %v889 = vmul.f32 %v650, %v825
        %v890 = vmul.f32 %v576, %v829
        %v891 = vmul.f32 %v580, %v829
        %v892 = vmul.f32 %v586, %v829
        %v893 = vmul.f32 %v590, %v829
        %v894 = vmul.f32 %v596, %v829
        %v895 = vmul.f32 %v600, %v829
        %v896 = vmul.f32 %v606, %v829
        %v897 = vmul.f32 %v610, %v829
        %v898 = vmul.f32 %v616, %v829
        %v899 = vmul.f32 %v620, %v829
        %v900 = vmul.f32 %v626, %v829
        %v901 = vmul.f32 %v630, %v829
        %v902 = vmul.f32 %v636, %v829
        %v903 = vmul.f32 %v640, %v829
        %v904 = vmul.f32 %v646, %v829
        %v905 = vmul.f32 %v650, %v829
        %v906 = vmul.f32 %v576, %v833
        %v907 = vmul.f32 %v580, %v833
        %v908 = vmul.f32 %v586, %v833
        %v909 = vmul.f32 %v590, %v833
        %v910 = vmul.f32 %v596, %v833
        %v911 = vmul.f32 %v600, %v833
        %v912 = vmul.f32 %v606, %v833
        %v913 = vmul.f32 %v610, %v833
        %v914 = vmul.f32 %v616, %v833
        %v915 = vmul.f32 %v620, %v833
        %v916 = vmul.f32 %v626, %v833
        %v917 = vmul.f32 %v630, %v833
        %v918 = vmul.f32 %v636, %v833
        %v919 = vmul.f32 %v640, %v833
        %v920 = vmul.f32 %v646, %v833
        %v921 = vmul.f32 %v650, %v833
        %v922 = vmul.f32 %v576, %v837
        %v923 = vmul.f32 %v580, %v837
        %v924 = vmul.f32 %v586, %v837
        %v925 = vmul.f32 %v590, %v837
        %v926 = vmul.f32 %v596, %v837
        %v927 = vmul.f32 %v600, %v837
        %v928 = vmul.f32 %v606, %v837
        %v929 = vmul.f32 %v610, %v837
        %v930 = vmul.f32 %v616, %v837
        %v931 = vmul.f32 %v620, %v837
        %v932 = vmul.f32 %v626, %v837
        %v933 = vmul.f32 %v630, %v837
        %v934 = vmul.f32 %v636, %v837
        %v935 = vmul.f32 %v640, %v837
        %v936 = vmul.f32 %v646, %v837
        %v937 = vmul.f32 %v650, %v837
        %v938 = vmul.f32 %v576, %v841
        %v939 = vmul.f32 %v580, %v841
        %v940 = vmul.f32 %v586, %v841
        %v941 = vmul.f32 %v590, %v841
        %v942 = vmul.f32 %v596, %v841
        %v943 = vmul.f32 %v600, %v841
        %v944 = vmul.f32 %v606, %v841
        %v945 = vmul.f32 %v610, %v841
        %v946 = vmul.f32 %v616, %v841
        %v947 = vmul.f32 %v620, %v841
        %v948 = vmul.f32 %v626, %v841
        %v949 = vmul.f32 %v630, %v841
        %v950 = vmul.f32 %v636, %v841
        %v951 = vmul.f32 %v640, %v841
        %v952 = vmul.f32 %v646, %v841
        %v953 = vmul.f32 %v650, %v841
        %v954 = vmul.f32 %v576, %v845
        %v955 = vmul.f32 %v580, %v845
        %v956 = vmul.f32 %v586, %v845
        %v957 = vmul.f32 %v590, %v845
        %v958 = vmul.f32 %v596, %v845
        %v959 = vmul.f32 %v600, %v845
        %v960 = vmul.f32 %v606, %v845
        %v961 = vmul.f32 %v610, %v845
        %v962 = vmul.f32 %v616, %v845
        %v963 = vmul.f32 %v620, %v845
        %v964 = vmul.f32 %v626, %v845
        %v965 = vmul.f32 %v630, %v845
        %v966 = vmul.f32 %v636, %v845
        %v967 = vmul.f32 %v640, %v845
        %v968 = vmul.f32 %v646, %v845
        %v969 = vmul.f32 %v650, %v845
        %v970 = vmul.f32 %v576, %v849
        %v971 = vmul.f32 %v580, %v849
        %v972 = vmul.f32 %v586, %v849
        %v973 = vmul.f32 %v590, %v849
        %v974 = vmul.f32 %v596, %v849
        %v975 = vmul.f32 %v600, %v849
        %v976 = vmul.f32 %v606, %v849
        %v977 = vmul.f32 %v610, %v849
        %v978 = vmul.f32 %v616, %v849
        %v979 = vmul.f32 %v620, %v849
        %v980 = vmul.f32 %v626, %v849
        %v981 = vmul.f32 %v630, %v849
        %v982 = vmul.f32 %v636, %v849
        %v983 = vmul.f32 %v640, %v849
        %v984 = vmul.f32 %v646, %v849
        %v985 = vmul.f32 %v650, %v849
        %v986 = vpack.c.bf16 %v859, %v858
        %v987 = vpack.c.bf16 %v861, %v860
        %v988 = vpack.c.bf16 %v863, %v862
        %v989 = vpack.c.bf16 %v865, %v864
        %v990 = vpack.c.bf16 %v867, %v866
        %v991 = vpack.c.bf16 %v869, %v868
        %v992 = vpack.c.bf16 %v871, %v870
        %v993 = vpack.c.bf16 %v873, %v872
        %v994 = vpack.c.bf16 %v875, %v874
        %v995 = vpack.c.bf16 %v877, %v876
        %v996 = vpack.c.bf16 %v879, %v878
        %v997 = vpack.c.bf16 %v881, %v880
        %v998 = vpack.c.bf16 %v883, %v882
        %v999 = vpack.c.bf16 %v885, %v884
        %v1000 = vpack.c.bf16 %v887, %v886
        %v1001 = vpack.c.bf16 %v889, %v888
        %v1002 = vpack.c.bf16 %v891, %v890
        %v1003 = vpack.c.bf16 %v893, %v892
        %v1004 = vpack.c.bf16 %v895, %v894
        %v1005 = vpack.c.bf16 %v897, %v896
        %v1006 = vpack.c.bf16 %v899, %v898
        %v1007 = vpack.c.bf16 %v901, %v900
        %v1008 = vpack.c.bf16 %v903, %v902
        %v1009 = vpack.c.bf16 %v905, %v904
        %v1010 = vpack.c.bf16 %v907, %v906
        %v1011 = vpack.c.bf16 %v909, %v908
        %v1012 = vpack.c.bf16 %v911, %v910
        %v1013 = vpack.c.bf16 %v913, %v912
        %v1014 = vpack.c.bf16 %v915, %v914
        %v1015 = vpack.c.bf16 %v917, %v916
        %v1016 = vpack.c.bf16 %v919, %v918
        %v1017 = vpack.c.bf16 %v921, %v920
        %v1018 = vpack.c.bf16 %v923, %v922
        %v1019 = vpack.c.bf16 %v925, %v924
        %v1020 = vpack.c.bf16 %v927, %v926
        %v1021 = vpack.c.bf16 %v929, %v928
        %v1022 = vpack.c.bf16 %v931, %v930
        %v1023 = vpack.c.bf16 %v933, %v932
        %v1024 = vpack.c.bf16 %v935, %v934
        %v1025 = vpack.c.bf16 %v937, %v936
        %v1026 = vpack.c.bf16 %v939, %v938
        %v1027 = vpack.c.bf16 %v941, %v940
        %v1028 = vpack.c.bf16 %v943, %v942
        %v1029 = vpack.c.bf16 %v945, %v944
        %v1030 = vpack.c.bf16 %v947, %v946
        %v1031 = vpack.c.bf16 %v949, %v948
        %v1032 = vpack.c.bf16 %v951, %v950
        %v1033 = vpack.c.bf16 %v953, %v952
        %v1034 = vpack.c.bf16 %v955, %v954
        %v1035 = vpack.c.bf16 %v957, %v956
        %v1036 = vpack.c.bf16 %v959, %v958
        %v1037 = vpack.c.bf16 %v961, %v960
        %v1038 = vpack.c.bf16 %v963, %v962
        %v1039 = vpack.c.bf16 %v965, %v964
        %v1040 = vpack.c.bf16 %v967, %v966
        %v1041 = vpack.c.bf16 %v969, %v968
        %v1042 = vpack.c.bf16 %v971, %v970
        %v1043 = vpack.c.bf16 %v973, %v972
        %v1044 = vpack.c.bf16 %v975, %v974
        %v1045 = vpack.c.bf16 %v977, %v976
        %v1046 = vpack.c.bf16 %v979, %v978
        %v1047 = vpack.c.bf16 %v981, %v980
        %v1048 = vpack.c.bf16 %v983, %v982
        %v1049 = vpack.c.bf16 %v985, %v984
        %1050 = vmatprep.subr.bf16.mxu0 0
        %1051 = vmatpush1.bf16.xpose.msra.mxu0 %v751
        %1052 = vmatprep.subr.bf16.mxu0 0
        %1053 = vmatpush1.bf16.xpose.msra.mxu0 %v752
        %1054 = vmatprep.subr.bf16.mxu0 0
        %1055 = vmatpush1.bf16.xpose.msra.mxu0 %v753
        %1056 = vmatprep.subr.bf16.mxu0 0
        %1057 = vmatpush1.bf16.xpose.msra.mxu0 %v754
        %1058 = vmatprep.subr.bf16.mxu0 0
        %1059 = vmatpush1.bf16.xpose.msra.mxu0 %v755
        %1060 = vmatprep.subr.bf16.mxu0 0
        %1061 = vmatpush1.bf16.xpose.msra.mxu0 %v756
        %1062 = vmatprep.subr.bf16.mxu0 0
        %1063 = vmatpush1.bf16.xpose.msra.mxu0 %v757
        %1064 = vmatprep.subr.bf16.mxu0 0
        %1065 = vmatpush1.bf16.xpose.msra.mxu0 %v758
        %1066 = vmatprep.subr.bf16.mxu0 0
        %1067 = vmatpush1.bf16.xpose.msra.mxu0 0
        %1068 = vmatprep.subr.bf16.mxu0 0
        %1069 = vmatpush1.bf16.xpose.msra.mxu0 0
        %1070 = vmatprep.subr.bf16.mxu0 0
        %1071 = vmatpush1.bf16.xpose.msra.mxu0 0
        %1072 = vmatprep.subr.bf16.mxu0 0
        %1073 = vmatpush1.bf16.xpose.msra.mxu0 0
        %1074 = vmatprep.subr.bf16.mxu0 0
        %1075 = vmatpush1.bf16.xpose.msra.mxu0 0
        %1076 = vmatprep.subr.bf16.mxu0 0
        %1077 = vmatpush1.bf16.xpose.msra.mxu0 0
        %1078 = vmatprep.subr.bf16.mxu0 0
        %1079 = vmatpush1.bf16.xpose.msra.mxu0 0
        %1080 = vmatprep.subr.bf16.mxu0 0
        %1081 = vmatpush1.bf16.xpose.msra.mxu0 0
        %1082 = vmatprep.mubr.bf16.mxu0 0
        %1083 = vmatmul.mubr.bf16.gmra.mrb[0].mxu0 %v986
        %v1084 = vpop.f32.mrb[0].mxu0
        %v1085 = vadd.f32 0.0, %v1084
        %v1086 = vpop.f32.mrb[0].mxu0
        %v1087 = vpop.f32.mrb[0].mxu0
        %v1088 = vadd.f32 0.0, %v1087
        %v1089 = vpop.f32.mrb[0].mxu0
        %1090 = vmatprep.mubr.bf16.mxu0 0
        %1091 = vmatmul.mubr.bf16.gmra.mrb[0].mxu0 %v987
        %v1092 = vpop.f32.mrb[0].mxu0
        %v1093 = vadd.f32 0.0, %v1092
        %v1094 = vpop.f32.mrb[0].mxu0
        %v1095 = vpop.f32.mrb[0].mxu0
        %v1096 = vadd.f32 0.0, %v1095
        %v1097 = vpop.f32.mrb[0].mxu0
        %1098 = vmatprep.mubr.bf16.mxu0 0
        %1099 = vmatmul.mubr.bf16.gmra.mrb[0].mxu0 %v988
        %v1100 = vpop.f32.mrb[0].mxu0
        %v1101 = vadd.f32 0.0, %v1100
        %v1102 = vpop.f32.mrb[0].mxu0
        %v1103 = vpop.f32.mrb[0].mxu0
        %v1104 = vadd.f32 0.0, %v1103
        %v1105 = vpop.f32.mrb[0].mxu0
        %1106 = vmatprep.mubr.bf16.mxu0 0
        %1107 = vmatmul.mubr.bf16.gmra.mrb[0].mxu0 %v989
        %v1108 = vpop.f32.mrb[0].mxu0
        %v1109 = vadd.f32 0.0, %v1108
        %v1110 = vpop.f32.mrb[0].mxu0
        %v1111 = vpop.f32.mrb[0].mxu0
        %v1112 = vadd.f32 0.0, %v1111
        %v1113 = vpop.f32.mrb[0].mxu0
        %1114 = vmatprep.mubr.bf16.mxu0 0
        %1115 = vmatmul.mubr.bf16.gmra.mrb[0].mxu0 %v990
        %v1116 = vpop.f32.mrb[0].mxu0
        %v1117 = vadd.f32 0.0, %v1116
        %v1118 = vpop.f32.mrb[0].mxu0
        %v1119 = vpop.f32.mrb[0].mxu0
        %v1120 = vadd.f32 0.0, %v1119
        %v1121 = vpop.f32.mrb[0].mxu0
        %1122 = vmatprep.mubr.bf16.mxu0 0
        %1123 = vmatmul.mubr.bf16.gmra.mrb[0].mxu0 %v991
        %v1124 = vpop.f32.mrb[0].mxu0
        %v1125 = vadd.f32 0.0, %v1124
        %v1126 = vpop.f32.mrb[0].mxu0
        %v1127 = vpop.f32.mrb[0].mxu0
        %v1128 = vadd.f32 0.0, %v1127
        %v1129 = vpop.f32.mrb[0].mxu0
        %1130 = vmatprep.mubr.bf16.mxu0 0
        %1131 = vmatmul.mubr.bf16.gmra.mrb[0].mxu0 %v992
        %v1132 = vpop.f32.mrb[0].mxu0
        %v1133 = vadd.f32 0.0, %v1132
        %v1134 = vpop.f32.mrb[0].mxu0
        %v1135 = vpop.f32.mrb[0].mxu0
        %v1136 = vadd.f32 0.0, %v1135
        %v1137 = vpop.f32.mrb[0].mxu0
        %1138 = vmatprep.mubr.bf16.mxu0 0
        %1139 = vmatmul.mubr.bf16.gmra.mrb[0].mxu0 %v993
        %v1140 = vpop.f32.mrb[0].mxu0
        %v1141 = vadd.f32 0.0, %v1140
        %v1142 = vpop.f32.mrb[0].mxu0
        %v1143 = vpop.f32.mrb[0].mxu0
        %v1144 = vadd.f32 0.0, %v1143
        %v1145 = vpop.f32.mrb[0].mxu0
        %1146 = vmatprep.mubr.bf16.mxu0 0
        %1147 = vmatmul.mubr.bf16.gmra.mrb[0].mxu0 %v994
        %v1148 = vpop.f32.mrb[0].mxu0
        %v1149 = vadd.f32 0.0, %v1148
        %v1150 = vpop.f32.mrb[0].mxu0
        %v1151 = vpop.f32.mrb[0].mxu0
        %v1152 = vadd.f32 0.0, %v1151
        %v1153 = vpop.f32.mrb[0].mxu0
        %1154 = vmatprep.mubr.bf16.mxu0 0
        %1155 = vmatmul.mubr.bf16.gmra.mrb[0].mxu0 %v995
        %v1156 = vpop.f32.mrb[0].mxu0
        %v1157 = vadd.f32 0.0, %v1156
        %v1158 = vpop.f32.mrb[0].mxu0
        %v1159 = vpop.f32.mrb[0].mxu0
        %v1160 = vadd.f32 0.0, %v1159
        %v1161 = vpop.f32.mrb[0].mxu0
        %1162 = vmatprep.mubr.bf16.mxu0 0
        %1163 = vmatmul.mubr.bf16.gmra.mrb[0].mxu0 %v996
        %v1164 = vpop.f32.mrb[0].mxu0
        %v1165 = vadd.f32 0.0, %v1164
        %v1166 = vpop.f32.mrb[0].mxu0
        %v1167 = vpop.f32.mrb[0].mxu0
        %v1168 = vadd.f32 0.0, %v1167
        %v1169 = vpop.f32.mrb[0].mxu0
        %1170 = vmatprep.mubr.bf16.mxu0 0
        %1171 = vmatmul.mubr.bf16.gmra.mrb[0].mxu0 %v997
        %v1172 = vpop.f32.mrb[0].mxu0
        %v1173 = vadd.f32 0.0, %v1172
        %v1174 = vpop.f32.mrb[0].mxu0
        %v1175 = vpop.f32.mrb[0].mxu0
        %v1176 = vadd.f32 0.0, %v1175
        %v1177 = vpop.f32.mrb[0].mxu0
        %1178 = vmatprep.mubr.bf16.mxu0 0
        %1179 = vmatmul.mubr.bf16.gmra.mrb[0].mxu0 %v998
        %v1180 = vpop.f32.mrb[0].mxu0
        %v1181 = vadd.f32 0.0, %v1180
        %v1182 = vpop.f32.mrb[0].mxu0
        %v1183 = vpop.f32.mrb[0].mxu0
        %v1184 = vadd.f32 0.0, %v1183
        %v1185 = vpop.f32.mrb[0].mxu0
        %1186 = vmatprep.mubr.bf16.mxu0 0
        %1187 = vmatmul.mubr.bf16.gmra.mrb[0].mxu0 %v999
        %v1188 = vpop.f32.mrb[0].mxu0
        %v1189 = vadd.f32 0.0, %v1188
        %v1190 = vpop.f32.mrb[0].mxu0
        %v1191 = vpop.f32.mrb[0].mxu0
        %v1192 = vadd.f32 0.0, %v1191
        %v1193 = vpop.f32.mrb[0].mxu0
        %1194 = vmatprep.mubr.bf16.mxu0 0
        %1195 = vmatmul.mubr.bf16.gmra.mrb[0].mxu0 %v1000
        %v1196 = vpop.f32.mrb[0].mxu0
        %v1197 = vadd.f32 0.0, %v1196
        %v1198 = vpop.f32.mrb[0].mxu0
        %v1199 = vpop.f32.mrb[0].mxu0
        %v1200 = vadd.f32 0.0, %v1199
        %v1201 = vpop.f32.mrb[0].mxu0
        %1202 = vmatprep.mubr.bf16.mxu0 0
        %1203 = vmatmul.mubr.bf16.gmra.mrb[0].mxu0 %v1001
        %v1204 = vpop.f32.mrb[0].mxu0
        %v1205 = vadd.f32 0.0, %v1204
        %v1206 = vpop.f32.mrb[0].mxu0
        %v1207 = vpop.f32.mrb[0].mxu0
        %v1208 = vadd.f32 0.0, %v1207
        %v1209 = vpop.f32.mrb[0].mxu0
        %1210 = vmatprep.mubr.bf16.mxu0 0
        %1211 = vmatmul.mubr.bf16.gmra.mrb[0].mxu0 %v1002
        %v1212 = vpop.f32.mrb[0].mxu0
        %v1213 = vadd.f32 0.0, %v1212
        %v1214 = vpop.f32.mrb[0].mxu0
        %v1215 = vpop.f32.mrb[0].mxu0
        %v1216 = vadd.f32 0.0, %v1215
        %v1217 = vpop.f32.mrb[0].mxu0
        %1218 = vmatprep.mubr.bf16.mxu0 0
        %1219 = vmatmul.mubr.bf16.gmra.mrb[0].mxu0 %v1003
        %v1220 = vpop.f32.mrb[0].mxu0
        %v1221 = vadd.f32 0.0, %v1220
        %v1222 = vpop.f32.mrb[0].mxu0
        %v1223 = vpop.f32.mrb[0].mxu0
        %v1224 = vadd.f32 0.0, %v1223
        %v1225 = vpop.f32.mrb[0].mxu0
        %1226 = vmatprep.mubr.bf16.mxu0 0
        %1227 = vmatmul.mubr.bf16.gmra.mrb[0].mxu0 %v1004
        %v1228 = vpop.f32.mrb[0].mxu0
        %v1229 = vadd.f32 0.0, %v1228
        %v1230 = vpop.f32.mrb[0].mxu0
        %v1231 = vpop.f32.mrb[0].mxu0
        %v1232 = vadd.f32 0.0, %v1231
        %v1233 = vpop.f32.mrb[0].mxu0
        %1234 = vmatprep.mubr.bf16.mxu0 0
        %1235 = vmatmul.mubr.bf16.gmra.mrb[0].mxu0 %v1005
        %v1236 = vpop.f32.mrb[0].mxu0
        %v1237 = vadd.f32 0.0, %v1236
        %v1238 = vpop.f32.mrb[0].mxu0
        %v1239 = vpop.f32.mrb[0].mxu0
        %v1240 = vadd.f32 0.0, %v1239
        %v1241 = vpop.f32.mrb[0].mxu0
        %1242 = vmatprep.mubr.bf16.mxu0 0
        %1243 = vmatmul.mubr.bf16.gmra.mrb[0].mxu0 %v1006
        %v1244 = vpop.f32.mrb[0].mxu0
        %v1245 = vadd.f32 0.0, %v1244
        %v1246 = vpop.f32.mrb[0].mxu0
        %v1247 = vpop.f32.mrb[0].mxu0
        %v1248 = vadd.f32 0.0, %v1247
        %v1249 = vpop.f32.mrb[0].mxu0
        %1250 = vmatprep.mubr.bf16.mxu0 0
        %1251 = vmatmul.mubr.bf16.gmra.mrb[0].mxu0 %v1007
        %v1252 = vpop.f32.mrb[0].mxu0
        %v1253 = vadd.f32 0.0, %v1252
        %v1254 = vpop.f32.mrb[0].mxu0
        %v1255 = vpop.f32.mrb[0].mxu0
        %v1256 = vadd.f32 0.0, %v1255
        %v1257 = vpop.f32.mrb[0].mxu0
        %1258 = vmatprep.mubr.bf16.mxu0 0
        %1259 = vmatmul.mubr.bf16.gmra.mrb[0].mxu0 %v1008
        %v1260 = vpop.f32.mrb[0].mxu0
        %v1261 = vadd.f32 0.0, %v1260
        %v1262 = vpop.f32.mrb[0].mxu0
        %v1263 = vpop.f32.mrb[0].mxu0
        %v1264 = vadd.f32 0.0, %v1263
        %v1265 = vpop.f32.mrb[0].mxu0
        %1266 = vmatprep.mubr.bf16.mxu0 0
        %1267 = vmatmul.mubr.bf16.gmra.mrb[0].mxu0 %v1009
        %v1268 = vpop.f32.mrb[0].mxu0
        %v1269 = vadd.f32 0.0, %v1268
        %v1270 = vpop.f32.mrb[0].mxu0
        %v1271 = vpop.f32.mrb[0].mxu0
        %v1272 = vadd.f32 0.0, %v1271
        %v1273 = vpop.f32.mrb[0].mxu0
        %1274 = vmatprep.mubr.bf16.mxu0 0
        %1275 = vmatmul.mubr.bf16.gmra.mrb[0].mxu0 %v1010
        %v1276 = vpop.f32.mrb[0].mxu0
        %v1277 = vadd.f32 0.0, %v1276
        %v1278 = vpop.f32.mrb[0].mxu0
        %v1279 = vpop.f32.mrb[0].mxu0
        %v1280 = vadd.f32 0.0, %v1279
        %v1281 = vpop.f32.mrb[0].mxu0
        %1282 = vmatprep.mubr.bf16.mxu0 0
        %1283 = vmatmul.mubr.bf16.gmra.mrb[0].mxu0 %v1011
        %v1284 = vpop.f32.mrb[0].mxu0
        %v1285 = vadd.f32 0.0, %v1284
        %v1286 = vpop.f32.mrb[0].mxu0
        %v1287 = vpop.f32.mrb[0].mxu0
        %v1288 = vadd.f32 0.0, %v1287
        %v1289 = vpop.f32.mrb[0].mxu0
        %1290 = vmatprep.mubr.bf16.mxu0 0
        %1291 = vmatmul.mubr.bf16.gmra.mrb[0].mxu0 %v1012
        %v1292 = vpop.f32.mrb[0].mxu0
        %v1293 = vadd.f32 0.0, %v1292
        %v1294 = vpop.f32.mrb[0].mxu0
        %v1295 = vpop.f32.mrb[0].mxu0
        %v1296 = vadd.f32 0.0, %v1295
        %v1297 = vpop.f32.mrb[0].mxu0
        %1298 = vmatprep.mubr.bf16.mxu0 0
        %1299 = vmatmul.mubr.bf16.gmra.mrb[0].mxu0 %v1013
        %v1300 = vpop.f32.mrb[0].mxu0
        %v1301 = vadd.f32 0.0, %v1300
        %v1302 = vpop.f32.mrb[0].mxu0
        %v1303 = vpop.f32.mrb[0].mxu0
        %v1304 = vadd.f32 0.0, %v1303
        %v1305 = vpop.f32.mrb[0].mxu0
        %1306 = vmatprep.mubr.bf16.mxu0 0
        %1307 = vmatmul.mubr.bf16.gmra.mrb[0].mxu0 %v1014
        %v1308 = vpop.f32.mrb[0].mxu0
        %v1309 = vadd.f32 0.0, %v1308
        %v1310 = vpop.f32.mrb[0].mxu0
        %v1311 = vpop.f32.mrb[0].mxu0
        %v1312 = vadd.f32 0.0, %v1311
        %v1313 = vpop.f32.mrb[0].mxu0
        %1314 = vmatprep.mubr.bf16.mxu0 0
        %1315 = vmatmul.mubr.bf16.gmra.mrb[0].mxu0 %v1015
        %v1316 = vpop.f32.mrb[0].mxu0
        %v1317 = vadd.f32 0.0, %v1316
        %v1318 = vpop.f32.mrb[0].mxu0
        %v1319 = vpop.f32.mrb[0].mxu0
        %v1320 = vadd.f32 0.0, %v1319
        %v1321 = vpop.f32.mrb[0].mxu0
        %1322 = vmatprep.mubr.bf16.mxu0 0
        %1323 = vmatmul.mubr.bf16.gmra.mrb[0].mxu0 %v1016
        %v1324 = vpop.f32.mrb[0].mxu0
        %v1325 = vadd.f32 0.0, %v1324
        %v1326 = vpop.f32.mrb[0].mxu0
        %v1327 = vpop.f32.mrb[0].mxu0
        %v1328 = vadd.f32 0.0, %v1327
        %v1329 = vpop.f32.mrb[0].mxu0
        %1330 = vmatprep.mubr.bf16.mxu0 0
        %1331 = vmatmul.mubr.bf16.gmra.mrb[0].mxu0 %v1017
        %v1332 = vpop.f32.mrb[0].mxu0
        %v1333 = vadd.f32 0.0, %v1332
        %v1334 = vpop.f32.mrb[0].mxu0
        %v1335 = vpop.f32.mrb[0].mxu0
        %v1336 = vadd.f32 0.0, %v1335
        %v1337 = vpop.f32.mrb[0].mxu0
        %1338 = vmatprep.mubr.bf16.mxu0 0
        %1339 = vmatmul.mubr.bf16.gmra.mrb[0].mxu0 %v1018
        %v1340 = vpop.f32.mrb[0].mxu0
        %v1341 = vadd.f32 0.0, %v1340
        %v1342 = vpop.f32.mrb[0].mxu0
        %v1343 = vpop.f32.mrb[0].mxu0
        %v1344 = vadd.f32 0.0, %v1343
        %v1345 = vpop.f32.mrb[0].mxu0
        %1346 = vmatprep.mubr.bf16.mxu0 0
        %1347 = vmatmul.mubr.bf16.gmra.mrb[0].mxu0 %v1019
        %v1348 = vpop.f32.mrb[0].mxu0
        %v1349 = vadd.f32 0.0, %v1348
        %v1350 = vpop.f32.mrb[0].mxu0
        %v1351 = vpop.f32.mrb[0].mxu0
        %v1352 = vadd.f32 0.0, %v1351
        %v1353 = vpop.f32.mrb[0].mxu0
        %1354 = vmatprep.mubr.bf16.mxu0 0
        %1355 = vmatmul.mubr.bf16.gmra.mrb[0].mxu0 %v1020
        %v1356 = vpop.f32.mrb[0].mxu0
        %v1357 = vadd.f32 0.0, %v1356
        %v1358 = vpop.f32.mrb[0].mxu0
        %v1359 = vpop.f32.mrb[0].mxu0
        %v1360 = vadd.f32 0.0, %v1359
        %v1361 = vpop.f32.mrb[0].mxu0
        %1362 = vmatprep.mubr.bf16.mxu0 0
        %1363 = vmatmul.mubr.bf16.gmra.mrb[0].mxu0 %v1021
        %v1364 = vpop.f32.mrb[0].mxu0
        %v1365 = vadd.f32 0.0, %v1364
        %v1366 = vpop.f32.mrb[0].mxu0
        %v1367 = vpop.f32.mrb[0].mxu0
        %v1368 = vadd.f32 0.0, %v1367
        %v1369 = vpop.f32.mrb[0].mxu0
        %1370 = vmatprep.mubr.bf16.mxu0 0
        %1371 = vmatmul.mubr.bf16.gmra.mrb[0].mxu0 %v1022
        %v1372 = vpop.f32.mrb[0].mxu0
        %v1373 = vadd.f32 0.0, %v1372
        %v1374 = vpop.f32.mrb[0].mxu0
        %v1375 = vpop.f32.mrb[0].mxu0
        %v1376 = vadd.f32 0.0, %v1375
        %v1377 = vpop.f32.mrb[0].mxu0
        %1378 = vmatprep.mubr.bf16.mxu0 0
        %1379 = vmatmul.mubr.bf16.gmra.mrb[0].mxu0 %v1023
        %v1380 = vpop.f32.mrb[0].mxu0
        %v1381 = vadd.f32 0.0, %v1380
        %v1382 = vpop.f32.mrb[0].mxu0
        %v1383 = vpop.f32.mrb[0].mxu0
        %v1384 = vadd.f32 0.0, %v1383
        %v1385 = vpop.f32.mrb[0].mxu0
        %1386 = vmatprep.mubr.bf16.mxu0 0
        %1387 = vmatmul.mubr.bf16.gmra.mrb[0].mxu0 %v1024
        %v1388 = vpop.f32.mrb[0].mxu0
        %v1389 = vadd.f32 0.0, %v1388
        %v1390 = vpop.f32.mrb[0].mxu0
        %v1391 = vpop.f32.mrb[0].mxu0
        %v1392 = vadd.f32 0.0, %v1391
        %v1393 = vpop.f32.mrb[0].mxu0
        %1394 = vmatprep.mubr.bf16.mxu0 0
        %1395 = vmatmul.mubr.bf16.gmra.mrb[0].mxu0 %v1025
        %v1396 = vpop.f32.mrb[0].mxu0
        %v1397 = vadd.f32 0.0, %v1396
        %v1398 = vpop.f32.mrb[0].mxu0
        %v1399 = vpop.f32.mrb[0].mxu0
        %v1400 = vadd.f32 0.0, %v1399
        %v1401 = vpop.f32.mrb[0].mxu0
        %1402 = vmatprep.mubr.bf16.mxu0 0
        %1403 = vmatmul.mubr.bf16.gmra.mrb[0].mxu0 %v1026
        %v1404 = vpop.f32.mrb[0].mxu0
        %v1405 = vadd.f32 0.0, %v1404
        %v1406 = vpop.f32.mrb[0].mxu0
        %v1407 = vpop.f32.mrb[0].mxu0
        %v1408 = vadd.f32 0.0, %v1407
        %v1409 = vpop.f32.mrb[0].mxu0
        %1410 = vmatprep.mubr.bf16.mxu0 0
        %1411 = vmatmul.mubr.bf16.gmra.mrb[0].mxu0 %v1027
        %v1412 = vpop.f32.mrb[0].mxu0
        %v1413 = vadd.f32 0.0, %v1412
        %v1414 = vpop.f32.mrb[0].mxu0
        %v1415 = vpop.f32.mrb[0].mxu0
        %v1416 = vadd.f32 0.0, %v1415
        %v1417 = vpop.f32.mrb[0].mxu0
        %1418 = vmatprep.mubr.bf16.mxu0 0
        %1419 = vmatmul.mubr.bf16.gmra.mrb[0].mxu0 %v1028
        %v1420 = vpop.f32.mrb[0].mxu0
        %v1421 = vadd.f32 0.0, %v1420
        %v1422 = vpop.f32.mrb[0].mxu0
        %v1423 = vpop.f32.mrb[0].mxu0
        %v1424 = vadd.f32 0.0, %v1423
        %v1425 = vpop.f32.mrb[0].mxu0
        %1426 = vmatprep.mubr.bf16.mxu0 0
        %1427 = vmatmul.mubr.bf16.gmra.mrb[0].mxu0 %v1029
        %v1428 = vpop.f32.mrb[0].mxu0
        %v1429 = vadd.f32 0.0, %v1428
        %v1430 = vpop.f32.mrb[0].mxu0
        %v1431 = vpop.f32.mrb[0].mxu0
        %v1432 = vadd.f32 0.0, %v1431
        %v1433 = vpop.f32.mrb[0].mxu0
        %1434 = vmatprep.mubr.bf16.mxu0 0
        %1435 = vmatmul.mubr.bf16.gmra.mrb[0].mxu0 %v1030
        %v1436 = vpop.f32.mrb[0].mxu0
        %v1437 = vadd.f32 0.0, %v1436
        %v1438 = vpop.f32.mrb[0].mxu0
        %v1439 = vpop.f32.mrb[0].mxu0
        %v1440 = vadd.f32 0.0, %v1439
        %v1441 = vpop.f32.mrb[0].mxu0
        %1442 = vmatprep.mubr.bf16.mxu0 0
        %1443 = vmatmul.mubr.bf16.gmra.mrb[0].mxu0 %v1031
        %v1444 = vpop.f32.mrb[0].mxu0
        %v1445 = vadd.f32 0.0, %v1444
        %v1446 = vpop.f32.mrb[0].mxu0
        %v1447 = vpop.f32.mrb[0].mxu0
        %v1448 = vadd.f32 0.0, %v1447
        %v1449 = vpop.f32.mrb[0].mxu0
        %1450 = vmatprep.mubr.bf16.mxu0 0
        %1451 = vmatmul.mubr.bf16.gmra.mrb[0].mxu0 %v1032
        %v1452 = vpop.f32.mrb[0].mxu0
        %v1453 = vadd.f32 0.0, %v1452
        %v1454 = vpop.f32.mrb[0].mxu0
        %v1455 = vpop.f32.mrb[0].mxu0
        %v1456 = vadd.f32 0.0, %v1455
        %v1457 = vpop.f32.mrb[0].mxu0
        %1458 = vmatprep.mubr.bf16.mxu0 0
        %1459 = vmatmul.mubr.bf16.gmra.mrb[0].mxu0 %v1033
        %v1460 = vpop.f32.mrb[0].mxu0
        %v1461 = vadd.f32 0.0, %v1460
        %v1462 = vpop.f32.mrb[0].mxu0
        %v1463 = vpop.f32.mrb[0].mxu0
        %v1464 = vadd.f32 0.0, %v1463
        %v1465 = vpop.f32.mrb[0].mxu0
        %1466 = vmatprep.mubr.bf16.mxu0 0
        %1467 = vmatmul.mubr.bf16.gmra.mrb[0].mxu0 %v1034
        %v1468 = vpop.f32.mrb[0].mxu0
        %v1469 = vadd.f32 0.0, %v1468
        %v1470 = vpop.f32.mrb[0].mxu0
        %v1471 = vpop.f32.mrb[0].mxu0
        %v1472 = vadd.f32 0.0, %v1471
        %v1473 = vpop.f32.mrb[0].mxu0
        %1474 = vmatprep.mubr.bf16.mxu0 0
        %1475 = vmatmul.mubr.bf16.gmra.mrb[0].mxu0 %v1035
        %v1476 = vpop.f32.mrb[0].mxu0
        %v1477 = vadd.f32 0.0, %v1476
        %v1478 = vpop.f32.mrb[0].mxu0
        %v1479 = vpop.f32.mrb[0].mxu0
        %v1480 = vadd.f32 0.0, %v1479
        %v1481 = vpop.f32.mrb[0].mxu0
        %1482 = vmatprep.mubr.bf16.mxu0 0
        %1483 = vmatmul.mubr.bf16.gmra.mrb[0].mxu0 %v1036
        %v1484 = vpop.f32.mrb[0].mxu0
        %v1485 = vadd.f32 0.0, %v1484
        %v1486 = vpop.f32.mrb[0].mxu0
        %v1487 = vpop.f32.mrb[0].mxu0
        %v1488 = vadd.f32 0.0, %v1487
        %v1489 = vpop.f32.mrb[0].mxu0
        %1490 = vmatprep.mubr.bf16.mxu0 0
        %1491 = vmatmul.mubr.bf16.gmra.mrb[0].mxu0 %v1037
        %v1492 = vpop.f32.mrb[0].mxu0
        %v1493 = vadd.f32 0.0, %v1492
        %v1494 = vpop.f32.mrb[0].mxu0
        %v1495 = vpop.f32.mrb[0].mxu0
        %v1496 = vadd.f32 0.0, %v1495
        %v1497 = vpop.f32.mrb[0].mxu0
        %1498 = vmatprep.mubr.bf16.mxu0 0
        %1499 = vmatmul.mubr.bf16.gmra.mrb[0].mxu0 %v1038
        %v1500 = vpop.f32.mrb[0].mxu0
        %v1501 = vadd.f32 0.0, %v1500
        %v1502 = vpop.f32.mrb[0].mxu0
        %v1503 = vpop.f32.mrb[0].mxu0
        %v1504 = vadd.f32 0.0, %v1503
        %v1505 = vpop.f32.mrb[0].mxu0
        %1506 = vmatprep.mubr.bf16.mxu0 0
        %1507 = vmatmul.mubr.bf16.gmra.mrb[0].mxu0 %v1039
        %v1508 = vpop.f32.mrb[0].mxu0
        %v1509 = vadd.f32 0.0, %v1508
        %v1510 = vpop.f32.mrb[0].mxu0
        %v1511 = vpop.f32.mrb[0].mxu0
        %v1512 = vadd.f32 0.0, %v1511
        %v1513 = vpop.f32.mrb[0].mxu0
        %1514 = vmatprep.mubr.bf16.mxu0 0
        %1515 = vmatmul.mubr.bf16.gmra.mrb[0].mxu0 %v1040
        %v1516 = vpop.f32.mrb[0].mxu0
        %v1517 = vadd.f32 0.0, %v1516
        %v1518 = vpop.f32.mrb[0].mxu0
        %v1519 = vpop.f32.mrb[0].mxu0
        %v1520 = vadd.f32 0.0, %v1519
        %v1521 = vpop.f32.mrb[0].mxu0
        %1522 = vmatprep.mubr.bf16.mxu0 0
        %1523 = vmatmul.mubr.bf16.gmra.mrb[0].mxu0 %v1041
        %v1524 = vpop.f32.mrb[0].mxu0
        %v1525 = vadd.f32 0.0, %v1524
        %v1526 = vpop.f32.mrb[0].mxu0
        %v1527 = vpop.f32.mrb[0].mxu0
        %v1528 = vadd.f32 0.0, %v1527
        %v1529 = vpop.f32.mrb[0].mxu0
        %1530 = vmatprep.mubr.bf16.mxu0 0
        %1531 = vmatmul.mubr.bf16.gmra.mrb[0].mxu0 %v1042
        %v1532 = vpop.f32.mrb[0].mxu0
        %v1533 = vadd.f32 0.0, %v1532
        %v1534 = vpop.f32.mrb[0].mxu0
        %v1535 = vpop.f32.mrb[0].mxu0
        %v1536 = vadd.f32 0.0, %v1535
        %v1537 = vpop.f32.mrb[0].mxu0
        %1538 = vmatprep.mubr.bf16.mxu0 0
        %1539 = vmatmul.mubr.bf16.gmra.mrb[0].mxu0 %v1043
        %v1540 = vpop.f32.mrb[0].mxu0
        %v1541 = vadd.f32 0.0, %v1540
        %v1542 = vpop.f32.mrb[0].mxu0
        %v1543 = vpop.f32.mrb[0].mxu0
        %v1544 = vadd.f32 0.0, %v1543
        %v1545 = vpop.f32.mrb[0].mxu0
        %1546 = vmatprep.mubr.bf16.mxu0 0
        %1547 = vmatmul.mubr.bf16.gmra.mrb[0].mxu0 %v1044
        %v1548 = vpop.f32.mrb[0].mxu0
        %v1549 = vadd.f32 0.0, %v1548
        %v1550 = vpop.f32.mrb[0].mxu0
        %v1551 = vpop.f32.mrb[0].mxu0
        %v1552 = vadd.f32 0.0, %v1551
        %v1553 = vpop.f32.mrb[0].mxu0
        %1554 = vmatprep.mubr.bf16.mxu0 0
        %1555 = vmatmul.mubr.bf16.gmra.mrb[0].mxu0 %v1045
        %v1556 = vpop.f32.mrb[0].mxu0
        %v1557 = vadd.f32 0.0, %v1556
        %v1558 = vpop.f32.mrb[0].mxu0
        %v1559 = vpop.f32.mrb[0].mxu0
        %v1560 = vadd.f32 0.0, %v1559
        %v1561 = vpop.f32.mrb[0].mxu0
        %1562 = vmatprep.mubr.bf16.mxu0 0
        %1563 = vmatmul.mubr.bf16.gmra.mrb[0].mxu0 %v1046
        %v1564 = vpop.f32.mrb[0].mxu0
        %v1565 = vadd.f32 0.0, %v1564
        %v1566 = vpop.f32.mrb[0].mxu0
        %v1567 = vpop.f32.mrb[0].mxu0
        %v1568 = vadd.f32 0.0, %v1567
        %v1569 = vpop.f32.mrb[0].mxu0
        %1570 = vmatprep.mubr.bf16.mxu0 0
        %1571 = vmatmul.mubr.bf16.gmra.mrb[0].mxu0 %v1047
        %v1572 = vpop.f32.mrb[0].mxu0
        %v1573 = vadd.f32 0.0, %v1572
        %v1574 = vpop.f32.mrb[0].mxu0
        %v1575 = vpop.f32.mrb[0].mxu0
        %v1576 = vadd.f32 0.0, %v1575
        %v1577 = vpop.f32.mrb[0].mxu0
        %1578 = vmatprep.mubr.bf16.mxu0 0
        %1579 = vmatmul.mubr.bf16.gmra.mrb[0].mxu0 %v1048
        %v1580 = vpop.f32.mrb[0].mxu0
        %v1581 = vadd.f32 0.0, %v1580
        %v1582 = vpop.f32.mrb[0].mxu0
        %v1583 = vpop.f32.mrb[0].mxu0
        %v1584 = vadd.f32 0.0, %v1583
        %v1585 = vpop.f32.mrb[0].mxu0
        %1586 = vmatprep.mubr.bf16.mxu0 0
        %1587 = vmatmul.mubr.bf16.gmra.mrb[0].mxu0 %v1049
        %v1588 = vpop.f32.mrb[0].mxu0
        %v1589 = vadd.f32 0.0, %v1588
        %v1590 = vpop.f32.mrb[0].mxu0
        %v1591 = vpop.f32.mrb[0].mxu0
        %v1592 = vadd.f32 0.0, %v1591
        %v1593 = vpop.f32.mrb[0].mxu0
        %1594 = vdwg.mxu0
        %1595 = vmax.xlane.f32.xlu0 %v1085
        %v1596 = vpop.xlane.xlu0 %1595
        %1597 = vmax.xlane.f32.xlu0 %v1088
        %v1598 = vpop.xlane.xlu0 %1597
        %1599 = vmax.xlane.f32.xlu0 %v1093
        %v1600 = vpop.xlane.xlu0 %1599
        %1601 = vmax.xlane.f32.xlu0 %v1096
        %v1602 = vpop.xlane.xlu0 %1601
        %1603 = vmax.xlane.f32.xlu0 %v1101
        %v1604 = vpop.xlane.xlu0 %1603
        %1605 = vmax.xlane.f32.xlu0 %v1104
        %v1606 = vpop.xlane.xlu0 %1605
        %1607 = vmax.xlane.f32.xlu0 %v1109
        %v1608 = vpop.xlane.xlu0 %1607
        %1609 = vmax.xlane.f32.xlu0 %v1112
        %v1610 = vpop.xlane.xlu0 %1609
        %1611 = vmax.xlane.f32.xlu0 %v1117
        %v1612 = vpop.xlane.xlu0 %1611
        %1613 = vmax.xlane.f32.xlu0 %v1120
        %v1614 = vpop.xlane.xlu0 %1613
        %1615 = vmax.xlane.f32.xlu0 %v1125
        %v1616 = vpop.xlane.xlu0 %1615
        %1617 = vmax.xlane.f32.xlu0 %v1128
        %v1618 = vpop.xlane.xlu0 %1617
        %1619 = vmax.xlane.f32.xlu0 %v1133
        %v1620 = vpop.xlane.xlu0 %1619
        %1621 = vmax.xlane.f32.xlu0 %v1136
        %v1622 = vpop.xlane.xlu0 %1621
        %1623 = vmax.xlane.f32.xlu0 %v1141
        %v1624 = vpop.xlane.xlu0 %1623
        %1625 = vmax.xlane.f32.xlu0 %v1144
        %v1626 = vpop.xlane.xlu0 %1625
        %1627 = vmax.xlane.f32.xlu0 %v1149
        %v1628 = vpop.xlane.xlu0 %1627
        %1629 = vmax.xlane.f32.xlu0 %v1152
        %v1630 = vpop.xlane.xlu0 %1629
        %1631 = vmax.xlane.f32.xlu0 %v1157
        %v1632 = vpop.xlane.xlu0 %1631
        %1633 = vmax.xlane.f32.xlu0 %v1160
        %v1634 = vpop.xlane.xlu0 %1633
        %1635 = vmax.xlane.f32.xlu0 %v1165
        %v1636 = vpop.xlane.xlu0 %1635
        %1637 = vmax.xlane.f32.xlu0 %v1168
        %v1638 = vpop.xlane.xlu0 %1637
        %1639 = vmax.xlane.f32.xlu0 %v1173
        %v1640 = vpop.xlane.xlu0 %1639
        %1641 = vmax.xlane.f32.xlu0 %v1176
        %v1642 = vpop.xlane.xlu0 %1641
        %1643 = vmax.xlane.f32.xlu0 %v1181
        %v1644 = vpop.xlane.xlu0 %1643
        %1645 = vmax.xlane.f32.xlu0 %v1184
        %v1646 = vpop.xlane.xlu0 %1645
        %1647 = vmax.xlane.f32.xlu0 %v1189
        %v1648 = vpop.xlane.xlu0 %1647
        %1649 = vmax.xlane.f32.xlu0 %v1192
        %v1650 = vpop.xlane.xlu0 %1649
        %1651 = vmax.xlane.f32.xlu0 %v1197
        %v1652 = vpop.xlane.xlu0 %1651
        %1653 = vmax.xlane.f32.xlu0 %v1200
        %v1654 = vpop.xlane.xlu0 %1653
        %1655 = vmax.xlane.f32.xlu0 %v1205
        %v1656 = vpop.xlane.xlu0 %1655
        %1657 = vmax.xlane.f32.xlu0 %v1208
        %v1658 = vpop.xlane.xlu0 %1657
        %1659 = vmax.xlane.f32.xlu0 %v1213
        %v1660 = vpop.xlane.xlu0 %1659
        %1661 = vmax.xlane.f32.xlu0 %v1216
        %v1662 = vpop.xlane.xlu0 %1661
        %1663 = vmax.xlane.f32.xlu0 %v1221
        %v1664 = vpop.xlane.xlu0 %1663
        %1665 = vmax.xlane.f32.xlu0 %v1224
        %v1666 = vpop.xlane.xlu0 %1665
        %1667 = vmax.xlane.f32.xlu0 %v1229
        %v1668 = vpop.xlane.xlu0 %1667
        %1669 = vmax.xlane.f32.xlu0 %v1232
        %v1670 = vpop.xlane.xlu0 %1669
        %1671 = vmax.xlane.f32.xlu0 %v1237
        %v1672 = vpop.xlane.xlu0 %1671
        %1673 = vmax.xlane.f32.xlu0 %v1240
        %v1674 = vpop.xlane.xlu0 %1673
        %1675 = vmax.xlane.f32.xlu0 %v1245
        %v1676 = vpop.xlane.xlu0 %1675
        %1677 = vmax.xlane.f32.xlu0 %v1248
        %v1678 = vpop.xlane.xlu0 %1677
        %1679 = vmax.xlane.f32.xlu0 %v1253
        %v1680 = vpop.xlane.xlu0 %1679
        %1681 = vmax.xlane.f32.xlu0 %v1256
        %v1682 = vpop.xlane.xlu0 %1681
        %1683 = vmax.xlane.f32.xlu0 %v1261
        %v1684 = vpop.xlane.xlu0 %1683
        %1685 = vmax.xlane.f32.xlu0 %v1264
        %v1686 = vpop.xlane.xlu0 %1685
        %1687 = vmax.xlane.f32.xlu0 %v1269
        %v1688 = vpop.xlane.xlu0 %1687
        %1689 = vmax.xlane.f32.xlu0 %v1272
        %v1690 = vpop.xlane.xlu0 %1689
        %1691 = vmax.xlane.f32.xlu0 %v1277
        %v1692 = vpop.xlane.xlu0 %1691
        %1693 = vmax.xlane.f32.xlu0 %v1280
        %v1694 = vpop.xlane.xlu0 %1693
        %1695 = vmax.xlane.f32.xlu0 %v1285
        %v1696 = vpop.xlane.xlu0 %1695
        %1697 = vmax.xlane.f32.xlu0 %v1288
        %v1698 = vpop.xlane.xlu0 %1697
        %1699 = vmax.xlane.f32.xlu0 %v1293
        %v1700 = vpop.xlane.xlu0 %1699
        %1701 = vmax.xlane.f32.xlu0 %v1296
        %v1702 = vpop.xlane.xlu0 %1701
        %1703 = vmax.xlane.f32.xlu0 %v1301
        %v1704 = vpop.xlane.xlu0 %1703
        %1705 = vmax.xlane.f32.xlu0 %v1304
        %v1706 = vpop.xlane.xlu0 %1705
        %1707 = vmax.xlane.f32.xlu0 %v1309
        %v1708 = vpop.xlane.xlu0 %1707
        %1709 = vmax.xlane.f32.xlu0 %v1312
        %v1710 = vpop.xlane.xlu0 %1709
        %1711 = vmax.xlane.f32.xlu0 %v1317
        %v1712 = vpop.xlane.xlu0 %1711
        %1713 = vmax.xlane.f32.xlu0 %v1320
        %v1714 = vpop.xlane.xlu0 %1713
        %1715 = vmax.xlane.f32.xlu0 %v1325
        %v1716 = vpop.xlane.xlu0 %1715
        %1717 = vmax.xlane.f32.xlu0 %v1328
        %v1718 = vpop.xlane.xlu0 %1717
        %1719 = vmax.xlane.f32.xlu0 %v1333
        %v1720 = vpop.xlane.xlu0 %1719
        %1721 = vmax.xlane.f32.xlu0 %v1336
        %v1722 = vpop.xlane.xlu0 %1721
        %1723 = vmax.xlane.f32.xlu0 %v1341
        %v1724 = vpop.xlane.xlu0 %1723
        %1725 = vmax.xlane.f32.xlu0 %v1344
        %v1726 = vpop.xlane.xlu0 %1725
        %1727 = vmax.xlane.f32.xlu0 %v1349
        %v1728 = vpop.xlane.xlu0 %1727
        %1729 = vmax.xlane.f32.xlu0 %v1352
        %v1730 = vpop.xlane.xlu0 %1729
        %1731 = vmax.xlane.f32.xlu0 %v1357
        %v1732 = vpop.xlane.xlu0 %1731
        %1733 = vmax.xlane.f32.xlu0 %v1360
        %v1734 = vpop.xlane.xlu0 %1733
        %1735 = vmax.xlane.f32.xlu0 %v1365
        %v1736 = vpop.xlane.xlu0 %1735
        %1737 = vmax.xlane.f32.xlu0 %v1368
        %v1738 = vpop.xlane.xlu0 %1737
        %1739 = vmax.xlane.f32.xlu0 %v1373
        %v1740 = vpop.xlane.xlu0 %1739
        %1741 = vmax.xlane.f32.xlu0 %v1376
        %v1742 = vpop.xlane.xlu0 %1741
        %1743 = vmax.xlane.f32.xlu0 %v1381
        %v1744 = vpop.xlane.xlu0 %1743
        %1745 = vmax.xlane.f32.xlu0 %v1384
        %v1746 = vpop.xlane.xlu0 %1745
        %1747 = vmax.xlane.f32.xlu0 %v1389
        %v1748 = vpop.xlane.xlu0 %1747
        %1749 = vmax.xlane.f32.xlu0 %v1392
        %v1750 = vpop.xlane.xlu0 %1749
        %1751 = vmax.xlane.f32.xlu0 %v1397
        %v1752 = vpop.xlane.xlu0 %1751
        %1753 = vmax.xlane.f32.xlu0 %v1400
        %v1754 = vpop.xlane.xlu0 %1753
        %1755 = vmax.xlane.f32.xlu0 %v1405
        %v1756 = vpop.xlane.xlu0 %1755
        %1757 = vmax.xlane.f32.xlu0 %v1408
        %v1758 = vpop.xlane.xlu0 %1757
        %1759 = vmax.xlane.f32.xlu0 %v1413
        %v1760 = vpop.xlane.xlu0 %1759
        %1761 = vmax.xlane.f32.xlu0 %v1416
        %v1762 = vpop.xlane.xlu0 %1761
        %1763 = vmax.xlane.f32.xlu0 %v1421
        %v1764 = vpop.xlane.xlu0 %1763
        %1765 = vmax.xlane.f32.xlu0 %v1424
        %v1766 = vpop.xlane.xlu0 %1765
        %1767 = vmax.xlane.f32.xlu0 %v1429
        %v1768 = vpop.xlane.xlu0 %1767
        %1769 = vmax.xlane.f32.xlu0 %v1432
        %v1770 = vpop.xlane.xlu0 %1769
        %1771 = vmax.xlane.f32.xlu0 %v1437
        %v1772 = vpop.xlane.xlu0 %1771
        %1773 = vmax.xlane.f32.xlu0 %v1440
        %v1774 = vpop.xlane.xlu0 %1773
        %1775 = vmax.xlane.f32.xlu0 %v1445
        %v1776 = vpop.xlane.xlu0 %1775
        %1777 = vmax.xlane.f32.xlu0 %v1448
        %v1778 = vpop.xlane.xlu0 %1777
        %1779 = vmax.xlane.f32.xlu0 %v1453
        %v1780 = vpop.xlane.xlu0 %1779
        %1781 = vmax.xlane.f32.xlu0 %v1456
        %v1782 = vpop.xlane.xlu0 %1781
        %1783 = vmax.xlane.f32.xlu0 %v1461
        %v1784 = vpop.xlane.xlu0 %1783
        %1785 = vmax.xlane.f32.xlu0 %v1464
        %v1786 = vpop.xlane.xlu0 %1785
        %1787 = vmax.xlane.f32.xlu0 %v1469
        %v1788 = vpop.xlane.xlu0 %1787
        %1789 = vmax.xlane.f32.xlu0 %v1472
        %v1790 = vpop.xlane.xlu0 %1789
        %1791 = vmax.xlane.f32.xlu0 %v1477
        %v1792 = vpop.xlane.xlu0 %1791
        %1793 = vmax.xlane.f32.xlu0 %v1480
        %v1794 = vpop.xlane.xlu0 %1793
        %1795 = vmax.xlane.f32.xlu0 %v1485
        %v1796 = vpop.xlane.xlu0 %1795
        %1797 = vmax.xlane.f32.xlu0 %v1488
        %v1798 = vpop.xlane.xlu0 %1797
        %1799 = vmax.xlane.f32.xlu0 %v1493
        %v1800 = vpop.xlane.xlu0 %1799
        %1801 = vmax.xlane.f32.xlu0 %v1496
        %v1802 = vpop.xlane.xlu0 %1801
        %1803 = vmax.xlane.f32.xlu0 %v1501
        %v1804 = vpop.xlane.xlu0 %1803
        %1805 = vmax.xlane.f32.xlu0 %v1504
        %v1806 = vpop.xlane.xlu0 %1805
        %1807 = vmax.xlane.f32.xlu0 %v1509
        %v1808 = vpop.xlane.xlu0 %1807
        %1809 = vmax.xlane.f32.xlu0 %v1512
        %v1810 = vpop.xlane.xlu0 %1809
        %1811 = vmax.xlane.f32.xlu0 %v1517
        %v1812 = vpop.xlane.xlu0 %1811
        %1813 = vmax.xlane.f32.xlu0 %v1520
        %v1814 = vpop.xlane.xlu0 %1813
        %1815 = vmax.xlane.f32.xlu0 %v1525
        %v1816 = vpop.xlane.xlu0 %1815
        %1817 = vmax.xlane.f32.xlu0 %v1528
        %v1818 = vpop.xlane.xlu0 %1817
        %1819 = vmax.xlane.f32.xlu0 %v1533
        %v1820 = vpop.xlane.xlu0 %1819
        %1821 = vmax.xlane.f32.xlu0 %v1536
        %v1822 = vpop.xlane.xlu0 %1821
        %1823 = vmax.xlane.f32.xlu0 %v1541
        %v1824 = vpop.xlane.xlu0 %1823
        %1825 = vmax.xlane.f32.xlu0 %v1544
        %v1826 = vpop.xlane.xlu0 %1825
        %1827 = vmax.xlane.f32.xlu0 %v1549
        %v1828 = vpop.xlane.xlu0 %1827
        %1829 = vmax.xlane.f32.xlu0 %v1552
        %v1830 = vpop.xlane.xlu0 %1829
        %1831 = vmax.xlane.f32.xlu0 %v1557
        %v1832 = vpop.xlane.xlu0 %1831
        %1833 = vmax.xlane.f32.xlu0 %v1560
        %v1834 = vpop.xlane.xlu0 %1833
        %1835 = vmax.xlane.f32.xlu0 %v1565
        %v1836 = vpop.xlane.xlu0 %1835
        %1837 = vmax.xlane.f32.xlu0 %v1568
        %v1838 = vpop.xlane.xlu0 %1837
        %1839 = vmax.xlane.f32.xlu0 %v1573
        %v1840 = vpop.xlane.xlu0 %1839
        %1841 = vmax.xlane.f32.xlu0 %v1576
        %v1842 = vpop.xlane.xlu0 %1841
        %1843 = vmax.xlane.f32.xlu0 %v1581
        %v1844 = vpop.xlane.xlu0 %1843
        %1845 = vmax.xlane.f32.xlu0 %v1584
        %v1846 = vpop.xlane.xlu0 %1845
        %1847 = vmax.xlane.f32.xlu0 %v1589
        %v1848 = vpop.xlane.xlu0 %1847
        %1849 = vmax.xlane.f32.xlu0 %v1592
        %v1850 = vpop.xlane.xlu0 %1849
        %v1851 = vsub.f32 %v1085, %v1596
        %v1852 = vsub.f32 %v1088, %v1598
        %v1853 = vsub.f32 %v1093, %v1600
        %v1854 = vsub.f32 %v1096, %v1602
        %v1855 = vsub.f32 %v1101, %v1604
        %v1856 = vsub.f32 %v1104, %v1606
        %v1857 = vsub.f32 %v1109, %v1608
        %v1858 = vsub.f32 %v1112, %v1610
        %v1859 = vsub.f32 %v1117, %v1612
        %v1860 = vsub.f32 %v1120, %v1614
        %v1861 = vsub.f32 %v1125, %v1616
        %v1862 = vsub.f32 %v1128, %v1618
        %v1863 = vsub.f32 %v1133, %v1620
        %v1864 = vsub.f32 %v1136, %v1622
        %v1865 = vsub.f32 %v1141, %v1624
        %v1866 = vsub.f32 %v1144, %v1626
        %v1867 = vsub.f32 %v1149, %v1628
        %v1868 = vsub.f32 %v1152, %v1630
        %v1869 = vsub.f32 %v1157, %v1632
        %v1870 = vsub.f32 %v1160, %v1634
        %v1871 = vsub.f32 %v1165, %v1636
        %v1872 = vsub.f32 %v1168, %v1638
        %v1873 = vsub.f32 %v1173, %v1640
        %v1874 = vsub.f32 %v1176, %v1642
        %v1875 = vsub.f32 %v1181, %v1644
        %v1876 = vsub.f32 %v1184, %v1646
        %v1877 = vsub.f32 %v1189, %v1648
        %v1878 = vsub.f32 %v1192, %v1650
        %v1879 = vsub.f32 %v1197, %v1652
        %v1880 = vsub.f32 %v1200, %v1654
        %v1881 = vsub.f32 %v1205, %v1656
        %v1882 = vsub.f32 %v1208, %v1658
        %v1883 = vsub.f32 %v1213, %v1660
        %v1884 = vsub.f32 %v1216, %v1662
        %v1885 = vsub.f32 %v1221, %v1664
        %v1886 = vsub.f32 %v1224, %v1666
        %v1887 = vsub.f32 %v1229, %v1668
        %v1888 = vsub.f32 %v1232, %v1670
        %v1889 = vsub.f32 %v1237, %v1672
        %v1890 = vsub.f32 %v1240, %v1674
        %v1891 = vsub.f32 %v1245, %v1676
        %v1892 = vsub.f32 %v1248, %v1678
        %v1893 = vsub.f32 %v1253, %v1680
        %v1894 = vsub.f32 %v1256, %v1682
        %v1895 = vsub.f32 %v1261, %v1684
        %v1896 = vsub.f32 %v1264, %v1686
        %v1897 = vsub.f32 %v1269, %v1688
        %v1898 = vsub.f32 %v1272, %v1690
        %v1899 = vsub.f32 %v1277, %v1692
        %v1900 = vsub.f32 %v1280, %v1694
        %v1901 = vsub.f32 %v1285, %v1696
        %v1902 = vsub.f32 %v1288, %v1698
        %v1903 = vsub.f32 %v1293, %v1700
        %v1904 = vsub.f32 %v1296, %v1702
        %v1905 = vsub.f32 %v1301, %v1704
        %v1906 = vsub.f32 %v1304, %v1706
        %v1907 = vsub.f32 %v1309, %v1708
        %v1908 = vsub.f32 %v1312, %v1710
        %v1909 = vsub.f32 %v1317, %v1712
        %v1910 = vsub.f32 %v1320, %v1714
        %v1911 = vsub.f32 %v1325, %v1716
        %v1912 = vsub.f32 %v1328, %v1718
        %v1913 = vsub.f32 %v1333, %v1720
        %v1914 = vsub.f32 %v1336, %v1722
        %v1915 = vsub.f32 %v1341, %v1724
        %v1916 = vsub.f32 %v1344, %v1726
        %v1917 = vsub.f32 %v1349, %v1728
        %v1918 = vsub.f32 %v1352, %v1730
        %v1919 = vsub.f32 %v1357, %v1732
        %v1920 = vsub.f32 %v1360, %v1734
        %v1921 = vsub.f32 %v1365, %v1736
        %v1922 = vsub.f32 %v1368, %v1738
        %v1923 = vsub.f32 %v1373, %v1740
        %v1924 = vsub.f32 %v1376, %v1742
        %v1925 = vsub.f32 %v1381, %v1744
        %v1926 = vsub.f32 %v1384, %v1746
        %v1927 = vsub.f32 %v1389, %v1748
        %v1928 = vsub.f32 %v1392, %v1750
        %v1929 = vsub.f32 %v1397, %v1752
        %v1930 = vsub.f32 %v1400, %v1754
        %v1931 = vsub.f32 %v1405, %v1756
        %v1932 = vsub.f32 %v1408, %v1758
        %v1933 = vsub.f32 %v1413, %v1760
        %v1934 = vsub.f32 %v1416, %v1762
        %v1935 = vsub.f32 %v1421, %v1764
        %v1936 = vsub.f32 %v1424, %v1766
        %v1937 = vsub.f32 %v1429, %v1768
        %v1938 = vsub.f32 %v1432, %v1770
        %v1939 = vsub.f32 %v1437, %v1772
        %v1940 = vsub.f32 %v1440, %v1774
        %v1941 = vsub.f32 %v1445, %v1776
        %v1942 = vsub.f32 %v1448, %v1778
        %v1943 = vsub.f32 %v1453, %v1780
        %v1944 = vsub.f32 %v1456, %v1782
        %v1945 = vsub.f32 %v1461, %v1784
        %v1946 = vsub.f32 %v1464, %v1786
        %v1947 = vsub.f32 %v1469, %v1788
        %v1948 = vsub.f32 %v1472, %v1790
        %v1949 = vsub.f32 %v1477, %v1792
        %v1950 = vsub.f32 %v1480, %v1794
        %v1951 = vsub.f32 %v1485, %v1796
        %v1952 = vsub.f32 %v1488, %v1798
        %v1953 = vsub.f32 %v1493, %v1800
        %v1954 = vsub.f32 %v1496, %v1802
        %v1955 = vsub.f32 %v1501, %v1804
        %v1956 = vsub.f32 %v1504, %v1806
        %v1957 = vsub.f32 %v1509, %v1808
        %v1958 = vsub.f32 %v1512, %v1810
        %v1959 = vsub.f32 %v1517, %v1812
        %v1960 = vsub.f32 %v1520, %v1814
        %v1961 = vsub.f32 %v1525, %v1816
        %v1962 = vsub.f32 %v1528, %v1818
        %v1963 = vsub.f32 %v1533, %v1820
        %v1964 = vsub.f32 %v1536, %v1822
        %v1965 = vsub.f32 %v1541, %v1824
        %v1966 = vsub.f32 %v1544, %v1826
        %v1967 = vsub.f32 %v1549, %v1828
        %v1968 = vsub.f32 %v1552, %v1830
        %v1969 = vsub.f32 %v1557, %v1832
        %v1970 = vsub.f32 %v1560, %v1834
        %v1971 = vsub.f32 %v1565, %v1836
        %v1972 = vsub.f32 %v1568, %v1838
        %v1973 = vsub.f32 %v1573, %v1840
        %v1974 = vsub.f32 %v1576, %v1842
        %v1975 = vsub.f32 %v1581, %v1844
        %v1976 = vsub.f32 %v1584, %v1846
        %v1977 = vsub.f32 %v1589, %v1848
        %v1978 = vsub.f32 %v1592, %v1850
        %v1979 = vmul.f32 %v1851, 1.442695
        %v1980 = vpow.pop %v1979
        %v1981 = vmul.f32 %v1852, 1.442695
        %v1982 = vpow.pop %v1981
        %v1983 = vmul.f32 %v1853, 1.442695
        %v1984 = vpow.pop %v1983
        %v1985 = vmul.f32 %v1854, 1.442695
        %v1986 = vpow.pop %v1985
        %v1987 = vmul.f32 %v1855, 1.442695
        %v1988 = vpow.pop %v1987
        %v1989 = vmul.f32 %v1856, 1.442695
        %v1990 = vpow.pop %v1989
        %v1991 = vmul.f32 %v1857, 1.442695
        %v1992 = vpow.pop %v1991
        %v1993 = vmul.f32 %v1858, 1.442695
        %v1994 = vpow.pop %v1993
        %v1995 = vmul.f32 %v1859, 1.442695
        %v1996 = vpow.pop %v1995
        %v1997 = vmul.f32 %v1860, 1.442695
        %v1998 = vpow.pop %v1997
        %v1999 = vmul.f32 %v1861, 1.442695
        %v2000 = vpow.pop %v1999
        %v2001 = vmul.f32 %v1862, 1.442695
        %v2002 = vpow.pop %v2001
        %v2003 = vmul.f32 %v1863, 1.442695
        %v2004 = vpow.pop %v2003
        %v2005 = vmul.f32 %v1864, 1.442695
        %v2006 = vpow.pop %v2005
        %v2007 = vmul.f32 %v1865, 1.442695
        %v2008 = vpow.pop %v2007
        %v2009 = vmul.f32 %v1866, 1.442695
        %v2010 = vpow.pop %v2009
        %v2011 = vmul.f32 %v1867, 1.442695
        %v2012 = vpow.pop %v2011
        %v2013 = vmul.f32 %v1868, 1.442695
        %v2014 = vpow.pop %v2013
        %v2015 = vmul.f32 %v1869, 1.442695
        %v2016 = vpow.pop %v2015
        %v2017 = vmul.f32 %v1870, 1.442695
        %v2018 = vpow.pop %v2017
        %v2019 = vmul.f32 %v1871, 1.442695
        %v2020 = vpow.pop %v2019
        %v2021 = vmul.f32 %v1872, 1.442695
        %v2022 = vpow.pop %v2021
        %v2023 = vmul.f32 %v1873, 1.442695
        %v2024 = vpow.pop %v2023
        %v2025 = vmul.f32 %v1874, 1.442695
        %v2026 = vpow.pop %v2025
        %v2027 = vmul.f32 %v1875, 1.442695
        %v2028 = vpow.pop %v2027
        %v2029 = vmul.f32 %v1876, 1.442695
        %v2030 = vpow.pop %v2029
        %v2031 = vmul.f32 %v1877, 1.442695
        %v2032 = vpow.pop %v2031
        %v2033 = vmul.f32 %v1878, 1.442695
        %v2034 = vpow.pop %v2033
        %v2035 = vmul.f32 %v1879, 1.442695
        %v2036 = vpow.pop %v2035
        %v2037 = vmul.f32 %v1880, 1.442695
        %v2038 = vpow.pop %v2037
        %v2039 = vmul.f32 %v1881, 1.442695
        %v2040 = vpow.pop %v2039
        %v2041 = vmul.f32 %v1882, 1.442695
        %v2042 = vpow.pop %v2041
        %v2043 = vmul.f32 %v1883, 1.442695
        %v2044 = vpow.pop %v2043
        %v2045 = vmul.f32 %v1884, 1.442695
        %v2046 = vpow.pop %v2045
        %v2047 = vmul.f32 %v1885, 1.442695
        %v2048 = vpow.pop %v2047
        %v2049 = vmul.f32 %v1886, 1.442695
        %v2050 = vpow.pop %v2049
        %v2051 = vmul.f32 %v1887, 1.442695
        %v2052 = vpow.pop %v2051
        %v2053 = vmul.f32 %v1888, 1.442695
        %v2054 = vpow.pop %v2053
        %v2055 = vmul.f32 %v1889, 1.442695
        %v2056 = vpow.pop %v2055
        %v2057 = vmul.f32 %v1890, 1.442695
        %v2058 = vpow.pop %v2057
        %v2059 = vmul.f32 %v1891, 1.442695
        %v2060 = vpow.pop %v2059
        %v2061 = vmul.f32 %v1892, 1.442695
        %v2062 = vpow.pop %v2061
        %v2063 = vmul.f32 %v1893, 1.442695
        %v2064 = vpow.pop %v2063
        %v2065 = vmul.f32 %v1894, 1.442695
        %v2066 = vpow.pop %v2065
        %v2067 = vmul.f32 %v1895, 1.442695
        %v2068 = vpow.pop %v2067
        %v2069 = vmul.f32 %v1896, 1.442695
        %v2070 = vpow.pop %v2069
        %v2071 = vmul.f32 %v1897, 1.442695
        %v2072 = vpow.pop %v2071
        %v2073 = vmul.f32 %v1898, 1.442695
        %v2074 = vpow.pop %v2073
        %v2075 = vmul.f32 %v1899, 1.442695
        %v2076 = vpow.pop %v2075
        %v2077 = vmul.f32 %v1900, 1.442695
        %v2078 = vpow.pop %v2077
        %v2079 = vmul.f32 %v1901, 1.442695
        %v2080 = vpow.pop %v2079
        %v2081 = vmul.f32 %v1902, 1.442695
        %v2082 = vpow.pop %v2081
        %v2083 = vmul.f32 %v1903, 1.442695
        %v2084 = vpow.pop %v2083
        %v2085 = vmul.f32 %v1904, 1.442695
        %v2086 = vpow.pop %v2085
        %v2087 = vmul.f32 %v1905, 1.442695
        %v2088 = vpow.pop %v2087
        %v2089 = vmul.f32 %v1906, 1.442695
        %v2090 = vpow.pop %v2089
        %v2091 = vmul.f32 %v1907, 1.442695
        %v2092 = vpow.pop %v2091
        %v2093 = vmul.f32 %v1908, 1.442695
        %v2094 = vpow.pop %v2093
        %v2095 = vmul.f32 %v1909, 1.442695
        %v2096 = vpow.pop %v2095
        %v2097 = vmul.f32 %v1910, 1.442695
        %v2098 = vpow.pop %v2097
        %v2099 = vmul.f32 %v1911, 1.442695
        %v2100 = vpow.pop %v2099
        %v2101 = vmul.f32 %v1912, 1.442695
        %v2102 = vpow.pop %v2101
        %v2103 = vmul.f32 %v1913, 1.442695
        %v2104 = vpow.pop %v2103
        %v2105 = vmul.f32 %v1914, 1.442695
        %v2106 = vpow.pop %v2105
        %v2107 = vmul.f32 %v1915, 1.442695
        %v2108 = vpow.pop %v2107
        %v2109 = vmul.f32 %v1916, 1.442695
        %v2110 = vpow.pop %v2109
        %v2111 = vmul.f32 %v1917, 1.442695
        %v2112 = vpow.pop %v2111
        %v2113 = vmul.f32 %v1918, 1.442695
        %v2114 = vpow.pop %v2113
        %v2115 = vmul.f32 %v1919, 1.442695
        %v2116 = vpow.pop %v2115
        %v2117 = vmul.f32 %v1920, 1.442695
        %v2118 = vpow.pop %v2117
        %v2119 = vmul.f32 %v1921, 1.442695
        %v2120 = vpow.pop %v2119
        %v2121 = vmul.f32 %v1922, 1.442695
        %v2122 = vpow.pop %v2121
        %v2123 = vmul.f32 %v1923, 1.442695
        %v2124 = vpow.pop %v2123
        %v2125 = vmul.f32 %v1924, 1.442695
        %v2126 = vpow.pop %v2125
        %v2127 = vmul.f32 %v1925, 1.442695
        %v2128 = vpow.pop %v2127
        %v2129 = vmul.f32 %v1926, 1.442695
        %v2130 = vpow.pop %v2129
        %v2131 = vmul.f32 %v1927, 1.442695
        %v2132 = vpow.pop %v2131
        %v2133 = vmul.f32 %v1928, 1.442695
        %v2134 = vpow.pop %v2133
        %v2135 = vmul.f32 %v1929, 1.442695
        %v2136 = vpow.pop %v2135
        %v2137 = vmul.f32 %v1930, 1.442695
        %v2138 = vpow.pop %v2137
        %v2139 = vmul.f32 %v1931, 1.442695
        %v2140 = vpow.pop %v2139
        %v2141 = vmul.f32 %v1932, 1.442695
        %v2142 = vpow.pop %v2141
        %v2143 = vmul.f32 %v1933, 1.442695
        %v2144 = vpow.pop %v2143
        %v2145 = vmul.f32 %v1934, 1.442695
        %v2146 = vpow.pop %v2145
        %v2147 = vmul.f32 %v1935, 1.442695
        %v2148 = vpow.pop %v2147
        %v2149 = vmul.f32 %v1936, 1.442695
        %v2150 = vpow.pop %v2149
        %v2151 = vmul.f32 %v1937, 1.442695
        %v2152 = vpow.pop %v2151
        %v2153 = vmul.f32 %v1938, 1.442695
        %v2154 = vpow.pop %v2153
        %v2155 = vmul.f32 %v1939, 1.442695
        %v2156 = vpow.pop %v2155
        %v2157 = vmul.f32 %v1940, 1.442695
        %v2158 = vpow.pop %v2157
        %v2159 = vmul.f32 %v1941, 1.442695
        %v2160 = vpow.pop %v2159
        %v2161 = vmul.f32 %v1942, 1.442695
        %v2162 = vpow.pop %v2161
        %v2163 = vmul.f32 %v1943, 1.442695
        %v2164 = vpow.pop %v2163
        %v2165 = vmul.f32 %v1944, 1.442695
        %v2166 = vpow.pop %v2165
        %v2167 = vmul.f32 %v1945, 1.442695
        %v2168 = vpow.pop %v2167
        %v2169 = vmul.f32 %v1946, 1.442695
        %v2170 = vpow.pop %v2169
        %v2171 = vmul.f32 %v1947, 1.442695
        %v2172 = vpow.pop %v2171
        %v2173 = vmul.f32 %v1948, 1.442695
        %v2174 = vpow.pop %v2173
        %v2175 = vmul.f32 %v1949, 1.442695
        %v2176 = vpow.pop %v2175
        %v2177 = vmul.f32 %v1950, 1.442695
        %v2178 = vpow.pop %v2177
        %v2179 = vmul.f32 %v1951, 1.442695
        %v2180 = vpow.pop %v2179
        %v2181 = vmul.f32 %v1952, 1.442695
        %v2182 = vpow.pop %v2181
        %v2183 = vmul.f32 %v1953, 1.442695
        %v2184 = vpow.pop %v2183
        %v2185 = vmul.f32 %v1954, 1.442695
        %v2186 = vpow.pop %v2185
        %v2187 = vmul.f32 %v1955, 1.442695
        %v2188 = vpow.pop %v2187
        %v2189 = vmul.f32 %v1956, 1.442695
        %v2190 = vpow.pop %v2189
        %v2191 = vmul.f32 %v1957, 1.442695
        %v2192 = vpow.pop %v2191
        %v2193 = vmul.f32 %v1958, 1.442695
        %v2194 = vpow.pop %v2193
        %v2195 = vmul.f32 %v1959, 1.442695
        %v2196 = vpow.pop %v2195
        %v2197 = vmul.f32 %v1960, 1.442695
        %v2198 = vpow.pop %v2197
        %v2199 = vmul.f32 %v1961, 1.442695
        %v2200 = vpow.pop %v2199
        %v2201 = vmul.f32 %v1962, 1.442695
        %v2202 = vpow.pop %v2201
        %v2203 = vmul.f32 %v1963, 1.442695
        %v2204 = vpow.pop %v2203
        %v2205 = vmul.f32 %v1964, 1.442695
        %v2206 = vpow.pop %v2205
        %v2207 = vmul.f32 %v1965, 1.442695
        %v2208 = vpow.pop %v2207
        %v2209 = vmul.f32 %v1966, 1.442695
        %v2210 = vpow.pop %v2209
        %v2211 = vmul.f32 %v1967, 1.442695
        %v2212 = vpow.pop %v2211
        %v2213 = vmul.f32 %v1968, 1.442695
        %v2214 = vpow.pop %v2213
        %v2215 = vmul.f32 %v1969, 1.442695
        %v2216 = vpow.pop %v2215
        %v2217 = vmul.f32 %v1970, 1.442695
        %v2218 = vpow.pop %v2217
        %v2219 = vmul.f32 %v1971, 1.442695
        %v2220 = vpow.pop %v2219
        %v2221 = vmul.f32 %v1972, 1.442695
        %v2222 = vpow.pop %v2221
        %v2223 = vmul.f32 %v1973, 1.442695
        %v2224 = vpow.pop %v2223
        %v2225 = vmul.f32 %v1974, 1.442695
        %v2226 = vpow.pop %v2225
        %v2227 = vmul.f32 %v1975, 1.442695
        %v2228 = vpow.pop %v2227
        %v2229 = vmul.f32 %v1976, 1.442695
        %v2230 = vpow.pop %v2229
        %v2231 = vmul.f32 %v1977, 1.442695
        %v2232 = vpow.pop %v2231
        %v2233 = vmul.f32 %v1978, 1.442695
        %v2234 = vpow.pop %v2233
        %2235 = vadd.xlane.f32.xlu0 %v1980
        %v2236 = vpop.xlane.xlu0 %2235
        %2237 = vadd.xlane.f32.xlu0 %v1982
        %v2238 = vpop.xlane.xlu0 %2237
        %2239 = vadd.xlane.f32.xlu0 %v1984
        %v2240 = vpop.xlane.xlu0 %2239
        %2241 = vadd.xlane.f32.xlu0 %v1986
        %v2242 = vpop.xlane.xlu0 %2241
        %2243 = vadd.xlane.f32.xlu0 %v1988
        %v2244 = vpop.xlane.xlu0 %2243
        %2245 = vadd.xlane.f32.xlu0 %v1990
        %v2246 = vpop.xlane.xlu0 %2245
        %2247 = vadd.xlane.f32.xlu0 %v1992
        %v2248 = vpop.xlane.xlu0 %2247
        %2249 = vadd.xlane.f32.xlu0 %v1994
        %v2250 = vpop.xlane.xlu0 %2249
        %2251 = vadd.xlane.f32.xlu0 %v1996
        %v2252 = vpop.xlane.xlu0 %2251
        %2253 = vadd.xlane.f32.xlu0 %v1998
        %v2254 = vpop.xlane.xlu0 %2253
        %2255 = vadd.xlane.f32.xlu0 %v2000
        %v2256 = vpop.xlane.xlu0 %2255
        %2257 = vadd.xlane.f32.xlu0 %v2002
        %v2258 = vpop.xlane.xlu0 %2257
        %2259 = vadd.xlane.f32.xlu0 %v2004
        %v2260 = vpop.xlane.xlu0 %2259
        %2261 = vadd.xlane.f32.xlu0 %v2006
        %v2262 = vpop.xlane.xlu0 %2261
        %2263 = vadd.xlane.f32.xlu0 %v2008
        %v2264 = vpop.xlane.xlu0 %2263
        %2265 = vadd.xlane.f32.xlu0 %v2010
        %v2266 = vpop.xlane.xlu0 %2265
        %2267 = vadd.xlane.f32.xlu0 %v2012
        %v2268 = vpop.xlane.xlu0 %2267
        %2269 = vadd.xlane.f32.xlu0 %v2014
        %v2270 = vpop.xlane.xlu0 %2269
        %2271 = vadd.xlane.f32.xlu0 %v2016
        %v2272 = vpop.xlane.xlu0 %2271
        %2273 = vadd.xlane.f32.xlu0 %v2018
        %v2274 = vpop.xlane.xlu0 %2273
        %2275 = vadd.xlane.f32.xlu0 %v2020
        %v2276 = vpop.xlane.xlu0 %2275
        %2277 = vadd.xlane.f32.xlu0 %v2022
        %v2278 = vpop.xlane.xlu0 %2277
        %2279 = vadd.xlane.f32.xlu0 %v2024
        %v2280 = vpop.xlane.xlu0 %2279
        %2281 = vadd.xlane.f32.xlu0 %v2026
        %v2282 = vpop.xlane.xlu0 %2281
        %2283 = vadd.xlane.f32.xlu0 %v2028
        %v2284 = vpop.xlane.xlu0 %2283
        %2285 = vadd.xlane.f32.xlu0 %v2030
        %v2286 = vpop.xlane.xlu0 %2285
        %2287 = vadd.xlane.f32.xlu0 %v2032
        %v2288 = vpop.xlane.xlu0 %2287
        %2289 = vadd.xlane.f32.xlu0 %v2034
        %v2290 = vpop.xlane.xlu0 %2289
        %2291 = vadd.xlane.f32.xlu0 %v2036
        %v2292 = vpop.xlane.xlu0 %2291
        %2293 = vadd.xlane.f32.xlu0 %v2038
        %v2294 = vpop.xlane.xlu0 %2293
        %2295 = vadd.xlane.f32.xlu0 %v2040
        %v2296 = vpop.xlane.xlu0 %2295
        %2297 = vadd.xlane.f32.xlu0 %v2042
        %v2298 = vpop.xlane.xlu0 %2297
        %2299 = vadd.xlane.f32.xlu0 %v2044
        %v2300 = vpop.xlane.xlu0 %2299
        %2301 = vadd.xlane.f32.xlu0 %v2046
        %v2302 = vpop.xlane.xlu0 %2301
        %2303 = vadd.xlane.f32.xlu0 %v2048
        %v2304 = vpop.xlane.xlu0 %2303
        %2305 = vadd.xlane.f32.xlu0 %v2050
        %v2306 = vpop.xlane.xlu0 %2305
        %2307 = vadd.xlane.f32.xlu0 %v2052
        %v2308 = vpop.xlane.xlu0 %2307
        %2309 = vadd.xlane.f32.xlu0 %v2054
        %v2310 = vpop.xlane.xlu0 %2309
        %2311 = vadd.xlane.f32.xlu0 %v2056
        %v2312 = vpop.xlane.xlu0 %2311
        %2313 = vadd.xlane.f32.xlu0 %v2058
        %v2314 = vpop.xlane.xlu0 %2313
        %2315 = vadd.xlane.f32.xlu0 %v2060
        %v2316 = vpop.xlane.xlu0 %2315
        %2317 = vadd.xlane.f32.xlu0 %v2062
        %v2318 = vpop.xlane.xlu0 %2317
        %2319 = vadd.xlane.f32.xlu0 %v2064
        %v2320 = vpop.xlane.xlu0 %2319
        %2321 = vadd.xlane.f32.xlu0 %v2066
        %v2322 = vpop.xlane.xlu0 %2321
        %2323 = vadd.xlane.f32.xlu0 %v2068
        %v2324 = vpop.xlane.xlu0 %2323
        %2325 = vadd.xlane.f32.xlu0 %v2070
        %v2326 = vpop.xlane.xlu0 %2325
        %2327 = vadd.xlane.f32.xlu0 %v2072
        %v2328 = vpop.xlane.xlu0 %2327
        %2329 = vadd.xlane.f32.xlu0 %v2074
        %v2330 = vpop.xlane.xlu0 %2329
        %2331 = vadd.xlane.f32.xlu0 %v2076
        %v2332 = vpop.xlane.xlu0 %2331
        %2333 = vadd.xlane.f32.xlu0 %v2078
        %v2334 = vpop.xlane.xlu0 %2333
        %2335 = vadd.xlane.f32.xlu0 %v2080
        %v2336 = vpop.xlane.xlu0 %2335
        %2337 = vadd.xlane.f32.xlu0 %v2082
        %v2338 = vpop.xlane.xlu0 %2337
        %2339 = vadd.xlane.f32.xlu0 %v2084
        %v2340 = vpop.xlane.xlu0 %2339
        %2341 = vadd.xlane.f32.xlu0 %v2086
        %v2342 = vpop.xlane.xlu0 %2341
        %2343 = vadd.xlane.f32.xlu0 %v2088
        %v2344 = vpop.xlane.xlu0 %2343
        %2345 = vadd.xlane.f32.xlu0 %v2090
        %v2346 = vpop.xlane.xlu0 %2345
        %2347 = vadd.xlane.f32.xlu0 %v2092
        %v2348 = vpop.xlane.xlu0 %2347
        %2349 = vadd.xlane.f32.xlu0 %v2094
        %v2350 = vpop.xlane.xlu0 %2349
        %2351 = vadd.xlane.f32.xlu0 %v2096
        %v2352 = vpop.xlane.xlu0 %2351
        %2353 = vadd.xlane.f32.xlu0 %v2098
        %v2354 = vpop.xlane.xlu0 %2353
        %2355 = vadd.xlane.f32.xlu0 %v2100
        %v2356 = vpop.xlane.xlu0 %2355
        %2357 = vadd.xlane.f32.xlu0 %v2102
        %v2358 = vpop.xlane.xlu0 %2357
        %2359 = vadd.xlane.f32.xlu0 %v2104
        %v2360 = vpop.xlane.xlu0 %2359
        %2361 = vadd.xlane.f32.xlu0 %v2106
        %v2362 = vpop.xlane.xlu0 %2361
        %2363 = vadd.xlane.f32.xlu0 %v2108
        %v2364 = vpop.xlane.xlu0 %2363
        %2365 = vadd.xlane.f32.xlu0 %v2110
        %v2366 = vpop.xlane.xlu0 %2365
        %2367 = vadd.xlane.f32.xlu0 %v2112
        %v2368 = vpop.xlane.xlu0 %2367
        %2369 = vadd.xlane.f32.xlu0 %v2114
        %v2370 = vpop.xlane.xlu0 %2369
        %2371 = vadd.xlane.f32.xlu0 %v2116
        %v2372 = vpop.xlane.xlu0 %2371
        %2373 = vadd.xlane.f32.xlu0 %v2118
        %v2374 = vpop.xlane.xlu0 %2373
        %2375 = vadd.xlane.f32.xlu0 %v2120
        %v2376 = vpop.xlane.xlu0 %2375
        %2377 = vadd.xlane.f32.xlu0 %v2122
        %v2378 = vpop.xlane.xlu0 %2377
        %2379 = vadd.xlane.f32.xlu0 %v2124
        %v2380 = vpop.xlane.xlu0 %2379
        %2381 = vadd.xlane.f32.xlu0 %v2126
        %v2382 = vpop.xlane.xlu0 %2381
        %2383 = vadd.xlane.f32.xlu0 %v2128
        %v2384 = vpop.xlane.xlu0 %2383
        %2385 = vadd.xlane.f32.xlu0 %v2130
        %v2386 = vpop.xlane.xlu0 %2385
        %2387 = vadd.xlane.f32.xlu0 %v2132
        %v2388 = vpop.xlane.xlu0 %2387
        %2389 = vadd.xlane.f32.xlu0 %v2134
        %v2390 = vpop.xlane.xlu0 %2389
        %2391 = vadd.xlane.f32.xlu0 %v2136
        %v2392 = vpop.xlane.xlu0 %2391
        %2393 = vadd.xlane.f32.xlu0 %v2138
        %v2394 = vpop.xlane.xlu0 %2393
        %2395 = vadd.xlane.f32.xlu0 %v2140
        %v2396 = vpop.xlane.xlu0 %2395
        %2397 = vadd.xlane.f32.xlu0 %v2142
        %v2398 = vpop.xlane.xlu0 %2397
        %2399 = vadd.xlane.f32.xlu0 %v2144
        %v2400 = vpop.xlane.xlu0 %2399
        %2401 = vadd.xlane.f32.xlu0 %v2146
        %v2402 = vpop.xlane.xlu0 %2401
        %2403 = vadd.xlane.f32.xlu0 %v2148
        %v2404 = vpop.xlane.xlu0 %2403
        %2405 = vadd.xlane.f32.xlu0 %v2150
        %v2406 = vpop.xlane.xlu0 %2405
        %2407 = vadd.xlane.f32.xlu0 %v2152
        %v2408 = vpop.xlane.xlu0 %2407
        %2409 = vadd.xlane.f32.xlu0 %v2154
        %v2410 = vpop.xlane.xlu0 %2409
        %2411 = vadd.xlane.f32.xlu0 %v2156
        %v2412 = vpop.xlane.xlu0 %2411
        %2413 = vadd.xlane.f32.xlu0 %v2158
        %v2414 = vpop.xlane.xlu0 %2413
        %2415 = vadd.xlane.f32.xlu0 %v2160
        %v2416 = vpop.xlane.xlu0 %2415
        %2417 = vadd.xlane.f32.xlu0 %v2162
        %v2418 = vpop.xlane.xlu0 %2417
        %2419 = vadd.xlane.f32.xlu0 %v2164
        %v2420 = vpop.xlane.xlu0 %2419
        %2421 = vadd.xlane.f32.xlu0 %v2166
        %v2422 = vpop.xlane.xlu0 %2421
        %2423 = vadd.xlane.f32.xlu0 %v2168
        %v2424 = vpop.xlane.xlu0 %2423
        %2425 = vadd.xlane.f32.xlu0 %v2170
        %v2426 = vpop.xlane.xlu0 %2425
        %2427 = vadd.xlane.f32.xlu0 %v2172
        %v2428 = vpop.xlane.xlu0 %2427
        %2429 = vadd.xlane.f32.xlu0 %v2174
        %v2430 = vpop.xlane.xlu0 %2429
        %2431 = vadd.xlane.f32.xlu0 %v2176
        %v2432 = vpop.xlane.xlu0 %2431
        %2433 = vadd.xlane.f32.xlu0 %v2178
        %v2434 = vpop.xlane.xlu0 %2433
        %2435 = vadd.xlane.f32.xlu0 %v2180
        %v2436 = vpop.xlane.xlu0 %2435
        %2437 = vadd.xlane.f32.xlu0 %v2182
        %v2438 = vpop.xlane.xlu0 %2437
        %2439 = vadd.xlane.f32.xlu0 %v2184
        %v2440 = vpop.xlane.xlu0 %2439
        %2441 = vadd.xlane.f32.xlu0 %v2186
        %v2442 = vpop.xlane.xlu0 %2441
        %2443 = vadd.xlane.f32.xlu0 %v2188
        %v2444 = vpop.xlane.xlu0 %2443
        %2445 = vadd.xlane.f32.xlu0 %v2190
        %v2446 = vpop.xlane.xlu0 %2445
        %2447 = vadd.xlane.f32.xlu0 %v2192
        %v2448 = vpop.xlane.xlu0 %2447
        %2449 = vadd.xlane.f32.xlu0 %v2194
        %v2450 = vpop.xlane.xlu0 %2449
        %2451 = vadd.xlane.f32.xlu0 %v2196
        %v2452 = vpop.xlane.xlu0 %2451
        %2453 = vadd.xlane.f32.xlu0 %v2198
        %v2454 = vpop.xlane.xlu0 %2453
        %2455 = vadd.xlane.f32.xlu0 %v2200
        %v2456 = vpop.xlane.xlu0 %2455
        %2457 = vadd.xlane.f32.xlu0 %v2202
        %v2458 = vpop.xlane.xlu0 %2457
        %2459 = vadd.xlane.f32.xlu0 %v2204
        %v2460 = vpop.xlane.xlu0 %2459
        %2461 = vadd.xlane.f32.xlu0 %v2206
        %v2462 = vpop.xlane.xlu0 %2461
        %2463 = vadd.xlane.f32.xlu0 %v2208
        %v2464 = vpop.xlane.xlu0 %2463
        %2465 = vadd.xlane.f32.xlu0 %v2210
        %v2466 = vpop.xlane.xlu0 %2465
        %2467 = vadd.xlane.f32.xlu0 %v2212
        %v2468 = vpop.xlane.xlu0 %2467
        %2469 = vadd.xlane.f32.xlu0 %v2214
        %v2470 = vpop.xlane.xlu0 %2469
        %2471 = vadd.xlane.f32.xlu0 %v2216
        %v2472 = vpop.xlane.xlu0 %2471
        %2473 = vadd.xlane.f32.xlu0 %v2218
        %v2474 = vpop.xlane.xlu0 %2473
        %2475 = vadd.xlane.f32.xlu0 %v2220
        %v2476 = vpop.xlane.xlu0 %2475
        %2477 = vadd.xlane.f32.xlu0 %v2222
        %v2478 = vpop.xlane.xlu0 %2477
        %2479 = vadd.xlane.f32.xlu0 %v2224
        %v2480 = vpop.xlane.xlu0 %2479
        %2481 = vadd.xlane.f32.xlu0 %v2226
        %v2482 = vpop.xlane.xlu0 %2481
        %2483 = vadd.xlane.f32.xlu0 %v2228
        %v2484 = vpop.xlane.xlu0 %2483
        %2485 = vadd.xlane.f32.xlu0 %v2230
        %v2486 = vpop.xlane.xlu0 %2485
        %2487 = vadd.xlane.f32.xlu0 %v2232
        %v2488 = vpop.xlane.xlu0 %2487
        %2489 = vadd.xlane.f32.xlu0 %v2234
        %v2490 = vpop.xlane.xlu0 %2489
        %v2491 = vpack.c.bf16 %v1982, %v1980
        %v2492 = vpack.c.bf16 %v1986, %v1984
        %v2493 = vpack.c.bf16 %v1990, %v1988
        %v2494 = vpack.c.bf16 %v1994, %v1992
        %v2495 = vpack.c.bf16 %v1998, %v1996
        %v2496 = vpack.c.bf16 %v2002, %v2000
        %v2497 = vpack.c.bf16 %v2006, %v2004
        %v2498 = vpack.c.bf16 %v2010, %v2008
        %v2499 = vpack.c.bf16 %v2014, %v2012
        %v2500 = vpack.c.bf16 %v2018, %v2016
        %v2501 = vpack.c.bf16 %v2022, %v2020
        %v2502 = vpack.c.bf16 %v2026, %v2024
        %v2503 = vpack.c.bf16 %v2030, %v2028
        %v2504 = vpack.c.bf16 %v2034, %v2032
        %v2505 = vpack.c.bf16 %v2038, %v2036
        %v2506 = vpack.c.bf16 %v2042, %v2040
        %v2507 = vpack.c.bf16 %v2046, %v2044
        %v2508 = vpack.c.bf16 %v2050, %v2048
        %v2509 = vpack.c.bf16 %v2054, %v2052
        %v2510 = vpack.c.bf16 %v2058, %v2056
        %v2511 = vpack.c.bf16 %v2062, %v2060
        %v2512 = vpack.c.bf16 %v2066, %v2064
        %v2513 = vpack.c.bf16 %v2070, %v2068
        %v2514 = vpack.c.bf16 %v2074, %v2072
        %v2515 = vpack.c.bf16 %v2078, %v2076
        %v2516 = vpack.c.bf16 %v2082, %v2080
        %v2517 = vpack.c.bf16 %v2086, %v2084
        %v2518 = vpack.c.bf16 %v2090, %v2088
        %v2519 = vpack.c.bf16 %v2094, %v2092
        %v2520 = vpack.c.bf16 %v2098, %v2096
        %v2521 = vpack.c.bf16 %v2102, %v2100
        %v2522 = vpack.c.bf16 %v2106, %v2104
        %v2523 = vpack.c.bf16 %v2110, %v2108
        %v2524 = vpack.c.bf16 %v2114, %v2112
        %v2525 = vpack.c.bf16 %v2118, %v2116
        %v2526 = vpack.c.bf16 %v2122, %v2120
        %v2527 = vpack.c.bf16 %v2126, %v2124
        %v2528 = vpack.c.bf16 %v2130, %v2128
        %v2529 = vpack.c.bf16 %v2134, %v2132
        %v2530 = vpack.c.bf16 %v2138, %v2136
        %v2531 = vpack.c.bf16 %v2142, %v2140
        %v2532 = vpack.c.bf16 %v2146, %v2144
        %v2533 = vpack.c.bf16 %v2150, %v2148
        %v2534 = vpack.c.bf16 %v2154, %v2152
        %v2535 = vpack.c.bf16 %v2158, %v2156
        %v2536 = vpack.c.bf16 %v2162, %v2160
        %v2537 = vpack.c.bf16 %v2166, %v2164
        %v2538 = vpack.c.bf16 %v2170, %v2168
        %v2539 = vpack.c.bf16 %v2174, %v2172
        %v2540 = vpack.c.bf16 %v2178, %v2176
        %v2541 = vpack.c.bf16 %v2182, %v2180
        %v2542 = vpack.c.bf16 %v2186, %v2184
        %v2543 = vpack.c.bf16 %v2190, %v2188
        %v2544 = vpack.c.bf16 %v2194, %v2192
        %v2545 = vpack.c.bf16 %v2198, %v2196
        %v2546 = vpack.c.bf16 %v2202, %v2200
        %v2547 = vpack.c.bf16 %v2206, %v2204
        %v2548 = vpack.c.bf16 %v2210, %v2208
        %v2549 = vpack.c.bf16 %v2214, %v2212
        %v2550 = vpack.c.bf16 %v2218, %v2216
        %v2551 = vpack.c.bf16 %v2222, %v2220
        %v2552 = vpack.c.bf16 %v2226, %v2224
        %v2553 = vpack.c.bf16 %v2230, %v2228
        %v2554 = vpack.c.bf16 %v2234, %v2232
        %2555 = vmatprep.subr.bf16.mxu0 0
        %2556 = vmatpush1.bf16.msra.mxu0 %v759
        %2557 = vmatprep.subr.bf16.mxu0 0
        %2558 = vmatpush1.bf16.msra.mxu0 %v760
        %2559 = vmatprep.subr.bf16.mxu0 0
        %2560 = vmatpush1.bf16.msra.mxu0 %v761
        %2561 = vmatprep.subr.bf16.mxu0 0
        %2562 = vmatpush1.bf16.msra.mxu0 %v762
        %2563 = vmatprep.subr.bf16.mxu0 0
        %2564 = vmatpush1.bf16.msra.mxu0 %v763
        %2565 = vmatprep.subr.bf16.mxu0 0
        %2566 = vmatpush1.bf16.msra.mxu0 %v764
        %2567 = vmatprep.subr.bf16.mxu0 0
        %2568 = vmatpush1.bf16.msra.mxu0 %v765
        %2569 = vmatprep.subr.bf16.mxu0 0
        %2570 = vmatpush1.bf16.msra.mxu0 %v766
        %2571 = vmatprep.subr.bf16.mxu0 0
        %2572 = vmatpush1.bf16.msra.mxu0 0
        %2573 = vmatprep.subr.bf16.mxu0 0
        %2574 = vmatpush1.bf16.msra.mxu0 0
        %2575 = vmatprep.subr.bf16.mxu0 0
        %2576 = vmatpush1.bf16.msra.mxu0 0
        %2577 = vmatprep.subr.bf16.mxu0 0
        %2578 = vmatpush1.bf16.msra.mxu0 0
        %2579 = vmatprep.subr.bf16.mxu0 0
        %2580 = vmatpush1.bf16.msra.mxu0 0
        %2581 = vmatprep.subr.bf16.mxu0 0
        %2582 = vmatpush1.bf16.msra.mxu0 0
        %2583 = vmatprep.subr.bf16.mxu0 0
        %2584 = vmatpush1.bf16.msra.mxu0 0
        %2585 = vmatprep.subr.bf16.mxu0 0
        %2586 = vmatpush1.bf16.msra.mxu0 0
        %2587 = vmatprep.mubr.bf16.mxu0 0
        %2588 = vmatmul.mubr.bf16.gmra.mrb[0].mxu0 %v2491
        %v2589 = vpop.f32.mrb[0].mxu0
        %v2590 = vadd.f32 0.0, %v2589
        %v2591 = vpop.f32.mrb[0].mxu0
        %v2592 = vpop.f32.mrb[0].mxu0
        %v2593 = vadd.f32 0.0, %v2592
        %v2594 = vpop.f32.mrb[0].mxu0
        %2595 = vmatprep.mubr.bf16.mxu0 0
        %2596 = vmatmul.mubr.bf16.gmra.mrb[0].mxu0 %v2492
        %v2597 = vpop.f32.mrb[0].mxu0
        %v2598 = vadd.f32 0.0, %v2597
        %v2599 = vpop.f32.mrb[0].mxu0
        %v2600 = vpop.f32.mrb[0].mxu0
        %v2601 = vadd.f32 0.0, %v2600
        %v2602 = vpop.f32.mrb[0].mxu0
        %2603 = vmatprep.mubr.bf16.mxu0 0
        %2604 = vmatmul.mubr.bf16.gmra.mrb[0].mxu0 %v2493
        %v2605 = vpop.f32.mrb[0].mxu0
        %v2606 = vadd.f32 0.0, %v2605
        %v2607 = vpop.f32.mrb[0].mxu0
        %v2608 = vpop.f32.mrb[0].mxu0
        %v2609 = vadd.f32 0.0, %v2608
        %v2610 = vpop.f32.mrb[0].mxu0
        %2611 = vmatprep.mubr.bf16.mxu0 0
        %2612 = vmatmul.mubr.bf16.gmra.mrb[0].mxu0 %v2494
        %v2613 = vpop.f32.mrb[0].mxu0
        %v2614 = vadd.f32 0.0, %v2613
        %v2615 = vpop.f32.mrb[0].mxu0
        %v2616 = vpop.f32.mrb[0].mxu0
        %v2617 = vadd.f32 0.0, %v2616
        %v2618 = vpop.f32.mrb[0].mxu0
        %2619 = vmatprep.mubr.bf16.mxu0 0
        %2620 = vmatmul.mubr.bf16.gmra.mrb[0].mxu0 %v2495
        %v2621 = vpop.f32.mrb[0].mxu0
        %v2622 = vadd.f32 0.0, %v2621
        %v2623 = vpop.f32.mrb[0].mxu0
        %v2624 = vpop.f32.mrb[0].mxu0
        %v2625 = vadd.f32 0.0, %v2624
        %v2626 = vpop.f32.mrb[0].mxu0
        %2627 = vmatprep.mubr.bf16.mxu0 0
        %2628 = vmatmul.mubr.bf16.gmra.mrb[0].mxu0 %v2496
        %v2629 = vpop.f32.mrb[0].mxu0
        %v2630 = vadd.f32 0.0, %v2629
        %v2631 = vpop.f32.mrb[0].mxu0
        %v2632 = vpop.f32.mrb[0].mxu0
        %v2633 = vadd.f32 0.0, %v2632
        %v2634 = vpop.f32.mrb[0].mxu0
        %2635 = vmatprep.mubr.bf16.mxu0 0
        %2636 = vmatmul.mubr.bf16.gmra.mrb[0].mxu0 %v2497
        %v2637 = vpop.f32.mrb[0].mxu0
        %v2638 = vadd.f32 0.0, %v2637
        %v2639 = vpop.f32.mrb[0].mxu0
        %v2640 = vpop.f32.mrb[0].mxu0
        %v2641 = vadd.f32 0.0, %v2640
        %v2642 = vpop.f32.mrb[0].mxu0
        %2643 = vmatprep.mubr.bf16.mxu0 0
        %2644 = vmatmul.mubr.bf16.gmra.mrb[0].mxu0 %v2498
        %v2645 = vpop.f32.mrb[0].mxu0
        %v2646 = vadd.f32 0.0, %v2645
        %v2647 = vpop.f32.mrb[0].mxu0
        %v2648 = vpop.f32.mrb[0].mxu0
        %v2649 = vadd.f32 0.0, %v2648
        %v2650 = vpop.f32.mrb[0].mxu0
        %2651 = vmatprep.mubr.bf16.mxu0 0
        %2652 = vmatmul.mubr.bf16.gmra.mrb[0].mxu0 %v2499
        %v2653 = vpop.f32.mrb[0].mxu0
        %v2654 = vadd.f32 0.0, %v2653
        %v2655 = vpop.f32.mrb[0].mxu0
        %v2656 = vpop.f32.mrb[0].mxu0
        %v2657 = vadd.f32 0.0, %v2656
        %v2658 = vpop.f32.mrb[0].mxu0
        %2659 = vmatprep.mubr.bf16.mxu0 0
        %2660 = vmatmul.mubr.bf16.gmra.mrb[0].mxu0 %v2500
        %v2661 = vpop.f32.mrb[0].mxu0
        %v2662 = vadd.f32 0.0, %v2661
        %v2663 = vpop.f32.mrb[0].mxu0
        %v2664 = vpop.f32.mrb[0].mxu0
        %v2665 = vadd.f32 0.0, %v2664
        %v2666 = vpop.f32.mrb[0].mxu0
        %2667 = vmatprep.mubr.bf16.mxu0 0
        %2668 = vmatmul.mubr.bf16.gmra.mrb[0].mxu0 %v2501
        %v2669 = vpop.f32.mrb[0].mxu0
        %v2670 = vadd.f32 0.0, %v2669
        %v2671 = vpop.f32.mrb[0].mxu0
        %v2672 = vpop.f32.mrb[0].mxu0
        %v2673 = vadd.f32 0.0, %v2672
        %v2674 = vpop.f32.mrb[0].mxu0
        %2675 = vmatprep.mubr.bf16.mxu0 0
        %2676 = vmatmul.mubr.bf16.gmra.mrb[0].mxu0 %v2502
        %v2677 = vpop.f32.mrb[0].mxu0
        %v2678 = vadd.f32 0.0, %v2677
        %v2679 = vpop.f32.mrb[0].mxu0
        %v2680 = vpop.f32.mrb[0].mxu0
        %v2681 = vadd.f32 0.0, %v2680
        %v2682 = vpop.f32.mrb[0].mxu0
        %2683 = vmatprep.mubr.bf16.mxu0 0
        %2684 = vmatmul.mubr.bf16.gmra.mrb[0].mxu0 %v2503
        %v2685 = vpop.f32.mrb[0].mxu0
        %v2686 = vadd.f32 0.0, %v2685
        %v2687 = vpop.f32.mrb[0].mxu0
        %v2688 = vpop.f32.mrb[0].mxu0
        %v2689 = vadd.f32 0.0, %v2688
        %v2690 = vpop.f32.mrb[0].mxu0
        %2691 = vmatprep.mubr.bf16.mxu0 0
        %2692 = vmatmul.mubr.bf16.gmra.mrb[0].mxu0 %v2504
        %v2693 = vpop.f32.mrb[0].mxu0
        %v2694 = vadd.f32 0.0, %v2693
        %v2695 = vpop.f32.mrb[0].mxu0
        %v2696 = vpop.f32.mrb[0].mxu0
        %v2697 = vadd.f32 0.0, %v2696
        %v2698 = vpop.f32.mrb[0].mxu0
        %2699 = vmatprep.mubr.bf16.mxu0 0
        %2700 = vmatmul.mubr.bf16.gmra.mrb[0].mxu0 %v2505
        %v2701 = vpop.f32.mrb[0].mxu0
        %v2702 = vadd.f32 0.0, %v2701
        %v2703 = vpop.f32.mrb[0].mxu0
        %v2704 = vpop.f32.mrb[0].mxu0
        %v2705 = vadd.f32 0.0, %v2704
        %v2706 = vpop.f32.mrb[0].mxu0
        %2707 = vmatprep.mubr.bf16.mxu0 0
        %2708 = vmatmul.mubr.bf16.gmra.mrb[0].mxu0 %v2506
        %v2709 = vpop.f32.mrb[0].mxu0
        %v2710 = vadd.f32 0.0, %v2709
        %v2711 = vpop.f32.mrb[0].mxu0
        %v2712 = vpop.f32.mrb[0].mxu0
        %v2713 = vadd.f32 0.0, %v2712
        %v2714 = vpop.f32.mrb[0].mxu0
        %2715 = vmatprep.mubr.bf16.mxu0 0
        %2716 = vmatmul.mubr.bf16.gmra.mrb[0].mxu0 %v2507
        %v2717 = vpop.f32.mrb[0].mxu0
        %v2718 = vadd.f32 0.0, %v2717
        %v2719 = vpop.f32.mrb[0].mxu0
        %v2720 = vpop.f32.mrb[0].mxu0
        %v2721 = vadd.f32 0.0, %v2720
        %v2722 = vpop.f32.mrb[0].mxu0
        %2723 = vmatprep.mubr.bf16.mxu0 0
        %2724 = vmatmul.mubr.bf16.gmra.mrb[0].mxu0 %v2508
        %v2725 = vpop.f32.mrb[0].mxu0
        %v2726 = vadd.f32 0.0, %v2725
        %v2727 = vpop.f32.mrb[0].mxu0
        %v2728 = vpop.f32.mrb[0].mxu0
        %v2729 = vadd.f32 0.0, %v2728
        %v2730 = vpop.f32.mrb[0].mxu0
        %2731 = vmatprep.mubr.bf16.mxu0 0
        %2732 = vmatmul.mubr.bf16.gmra.mrb[0].mxu0 %v2509
        %v2733 = vpop.f32.mrb[0].mxu0
        %v2734 = vadd.f32 0.0, %v2733
        %v2735 = vpop.f32.mrb[0].mxu0
        %v2736 = vpop.f32.mrb[0].mxu0
        %v2737 = vadd.f32 0.0, %v2736
        %v2738 = vpop.f32.mrb[0].mxu0
        %2739 = vmatprep.mubr.bf16.mxu0 0
        %2740 = vmatmul.mubr.bf16.gmra.mrb[0].mxu0 %v2510
        %v2741 = vpop.f32.mrb[0].mxu0
        %v2742 = vadd.f32 0.0, %v2741
        %v2743 = vpop.f32.mrb[0].mxu0
        %v2744 = vpop.f32.mrb[0].mxu0
        %v2745 = vadd.f32 0.0, %v2744
        %v2746 = vpop.f32.mrb[0].mxu0
        %2747 = vmatprep.mubr.bf16.mxu0 0
        %2748 = vmatmul.mubr.bf16.gmra.mrb[0].mxu0 %v2511
        %v2749 = vpop.f32.mrb[0].mxu0
        %v2750 = vadd.f32 0.0, %v2749
        %v2751 = vpop.f32.mrb[0].mxu0
        %v2752 = vpop.f32.mrb[0].mxu0
        %v2753 = vadd.f32 0.0, %v2752
        %v2754 = vpop.f32.mrb[0].mxu0
        %2755 = vmatprep.mubr.bf16.mxu0 0
        %2756 = vmatmul.mubr.bf16.gmra.mrb[0].mxu0 %v2512
        %v2757 = vpop.f32.mrb[0].mxu0
        %v2758 = vadd.f32 0.0, %v2757
        %v2759 = vpop.f32.mrb[0].mxu0
        %v2760 = vpop.f32.mrb[0].mxu0
        %v2761 = vadd.f32 0.0, %v2760
        %v2762 = vpop.f32.mrb[0].mxu0
        %2763 = vmatprep.mubr.bf16.mxu0 0
        %2764 = vmatmul.mubr.bf16.gmra.mrb[0].mxu0 %v2513
        %v2765 = vpop.f32.mrb[0].mxu0
        %v2766 = vadd.f32 0.0, %v2765
        %v2767 = vpop.f32.mrb[0].mxu0
        %v2768 = vpop.f32.mrb[0].mxu0
        %v2769 = vadd.f32 0.0, %v2768
        %v2770 = vpop.f32.mrb[0].mxu0
        %2771 = vmatprep.mubr.bf16.mxu0 0
        %2772 = vmatmul.mubr.bf16.gmra.mrb[0].mxu0 %v2514
        %v2773 = vpop.f32.mrb[0].mxu0
        %v2774 = vadd.f32 0.0, %v2773
        %v2775 = vpop.f32.mrb[0].mxu0
        %v2776 = vpop.f32.mrb[0].mxu0
        %v2777 = vadd.f32 0.0, %v2776
        %v2778 = vpop.f32.mrb[0].mxu0
        %2779 = vmatprep.mubr.bf16.mxu0 0
        %2780 = vmatmul.mubr.bf16.gmra.mrb[0].mxu0 %v2515
        %v2781 = vpop.f32.mrb[0].mxu0
        %v2782 = vadd.f32 0.0, %v2781
        %v2783 = vpop.f32.mrb[0].mxu0
        %v2784 = vpop.f32.mrb[0].mxu0
        %v2785 = vadd.f32 0.0, %v2784
        %v2786 = vpop.f32.mrb[0].mxu0
        %2787 = vmatprep.mubr.bf16.mxu0 0
        %2788 = vmatmul.mubr.bf16.gmra.mrb[0].mxu0 %v2516
        %v2789 = vpop.f32.mrb[0].mxu0
        %v2790 = vadd.f32 0.0, %v2789
        %v2791 = vpop.f32.mrb[0].mxu0
        %v2792 = vpop.f32.mrb[0].mxu0
        %v2793 = vadd.f32 0.0, %v2792
        %v2794 = vpop.f32.mrb[0].mxu0
        %2795 = vmatprep.mubr.bf16.mxu0 0
        %2796 = vmatmul.mubr.bf16.gmra.mrb[0].mxu0 %v2517
        %v2797 = vpop.f32.mrb[0].mxu0
        %v2798 = vadd.f32 0.0, %v2797
        %v2799 = vpop.f32.mrb[0].mxu0
        %v2800 = vpop.f32.mrb[0].mxu0
        %v2801 = vadd.f32 0.0, %v2800
        %v2802 = vpop.f32.mrb[0].mxu0
        %2803 = vmatprep.mubr.bf16.mxu0 0
        %2804 = vmatmul.mubr.bf16.gmra.mrb[0].mxu0 %v2518
        %v2805 = vpop.f32.mrb[0].mxu0
        %v2806 = vadd.f32 0.0, %v2805
        %v2807 = vpop.f32.mrb[0].mxu0
        %v2808 = vpop.f32.mrb[0].mxu0
        %v2809 = vadd.f32 0.0, %v2808
        %v2810 = vpop.f32.mrb[0].mxu0
        %2811 = vmatprep.mubr.bf16.mxu0 0
        %2812 = vmatmul.mubr.bf16.gmra.mrb[0].mxu0 %v2519
        %v2813 = vpop.f32.mrb[0].mxu0
        %v2814 = vadd.f32 0.0, %v2813
        %v2815 = vpop.f32.mrb[0].mxu0
        %v2816 = vpop.f32.mrb[0].mxu0
        %v2817 = vadd.f32 0.0, %v2816
        %v2818 = vpop.f32.mrb[0].mxu0
        %2819 = vmatprep.mubr.bf16.mxu0 0
        %2820 = vmatmul.mubr.bf16.gmra.mrb[0].mxu0 %v2520
        %v2821 = vpop.f32.mrb[0].mxu0
        %v2822 = vadd.f32 0.0, %v2821
        %v2823 = vpop.f32.mrb[0].mxu0
        %v2824 = vpop.f32.mrb[0].mxu0
        %v2825 = vadd.f32 0.0, %v2824
        %v2826 = vpop.f32.mrb[0].mxu0
        %2827 = vmatprep.mubr.bf16.mxu0 0
        %2828 = vmatmul.mubr.bf16.gmra.mrb[0].mxu0 %v2521
        %v2829 = vpop.f32.mrb[0].mxu0
        %v2830 = vadd.f32 0.0, %v2829
        %v2831 = vpop.f32.mrb[0].mxu0
        %v2832 = vpop.f32.mrb[0].mxu0
        %v2833 = vadd.f32 0.0, %v2832
        %v2834 = vpop.f32.mrb[0].mxu0
        %2835 = vmatprep.mubr.bf16.mxu0 0
        %2836 = vmatmul.mubr.bf16.gmra.mrb[0].mxu0 %v2522
        %v2837 = vpop.f32.mrb[0].mxu0
        %v2838 = vadd.f32 0.0, %v2837
        %v2839 = vpop.f32.mrb[0].mxu0
        %v2840 = vpop.f32.mrb[0].mxu0
        %v2841 = vadd.f32 0.0, %v2840
        %v2842 = vpop.f32.mrb[0].mxu0
        %2843 = vmatprep.mubr.bf16.mxu0 0
        %2844 = vmatmul.mubr.bf16.gmra.mrb[0].mxu0 %v2523
        %v2845 = vpop.f32.mrb[0].mxu0
        %v2846 = vadd.f32 0.0, %v2845
        %v2847 = vpop.f32.mrb[0].mxu0
        %v2848 = vpop.f32.mrb[0].mxu0
        %v2849 = vadd.f32 0.0, %v2848
        %v2850 = vpop.f32.mrb[0].mxu0
        %2851 = vmatprep.mubr.bf16.mxu0 0
        %2852 = vmatmul.mubr.bf16.gmra.mrb[0].mxu0 %v2524
        %v2853 = vpop.f32.mrb[0].mxu0
        %v2854 = vadd.f32 0.0, %v2853
        %v2855 = vpop.f32.mrb[0].mxu0
        %v2856 = vpop.f32.mrb[0].mxu0
        %v2857 = vadd.f32 0.0, %v2856
        %v2858 = vpop.f32.mrb[0].mxu0
        %2859 = vmatprep.mubr.bf16.mxu0 0
        %2860 = vmatmul.mubr.bf16.gmra.mrb[0].mxu0 %v2525
        %v2861 = vpop.f32.mrb[0].mxu0
        %v2862 = vadd.f32 0.0, %v2861
        %v2863 = vpop.f32.mrb[0].mxu0
        %v2864 = vpop.f32.mrb[0].mxu0
        %v2865 = vadd.f32 0.0, %v2864
        %v2866 = vpop.f32.mrb[0].mxu0
        %2867 = vmatprep.mubr.bf16.mxu0 0
        %2868 = vmatmul.mubr.bf16.gmra.mrb[0].mxu0 %v2526
        %v2869 = vpop.f32.mrb[0].mxu0
        %v2870 = vadd.f32 0.0, %v2869
        %v2871 = vpop.f32.mrb[0].mxu0
        %v2872 = vpop.f32.mrb[0].mxu0
        %v2873 = vadd.f32 0.0, %v2872
        %v2874 = vpop.f32.mrb[0].mxu0
        %2875 = vmatprep.mubr.bf16.mxu0 0
        %2876 = vmatmul.mubr.bf16.gmra.mrb[0].mxu0 %v2527
        %v2877 = vpop.f32.mrb[0].mxu0
        %v2878 = vadd.f32 0.0, %v2877
        %v2879 = vpop.f32.mrb[0].mxu0
        %v2880 = vpop.f32.mrb[0].mxu0
        %v2881 = vadd.f32 0.0, %v2880
        %v2882 = vpop.f32.mrb[0].mxu0
        %2883 = vmatprep.mubr.bf16.mxu0 0
        %2884 = vmatmul.mubr.bf16.gmra.mrb[0].mxu0 %v2528
        %v2885 = vpop.f32.mrb[0].mxu0
        %v2886 = vadd.f32 0.0, %v2885
        %v2887 = vpop.f32.mrb[0].mxu0
        %v2888 = vpop.f32.mrb[0].mxu0
        %v2889 = vadd.f32 0.0, %v2888
        %v2890 = vpop.f32.mrb[0].mxu0
        %2891 = vmatprep.mubr.bf16.mxu0 0
        %2892 = vmatmul.mubr.bf16.gmra.mrb[0].mxu0 %v2529
        %v2893 = vpop.f32.mrb[0].mxu0
        %v2894 = vadd.f32 0.0, %v2893
        %v2895 = vpop.f32.mrb[0].mxu0
        %v2896 = vpop.f32.mrb[0].mxu0
        %v2897 = vadd.f32 0.0, %v2896
        %v2898 = vpop.f32.mrb[0].mxu0
        %2899 = vmatprep.mubr.bf16.mxu0 0
        %2900 = vmatmul.mubr.bf16.gmra.mrb[0].mxu0 %v2530
        %v2901 = vpop.f32.mrb[0].mxu0
        %v2902 = vadd.f32 0.0, %v2901
        %v2903 = vpop.f32.mrb[0].mxu0
        %v2904 = vpop.f32.mrb[0].mxu0
        %v2905 = vadd.f32 0.0, %v2904
        %v2906 = vpop.f32.mrb[0].mxu0
        %2907 = vmatprep.mubr.bf16.mxu0 0
        %2908 = vmatmul.mubr.bf16.gmra.mrb[0].mxu0 %v2531
        %v2909 = vpop.f32.mrb[0].mxu0
        %v2910 = vadd.f32 0.0, %v2909
        %v2911 = vpop.f32.mrb[0].mxu0
        %v2912 = vpop.f32.mrb[0].mxu0
        %v2913 = vadd.f32 0.0, %v2912
        %v2914 = vpop.f32.mrb[0].mxu0
        %2915 = vmatprep.mubr.bf16.mxu0 0
        %2916 = vmatmul.mubr.bf16.gmra.mrb[0].mxu0 %v2532
        %v2917 = vpop.f32.mrb[0].mxu0
        %v2918 = vadd.f32 0.0, %v2917
        %v2919 = vpop.f32.mrb[0].mxu0
        %v2920 = vpop.f32.mrb[0].mxu0
        %v2921 = vadd.f32 0.0, %v2920
        %v2922 = vpop.f32.mrb[0].mxu0
        %2923 = vmatprep.mubr.bf16.mxu0 0
        %2924 = vmatmul.mubr.bf16.gmra.mrb[0].mxu0 %v2533
        %v2925 = vpop.f32.mrb[0].mxu0
        %v2926 = vadd.f32 0.0, %v2925
        %v2927 = vpop.f32.mrb[0].mxu0
        %v2928 = vpop.f32.mrb[0].mxu0
        %v2929 = vadd.f32 0.0, %v2928
        %v2930 = vpop.f32.mrb[0].mxu0
        %2931 = vmatprep.mubr.bf16.mxu0 0
        %2932 = vmatmul.mubr.bf16.gmra.mrb[0].mxu0 %v2534
        %v2933 = vpop.f32.mrb[0].mxu0
        %v2934 = vadd.f32 0.0, %v2933
        %v2935 = vpop.f32.mrb[0].mxu0
        %v2936 = vpop.f32.mrb[0].mxu0
        %v2937 = vadd.f32 0.0, %v2936
        %v2938 = vpop.f32.mrb[0].mxu0
        %2939 = vmatprep.mubr.bf16.mxu0 0
        %2940 = vmatmul.mubr.bf16.gmra.mrb[0].mxu0 %v2535
        %v2941 = vpop.f32.mrb[0].mxu0
        %v2942 = vadd.f32 0.0, %v2941
        %v2943 = vpop.f32.mrb[0].mxu0
        %v2944 = vpop.f32.mrb[0].mxu0
        %v2945 = vadd.f32 0.0, %v2944
        %v2946 = vpop.f32.mrb[0].mxu0
        %2947 = vmatprep.mubr.bf16.mxu0 0
        %2948 = vmatmul.mubr.bf16.gmra.mrb[0].mxu0 %v2536
        %v2949 = vpop.f32.mrb[0].mxu0
        %v2950 = vadd.f32 0.0, %v2949
        %v2951 = vpop.f32.mrb[0].mxu0
        %v2952 = vpop.f32.mrb[0].mxu0
        %v2953 = vadd.f32 0.0, %v2952
        %v2954 = vpop.f32.mrb[0].mxu0
        %2955 = vmatprep.mubr.bf16.mxu0 0
        %2956 = vmatmul.mubr.bf16.gmra.mrb[0].mxu0 %v2537
        %v2957 = vpop.f32.mrb[0].mxu0
        %v2958 = vadd.f32 0.0, %v2957
        %v2959 = vpop.f32.mrb[0].mxu0
        %v2960 = vpop.f32.mrb[0].mxu0
        %v2961 = vadd.f32 0.0, %v2960
        %v2962 = vpop.f32.mrb[0].mxu0
        %2963 = vmatprep.mubr.bf16.mxu0 0
        %2964 = vmatmul.mubr.bf16.gmra.mrb[0].mxu0 %v2538
        %v2965 = vpop.f32.mrb[0].mxu0
        %v2966 = vadd.f32 0.0, %v2965
        %v2967 = vpop.f32.mrb[0].mxu0
        %v2968 = vpop.f32.mrb[0].mxu0
        %v2969 = vadd.f32 0.0, %v2968
        %v2970 = vpop.f32.mrb[0].mxu0
        %2971 = vmatprep.mubr.bf16.mxu0 0
        %2972 = vmatmul.mubr.bf16.gmra.mrb[0].mxu0 %v2539
        %v2973 = vpop.f32.mrb[0].mxu0
        %v2974 = vadd.f32 0.0, %v2973
        %v2975 = vpop.f32.mrb[0].mxu0
        %v2976 = vpop.f32.mrb[0].mxu0
        %v2977 = vadd.f32 0.0, %v2976
        %v2978 = vpop.f32.mrb[0].mxu0
        %2979 = vmatprep.mubr.bf16.mxu0 0
        %2980 = vmatmul.mubr.bf16.gmra.mrb[0].mxu0 %v2540
        %v2981 = vpop.f32.mrb[0].mxu0
        %v2982 = vadd.f32 0.0, %v2981
        %v2983 = vpop.f32.mrb[0].mxu0
        %v2984 = vpop.f32.mrb[0].mxu0
        %v2985 = vadd.f32 0.0, %v2984
        %v2986 = vpop.f32.mrb[0].mxu0
        %2987 = vmatprep.mubr.bf16.mxu0 0
        %2988 = vmatmul.mubr.bf16.gmra.mrb[0].mxu0 %v2541
        %v2989 = vpop.f32.mrb[0].mxu0
        %v2990 = vadd.f32 0.0, %v2989
        %v2991 = vpop.f32.mrb[0].mxu0
        %v2992 = vpop.f32.mrb[0].mxu0
        %v2993 = vadd.f32 0.0, %v2992
        %v2994 = vpop.f32.mrb[0].mxu0
        %2995 = vmatprep.mubr.bf16.mxu0 0
        %2996 = vmatmul.mubr.bf16.gmra.mrb[0].mxu0 %v2542
        %v2997 = vpop.f32.mrb[0].mxu0
        %v2998 = vadd.f32 0.0, %v2997
        %v2999 = vpop.f32.mrb[0].mxu0
        %v3000 = vpop.f32.mrb[0].mxu0
        %v3001 = vadd.f32 0.0, %v3000
        %v3002 = vpop.f32.mrb[0].mxu0
        %3003 = vmatprep.mubr.bf16.mxu0 0
        %3004 = vmatmul.mubr.bf16.gmra.mrb[0].mxu0 %v2543
        %v3005 = vpop.f32.mrb[0].mxu0
        %v3006 = vadd.f32 0.0, %v3005
        %v3007 = vpop.f32.mrb[0].mxu0
        %v3008 = vpop.f32.mrb[0].mxu0
        %v3009 = vadd.f32 0.0, %v3008
        %v3010 = vpop.f32.mrb[0].mxu0
        %3011 = vmatprep.mubr.bf16.mxu0 0
        %3012 = vmatmul.mubr.bf16.gmra.mrb[0].mxu0 %v2544
        %v3013 = vpop.f32.mrb[0].mxu0
        %v3014 = vadd.f32 0.0, %v3013
        %v3015 = vpop.f32.mrb[0].mxu0
        %v3016 = vpop.f32.mrb[0].mxu0
        %v3017 = vadd.f32 0.0, %v3016
        %v3018 = vpop.f32.mrb[0].mxu0
        %3019 = vmatprep.mubr.bf16.mxu0 0
        %3020 = vmatmul.mubr.bf16.gmra.mrb[0].mxu0 %v2545
        %v3021 = vpop.f32.mrb[0].mxu0
        %v3022 = vadd.f32 0.0, %v3021
        %v3023 = vpop.f32.mrb[0].mxu0
        %v3024 = vpop.f32.mrb[0].mxu0
        %v3025 = vadd.f32 0.0, %v3024
        %v3026 = vpop.f32.mrb[0].mxu0
        %3027 = vmatprep.mubr.bf16.mxu0 0
        %3028 = vmatmul.mubr.bf16.gmra.mrb[0].mxu0 %v2546
        %v3029 = vpop.f32.mrb[0].mxu0
        %v3030 = vadd.f32 0.0, %v3029
        %v3031 = vpop.f32.mrb[0].mxu0
        %v3032 = vpop.f32.mrb[0].mxu0
        %v3033 = vadd.f32 0.0, %v3032
        %v3034 = vpop.f32.mrb[0].mxu0
        %3035 = vmatprep.mubr.bf16.mxu0 0
        %3036 = vmatmul.mubr.bf16.gmra.mrb[0].mxu0 %v2547
        %v3037 = vpop.f32.mrb[0].mxu0
        %v3038 = vadd.f32 0.0, %v3037
        %v3039 = vpop.f32.mrb[0].mxu0
        %v3040 = vpop.f32.mrb[0].mxu0
        %v3041 = vadd.f32 0.0, %v3040
        %v3042 = vpop.f32.mrb[0].mxu0
        %3043 = vmatprep.mubr.bf16.mxu0 0
        %3044 = vmatmul.mubr.bf16.gmra.mrb[0].mxu0 %v2548
        %v3045 = vpop.f32.mrb[0].mxu0
        %v3046 = vadd.f32 0.0, %v3045
        %v3047 = vpop.f32.mrb[0].mxu0
        %v3048 = vpop.f32.mrb[0].mxu0
        %v3049 = vadd.f32 0.0, %v3048
        %v3050 = vpop.f32.mrb[0].mxu0
        %3051 = vmatprep.mubr.bf16.mxu0 0
        %3052 = vmatmul.mubr.bf16.gmra.mrb[0].mxu0 %v2549
        %v3053 = vpop.f32.mrb[0].mxu0
        %v3054 = vadd.f32 0.0, %v3053
        %v3055 = vpop.f32.mrb[0].mxu0
        %v3056 = vpop.f32.mrb[0].mxu0
        %v3057 = vadd.f32 0.0, %v3056
        %v3058 = vpop.f32.mrb[0].mxu0
        %3059 = vmatprep.mubr.bf16.mxu0 0
        %3060 = vmatmul.mubr.bf16.gmra.mrb[0].mxu0 %v2550
        %v3061 = vpop.f32.mrb[0].mxu0
        %v3062 = vadd.f32 0.0, %v3061
        %v3063 = vpop.f32.mrb[0].mxu0
        %v3064 = vpop.f32.mrb[0].mxu0
        %v3065 = vadd.f32 0.0, %v3064
        %v3066 = vpop.f32.mrb[0].mxu0
        %3067 = vmatprep.mubr.bf16.mxu0 0
        %3068 = vmatmul.mubr.bf16.gmra.mrb[0].mxu0 %v2551
        %v3069 = vpop.f32.mrb[0].mxu0
        %v3070 = vadd.f32 0.0, %v3069
        %v3071 = vpop.f32.mrb[0].mxu0
        %v3072 = vpop.f32.mrb[0].mxu0
        %v3073 = vadd.f32 0.0, %v3072
        %v3074 = vpop.f32.mrb[0].mxu0
        %3075 = vmatprep.mubr.bf16.mxu0 0
        %3076 = vmatmul.mubr.bf16.gmra.mrb[0].mxu0 %v2552
        %v3077 = vpop.f32.mrb[0].mxu0
        %v3078 = vadd.f32 0.0, %v3077
        %v3079 = vpop.f32.mrb[0].mxu0
        %v3080 = vpop.f32.mrb[0].mxu0
        %v3081 = vadd.f32 0.0, %v3080
        %v3082 = vpop.f32.mrb[0].mxu0
        %3083 = vmatprep.mubr.bf16.mxu0 0
        %3084 = vmatmul.mubr.bf16.gmra.mrb[0].mxu0 %v2553
        %v3085 = vpop.f32.mrb[0].mxu0
        %v3086 = vadd.f32 0.0, %v3085
        %v3087 = vpop.f32.mrb[0].mxu0
        %v3088 = vpop.f32.mrb[0].mxu0
        %v3089 = vadd.f32 0.0, %v3088
        %v3090 = vpop.f32.mrb[0].mxu0
        %3091 = vmatprep.mubr.bf16.mxu0 0
        %3092 = vmatmul.mubr.bf16.gmra.mrb[0].mxu0 %v2554
        %v3093 = vpop.f32.mrb[0].mxu0
        %v3094 = vadd.f32 0.0, %v3093
        %v3095 = vpop.f32.mrb[0].mxu0
        %v3096 = vpop.f32.mrb[0].mxu0
        %v3097 = vadd.f32 0.0, %v3096
        %v3098 = vpop.f32.mrb[0].mxu0
        %3099 = vdwg.mxu0
        %v3100 = vrcp.pop %v2236
        %v3101 = vrcp.pop %v2238
        %v3102 = vrcp.pop %v2240
        %v3103 = vrcp.pop %v2242
        %v3104 = vrcp.pop %v2244
        %v3105 = vrcp.pop %v2246
        %v3106 = vrcp.pop %v2248
        %v3107 = vrcp.pop %v2250
        %v3108 = vrcp.pop %v2252
        %v3109 = vrcp.pop %v2254
        %v3110 = vrcp.pop %v2256
        %v3111 = vrcp.pop %v2258
        %v3112 = vrcp.pop %v2260
        %v3113 = vrcp.pop %v2262
        %v3114 = vrcp.pop %v2264
        %v3115 = vrcp.pop %v2266
        %v3116 = vrcp.pop %v2268
        %v3117 = vrcp.pop %v2270
        %v3118 = vrcp.pop %v2272
        %v3119 = vrcp.pop %v2274
        %v3120 = vrcp.pop %v2276
        %v3121 = vrcp.pop %v2278
        %v3122 = vrcp.pop %v2280
        %v3123 = vrcp.pop %v2282
        %v3124 = vrcp.pop %v2284
        %v3125 = vrcp.pop %v2286
        %v3126 = vrcp.pop %v2288
        %v3127 = vrcp.pop %v2290
        %v3128 = vrcp.pop %v2292
        %v3129 = vrcp.pop %v2294
        %v3130 = vrcp.pop %v2296
        %v3131 = vrcp.pop %v2298
        %v3132 = vrcp.pop %v2300
        %v3133 = vrcp.pop %v2302
        %v3134 = vrcp.pop %v2304
        %v3135 = vrcp.pop %v2306
        %v3136 = vrcp.pop %v2308
        %v3137 = vrcp.pop %v2310
        %v3138 = vrcp.pop %v2312
        %v3139 = vrcp.pop %v2314
        %v3140 = vrcp.pop %v2316
        %v3141 = vrcp.pop %v2318
        %v3142 = vrcp.pop %v2320
        %v3143 = vrcp.pop %v2322
        %v3144 = vrcp.pop %v2324
        %v3145 = vrcp.pop %v2326
        %v3146 = vrcp.pop %v2328
        %v3147 = vrcp.pop %v2330
        %v3148 = vrcp.pop %v2332
        %v3149 = vrcp.pop %v2334
        %v3150 = vrcp.pop %v2336
        %v3151 = vrcp.pop %v2338
        %v3152 = vrcp.pop %v2340
        %v3153 = vrcp.pop %v2342
        %v3154 = vrcp.pop %v2344
        %v3155 = vrcp.pop %v2346
        %v3156 = vrcp.pop %v2348
        %v3157 = vrcp.pop %v2350
        %v3158 = vrcp.pop %v2352
        %v3159 = vrcp.pop %v2354
        %v3160 = vrcp.pop %v2356
        %v3161 = vrcp.pop %v2358
        %v3162 = vrcp.pop %v2360
        %v3163 = vrcp.pop %v2362
        %v3164 = vrcp.pop %v2364
        %v3165 = vrcp.pop %v2366
        %v3166 = vrcp.pop %v2368
        %v3167 = vrcp.pop %v2370
        %v3168 = vrcp.pop %v2372
        %v3169 = vrcp.pop %v2374
        %v3170 = vrcp.pop %v2376
        %v3171 = vrcp.pop %v2378
        %v3172 = vrcp.pop %v2380
        %v3173 = vrcp.pop %v2382
        %v3174 = vrcp.pop %v2384
        %v3175 = vrcp.pop %v2386
        %v3176 = vrcp.pop %v2388
        %v3177 = vrcp.pop %v2390
        %v3178 = vrcp.pop %v2392
        %v3179 = vrcp.pop %v2394
        %v3180 = vrcp.pop %v2396
        %v3181 = vrcp.pop %v2398
        %v3182 = vrcp.pop %v2400
        %v3183 = vrcp.pop %v2402
        %v3184 = vrcp.pop %v2404
        %v3185 = vrcp.pop %v2406
        %v3186 = vrcp.pop %v2408
        %v3187 = vrcp.pop %v2410
        %v3188 = vrcp.pop %v2412
        %v3189 = vrcp.pop %v2414
        %v3190 = vrcp.pop %v2416
        %v3191 = vrcp.pop %v2418
        %v3192 = vrcp.pop %v2420
        %v3193 = vrcp.pop %v2422
        %v3194 = vrcp.pop %v2424
        %v3195 = vrcp.pop %v2426
        %v3196 = vrcp.pop %v2428
        %v3197 = vrcp.pop %v2430
        %v3198 = vrcp.pop %v2432
        %v3199 = vrcp.pop %v2434
        %v3200 = vrcp.pop %v2436
        %v3201 = vrcp.pop %v2438
        %v3202 = vrcp.pop %v2440
        %v3203 = vrcp.pop %v2442
        %v3204 = vrcp.pop %v2444
        %v3205 = vrcp.pop %v2446
        %v3206 = vrcp.pop %v2448
        %v3207 = vrcp.pop %v2450
        %v3208 = vrcp.pop %v2452
        %v3209 = vrcp.pop %v2454
        %v3210 = vrcp.pop %v2456
        %v3211 = vrcp.pop %v2458
        %v3212 = vrcp.pop %v2460
        %v3213 = vrcp.pop %v2462
        %v3214 = vrcp.pop %v2464
        %v3215 = vrcp.pop %v2466
        %v3216 = vrcp.pop %v2468
        %v3217 = vrcp.pop %v2470
        %v3218 = vrcp.pop %v2472
        %v3219 = vrcp.pop %v2474
        %v3220 = vrcp.pop %v2476
        %v3221 = vrcp.pop %v2478
        %v3222 = vrcp.pop %v2480
        %v3223 = vrcp.pop %v2482
        %v3224 = vrcp.pop %v2484
        %v3225 = vrcp.pop %v2486
        %v3226 = vrcp.pop %v2488
        %v3227 = vrcp.pop %v2490
        %v3228 = vmul.f32 %v2590, %v3100
        %v3229 = vmul.f32 %v2593, %v3101
        %v3230 = vmul.f32 %v2598, %v3102
        %v3231 = vmul.f32 %v2601, %v3103
        %v3232 = vmul.f32 %v2606, %v3104
        %v3233 = vmul.f32 %v2609, %v3105
        %v3234 = vmul.f32 %v2614, %v3106
        %v3235 = vmul.f32 %v2617, %v3107
        %v3236 = vmul.f32 %v2622, %v3108
        %v3237 = vmul.f32 %v2625, %v3109
        %v3238 = vmul.f32 %v2630, %v3110
        %v3239 = vmul.f32 %v2633, %v3111
        %v3240 = vmul.f32 %v2638, %v3112
        %v3241 = vmul.f32 %v2641, %v3113
        %v3242 = vmul.f32 %v2646, %v3114
        %v3243 = vmul.f32 %v2649, %v3115
        %v3244 = vmul.f32 %v2654, %v3116
        %v3245 = vmul.f32 %v2657, %v3117
        %v3246 = vmul.f32 %v2662, %v3118
        %v3247 = vmul.f32 %v2665, %v3119
        %v3248 = vmul.f32 %v2670, %v3120
        %v3249 = vmul.f32 %v2673, %v3121
        %v3250 = vmul.f32 %v2678, %v3122
        %v3251 = vmul.f32 %v2681, %v3123
        %v3252 = vmul.f32 %v2686, %v3124
        %v3253 = vmul.f32 %v2689, %v3125
        %v3254 = vmul.f32 %v2694, %v3126
        %v3255 = vmul.f32 %v2697, %v3127
        %v3256 = vmul.f32 %v2702, %v3128
        %v3257 = vmul.f32 %v2705, %v3129
        %v3258 = vmul.f32 %v2710, %v3130
        %v3259 = vmul.f32 %v2713, %v3131
        %v3260 = vmul.f32 %v2718, %v3132
        %v3261 = vmul.f32 %v2721, %v3133
        %v3262 = vmul.f32 %v2726, %v3134
        %v3263 = vmul.f32 %v2729, %v3135
        %v3264 = vmul.f32 %v2734, %v3136
        %v3265 = vmul.f32 %v2737, %v3137
        %v3266 = vmul.f32 %v2742, %v3138
        %v3267 = vmul.f32 %v2745, %v3139
        %v3268 = vmul.f32 %v2750, %v3140
        %v3269 = vmul.f32 %v2753, %v3141
        %v3270 = vmul.f32 %v2758, %v3142
        %v3271 = vmul.f32 %v2761, %v3143
        %v3272 = vmul.f32 %v2766, %v3144
        %v3273 = vmul.f32 %v2769, %v3145
        %v3274 = vmul.f32 %v2774, %v3146
        %v3275 = vmul.f32 %v2777, %v3147
        %v3276 = vmul.f32 %v2782, %v3148
        %v3277 = vmul.f32 %v2785, %v3149
        %v3278 = vmul.f32 %v2790, %v3150
        %v3279 = vmul.f32 %v2793, %v3151
        %v3280 = vmul.f32 %v2798, %v3152
        %v3281 = vmul.f32 %v2801, %v3153
        %v3282 = vmul.f32 %v2806, %v3154
        %v3283 = vmul.f32 %v2809, %v3155
        %v3284 = vmul.f32 %v2814, %v3156
        %v3285 = vmul.f32 %v2817, %v3157
        %v3286 = vmul.f32 %v2822, %v3158
        %v3287 = vmul.f32 %v2825, %v3159
        %v3288 = vmul.f32 %v2830, %v3160
        %v3289 = vmul.f32 %v2833, %v3161
        %v3290 = vmul.f32 %v2838, %v3162
        %v3291 = vmul.f32 %v2841, %v3163
        %v3292 = vmul.f32 %v2846, %v3164
        %v3293 = vmul.f32 %v2849, %v3165
        %v3294 = vmul.f32 %v2854, %v3166
        %v3295 = vmul.f32 %v2857, %v3167
        %v3296 = vmul.f32 %v2862, %v3168
        %v3297 = vmul.f32 %v2865, %v3169
        %v3298 = vmul.f32 %v2870, %v3170
        %v3299 = vmul.f32 %v2873, %v3171
        %v3300 = vmul.f32 %v2878, %v3172
        %v3301 = vmul.f32 %v2881, %v3173
        %v3302 = vmul.f32 %v2886, %v3174
        %v3303 = vmul.f32 %v2889, %v3175
        %v3304 = vmul.f32 %v2894, %v3176
        %v3305 = vmul.f32 %v2897, %v3177
        %v3306 = vmul.f32 %v2902, %v3178
        %v3307 = vmul.f32 %v2905, %v3179
        %v3308 = vmul.f32 %v2910, %v3180
        %v3309 = vmul.f32 %v2913, %v3181
        %v3310 = vmul.f32 %v2918, %v3182
        %v3311 = vmul.f32 %v2921, %v3183
        %v3312 = vmul.f32 %v2926, %v3184
        %v3313 = vmul.f32 %v2929, %v3185
        %v3314 = vmul.f32 %v2934, %v3186
        %v3315 = vmul.f32 %v2937, %v3187
        %v3316 = vmul.f32 %v2942, %v3188
        %v3317 = vmul.f32 %v2945, %v3189
        %v3318 = vmul.f32 %v2950, %v3190
        %v3319 = vmul.f32 %v2953, %v3191
        %v3320 = vmul.f32 %v2958, %v3192
        %v3321 = vmul.f32 %v2961, %v3193
        %v3322 = vmul.f32 %v2966, %v3194
        %v3323 = vmul.f32 %v2969, %v3195
        %v3324 = vmul.f32 %v2974, %v3196
        %v3325 = vmul.f32 %v2977, %v3197
        %v3326 = vmul.f32 %v2982, %v3198
        %v3327 = vmul.f32 %v2985, %v3199
        %v3328 = vmul.f32 %v2990, %v3200
        %v3329 = vmul.f32 %v2993, %v3201
        %v3330 = vmul.f32 %v2998, %v3202
        %v3331 = vmul.f32 %v3001, %v3203
        %v3332 = vmul.f32 %v3006, %v3204
        %v3333 = vmul.f32 %v3009, %v3205
        %v3334 = vmul.f32 %v3014, %v3206
        %v3335 = vmul.f32 %v3017, %v3207
        %v3336 = vmul.f32 %v3022, %v3208
        %v3337 = vmul.f32 %v3025, %v3209
        %v3338 = vmul.f32 %v3030, %v3210
        %v3339 = vmul.f32 %v3033, %v3211
        %v3340 = vmul.f32 %v3038, %v3212
        %v3341 = vmul.f32 %v3041, %v3213
        %v3342 = vmul.f32 %v3046, %v3214
        %v3343 = vmul.f32 %v3049, %v3215
        %v3344 = vmul.f32 %v3054, %v3216
        %v3345 = vmul.f32 %v3057, %v3217
        %v3346 = vmul.f32 %v3062, %v3218
        %v3347 = vmul.f32 %v3065, %v3219
        %v3348 = vmul.f32 %v3070, %v3220
        %v3349 = vmul.f32 %v3073, %v3221
        %v3350 = vmul.f32 %v3078, %v3222
        %v3351 = vmul.f32 %v3081, %v3223
        %v3352 = vmul.f32 %v3086, %v3224
        %v3353 = vmul.f32 %v3089, %v3225
        %v3354 = vmul.f32 %v3094, %v3226
        %v3355 = vmul.f32 %v3097, %v3227
        %v3356 = vmul.f32 %v3228, %v821
        %v3357 = vmul.f32 %v3229, %v821
        %v3358 = vmul.f32 %v3230, %v821
        %v3359 = vmul.f32 %v3231, %v821
        %v3360 = vmul.f32 %v3232, %v821
        %v3361 = vmul.f32 %v3233, %v821
        %v3362 = vmul.f32 %v3234, %v821
        %v3363 = vmul.f32 %v3235, %v821
        %v3364 = vmul.f32 %v3236, %v821
        %v3365 = vmul.f32 %v3237, %v821
        %v3366 = vmul.f32 %v3238, %v821
        %v3367 = vmul.f32 %v3239, %v821
        %v3368 = vmul.f32 %v3240, %v821
        %v3369 = vmul.f32 %v3241, %v821
        %v3370 = vmul.f32 %v3242, %v821
        %v3371 = vmul.f32 %v3243, %v821
        %v3372 = vmul.f32 %v3244, %v825
        %v3373 = vmul.f32 %v3245, %v825
        %v3374 = vmul.f32 %v3246, %v825
        %v3375 = vmul.f32 %v3247, %v825
        %v3376 = vmul.f32 %v3248, %v825
        %v3377 = vmul.f32 %v3249, %v825
        %v3378 = vmul.f32 %v3250, %v825
        %v3379 = vmul.f32 %v3251, %v825
        %v3380 = vmul.f32 %v3252, %v825
        %v3381 = vmul.f32 %v3253, %v825
        %v3382 = vmul.f32 %v3254, %v825
        %v3383 = vmul.f32 %v3255, %v825
        %v3384 = vmul.f32 %v3256, %v825
        %v3385 = vmul.f32 %v3257, %v825
        %v3386 = vmul.f32 %v3258, %v825
        %v3387 = vmul.f32 %v3259, %v825
        %v3388 = vmul.f32 %v3260, %v829
        %v3389 = vmul.f32 %v3261, %v829
        %v3390 = vmul.f32 %v3262, %v829
        %v3391 = vmul.f32 %v3263, %v829
        %v3392 = vmul.f32 %v3264, %v829
        %v3393 = vmul.f32 %v3265, %v829
        %v3394 = vmul.f32 %v3266, %v829
        %v3395 = vmul.f32 %v3267, %v829
        %v3396 = vmul.f32 %v3268, %v829
        %v3397 = vmul.f32 %v3269, %v829
        %v3398 = vmul.f32 %v3270, %v829
        %v3399 = vmul.f32 %v3271, %v829
        %v3400 = vmul.f32 %v3272, %v829
        %v3401 = vmul.f32 %v3273, %v829
        %v3402 = vmul.f32 %v3274, %v829
        %v3403 = vmul.f32 %v3275, %v829
        %v3404 = vmul.f32 %v3276, %v833
        %v3405 = vmul.f32 %v3277, %v833
        %v3406 = vmul.f32 %v3278, %v833
        %v3407 = vmul.f32 %v3279, %v833
        %v3408 = vmul.f32 %v3280, %v833
        %v3409 = vmul.f32 %v3281, %v833
        %v3410 = vmul.f32 %v3282, %v833
        %v3411 = vmul.f32 %v3283, %v833
        %v3412 = vmul.f32 %v3284, %v833
        %v3413 = vmul.f32 %v3285, %v833
        %v3414 = vmul.f32 %v3286, %v833
        %v3415 = vmul.f32 %v3287, %v833
        %v3416 = vmul.f32 %v3288, %v833
        %v3417 = vmul.f32 %v3289, %v833
        %v3418 = vmul.f32 %v3290, %v833
        %v3419 = vmul.f32 %v3291, %v833
        %v3420 = vmul.f32 %v3292, %v837
        %v3421 = vmul.f32 %v3293, %v837
        %v3422 = vmul.f32 %v3294, %v837
        %v3423 = vmul.f32 %v3295, %v837
        %v3424 = vmul.f32 %v3296, %v837
        %v3425 = vmul.f32 %v3297, %v837
        %v3426 = vmul.f32 %v3298, %v837
        %v3427 = vmul.f32 %v3299, %v837
        %v3428 = vmul.f32 %v3300, %v837
        %v3429 = vmul.f32 %v3301, %v837
        %v3430 = vmul.f32 %v3302, %v837
        %v3431 = vmul.f32 %v3303, %v837
        %v3432 = vmul.f32 %v3304, %v837
        %v3433 = vmul.f32 %v3305, %v837
        %v3434 = vmul.f32 %v3306, %v837
        %v3435 = vmul.f32 %v3307, %v837
        %v3436 = vmul.f32 %v3308, %v841
        %v3437 = vmul.f32 %v3309, %v841
        %v3438 = vmul.f32 %v3310, %v841
        %v3439 = vmul.f32 %v3311, %v841
        %v3440 = vmul.f32 %v3312, %v841
        %v3441 = vmul.f32 %v3313, %v841
        %v3442 = vmul.f32 %v3314, %v841
        %v3443 = vmul.f32 %v3315, %v841
        %v3444 = vmul.f32 %v3316, %v841
        %v3445 = vmul.f32 %v3317, %v841
        %v3446 = vmul.f32 %v3318, %v841
        %v3447 = vmul.f32 %v3319, %v841
        %v3448 = vmul.f32 %v3320, %v841
        %v3449 = vmul.f32 %v3321, %v841
        %v3450 = vmul.f32 %v3322, %v841
        %v3451 = vmul.f32 %v3323, %v841
        %v3452 = vmul.f32 %v3324, %v845
        %v3453 = vmul.f32 %v3325, %v845
        %v3454 = vmul.f32 %v3326, %v845
        %v3455 = vmul.f32 %v3327, %v845
        %v3456 = vmul.f32 %v3328, %v845
        %v3457 = vmul.f32 %v3329, %v845
        %v3458 = vmul.f32 %v3330, %v845
        %v3459 = vmul.f32 %v3331, %v845
        %v3460 = vmul.f32 %v3332, %v845
        %v3461 = vmul.f32 %v3333, %v845
        %v3462 = vmul.f32 %v3334, %v845
        %v3463 = vmul.f32 %v3335, %v845
        %v3464 = vmul.f32 %v3336, %v845
        %v3465 = vmul.f32 %v3337, %v845
        %v3466 = vmul.f32 %v3338, %v845
        %v3467 = vmul.f32 %v3339, %v845
        %v3468 = vmul.f32 %v3340, %v849
        %v3469 = vmul.f32 %v3341, %v849
        %v3470 = vmul.f32 %v3342, %v849
        %v3471 = vmul.f32 %v3343, %v849
        %v3472 = vmul.f32 %v3344, %v849
        %v3473 = vmul.f32 %v3345, %v849
        %v3474 = vmul.f32 %v3346, %v849
        %v3475 = vmul.f32 %v3347, %v849
        %v3476 = vmul.f32 %v3348, %v849
        %v3477 = vmul.f32 %v3349, %v849
        %v3478 = vmul.f32 %v3350, %v849
        %v3479 = vmul.f32 %v3351, %v849
        %v3480 = vmul.f32 %v3352, %v849
        %v3481 = vmul.f32 %v3353, %v849
        %v3482 = vmul.f32 %v3354, %v849
        %v3483 = vmul.f32 %v3355, %v849
        %v3484 = vadd.f32 %v3356, %v3372
        %v3485 = vadd.f32 %v3484, %v3388
        %v3486 = vadd.f32 %v3485, %v3404
        %v3487 = vadd.f32 %v3486, %v3420
        %v3488 = vadd.f32 %v3487, %v3436
        %v3489 = vadd.f32 %v3488, %v3452
        %v3490 = vadd.f32 %v3489, %v3468
        %v3491 = vadd.f32 %v3357, %v3373
        %v3492 = vadd.f32 %v3491, %v3389
        %v3493 = vadd.f32 %v3492, %v3405
        %v3494 = vadd.f32 %v3493, %v3421
        %v3495 = vadd.f32 %v3494, %v3437
        %v3496 = vadd.f32 %v3495, %v3453
        %v3497 = vadd.f32 %v3496, %v3469
        %v3498 = vadd.f32 %v3358, %v3374
        %v3499 = vadd.f32 %v3498, %v3390
        %v3500 = vadd.f32 %v3499, %v3406
        %v3501 = vadd.f32 %v3500, %v3422
        %v3502 = vadd.f32 %v3501, %v3438
        %v3503 = vadd.f32 %v3502, %v3454
        %v3504 = vadd.f32 %v3503, %v3470
        %v3505 = vadd.f32 %v3359, %v3375
        %v3506 = vadd.f32 %v3505, %v3391
        %v3507 = vadd.f32 %v3506, %v3407
        %v3508 = vadd.f32 %v3507, %v3423
        %v3509 = vadd.f32 %v3508, %v3439
        %v3510 = vadd.f32 %v3509, %v3455
        %v3511 = vadd.f32 %v3510, %v3471
        %v3512 = vadd.f32 %v3360, %v3376
        %v3513 = vadd.f32 %v3512, %v3392
        %v3514 = vadd.f32 %v3513, %v3408
        %v3515 = vadd.f32 %v3514, %v3424
        %v3516 = vadd.f32 %v3515, %v3440
        %v3517 = vadd.f32 %v3516, %v3456
        %v3518 = vadd.f32 %v3517, %v3472
        %v3519 = vadd.f32 %v3361, %v3377
        %v3520 = vadd.f32 %v3519, %v3393
        %v3521 = vadd.f32 %v3520, %v3409
        %v3522 = vadd.f32 %v3521, %v3425
        %v3523 = vadd.f32 %v3522, %v3441
        %v3524 = vadd.f32 %v3523, %v3457
        %v3525 = vadd.f32 %v3524, %v3473
        %v3526 = vadd.f32 %v3362, %v3378
        %v3527 = vadd.f32 %v3526, %v3394
        %v3528 = vadd.f32 %v3527, %v3410
        %v3529 = vadd.f32 %v3528, %v3426
        %v3530 = vadd.f32 %v3529, %v3442
        %v3531 = vadd.f32 %v3530, %v3458
        %v3532 = vadd.f32 %v3531, %v3474
        %v3533 = vadd.f32 %v3363, %v3379
        %v3534 = vadd.f32 %v3533, %v3395
        %v3535 = vadd.f32 %v3534, %v3411
        %v3536 = vadd.f32 %v3535, %v3427
        %v3537 = vadd.f32 %v3536, %v3443
        %v3538 = vadd.f32 %v3537, %v3459
        %v3539 = vadd.f32 %v3538, %v3475
        %v3540 = vadd.f32 %v3364, %v3380
        %v3541 = vadd.f32 %v3540, %v3396
        %v3542 = vadd.f32 %v3541, %v3412
        %v3543 = vadd.f32 %v3542, %v3428
        %v3544 = vadd.f32 %v3543, %v3444
        %v3545 = vadd.f32 %v3544, %v3460
        %v3546 = vadd.f32 %v3545, %v3476
        %v3547 = vadd.f32 %v3365, %v3381
        %v3548 = vadd.f32 %v3547, %v3397
        %v3549 = vadd.f32 %v3548, %v3413
        %v3550 = vadd.f32 %v3549, %v3429
        %v3551 = vadd.f32 %v3550, %v3445
        %v3552 = vadd.f32 %v3551, %v3461
        %v3553 = vadd.f32 %v3552, %v3477
        %v3554 = vadd.f32 %v3366, %v3382
        %v3555 = vadd.f32 %v3554, %v3398
        %v3556 = vadd.f32 %v3555, %v3414
        %v3557 = vadd.f32 %v3556, %v3430
        %v3558 = vadd.f32 %v3557, %v3446
        %v3559 = vadd.f32 %v3558, %v3462
        %v3560 = vadd.f32 %v3559, %v3478
        %v3561 = vadd.f32 %v3367, %v3383
        %v3562 = vadd.f32 %v3561, %v3399
        %v3563 = vadd.f32 %v3562, %v3415
        %v3564 = vadd.f32 %v3563, %v3431
        %v3565 = vadd.f32 %v3564, %v3447
        %v3566 = vadd.f32 %v3565, %v3463
        %v3567 = vadd.f32 %v3566, %v3479
        %v3568 = vadd.f32 %v3368, %v3384
        %v3569 = vadd.f32 %v3568, %v3400
        %v3570 = vadd.f32 %v3569, %v3416
        %v3571 = vadd.f32 %v3570, %v3432
        %v3572 = vadd.f32 %v3571, %v3448
        %v3573 = vadd.f32 %v3572, %v3464
        %v3574 = vadd.f32 %v3573, %v3480
        %v3575 = vadd.f32 %v3369, %v3385
        %v3576 = vadd.f32 %v3575, %v3401
        %v3577 = vadd.f32 %v3576, %v3417
        %v3578 = vadd.f32 %v3577, %v3433
        %v3579 = vadd.f32 %v3578, %v3449
        %v3580 = vadd.f32 %v3579, %v3465
        %v3581 = vadd.f32 %v3580, %v3481
        %v3582 = vadd.f32 %v3370, %v3386
        %v3583 = vadd.f32 %v3582, %v3402
        %v3584 = vadd.f32 %v3583, %v3418
        %v3585 = vadd.f32 %v3584, %v3434
        %v3586 = vadd.f32 %v3585, %v3450
        %v3587 = vadd.f32 %v3586, %v3466
        %v3588 = vadd.f32 %v3587, %v3482
        %v3589 = vadd.f32 %v3371, %v3387
        %v3590 = vadd.f32 %v3589, %v3403
        %v3591 = vadd.f32 %v3590, %v3419
        %v3592 = vadd.f32 %v3591, %v3435
        %v3593 = vadd.f32 %v3592, %v3451
        %v3594 = vadd.f32 %v3593, %v3467
        %v3595 = vadd.f32 %v3594, %v3483
        %v3596 = vpack.c.bf16 %v3497, %v3490
        %v3597 = vpack.c.bf16 %v3511, %v3504
        %v3598 = vpack.c.bf16 %v3525, %v3518
        %v3599 = vpack.c.bf16 %v3539, %v3532
        %v3600 = vpack.c.bf16 %v3553, %v3546
        %v3601 = vpack.c.bf16 %v3567, %v3560
        %v3602 = vpack.c.bf16 %v3581, %v3574
        %v3603 = vpack.c.bf16 %v3595, %v3588
        %v3604 = vld [vmem:[#allocation7] sm:$0xf]
        %v3605 = vld [vmem:[#allocation7 + $0x4] sm:$0xf]
        %v3606 = vld [vmem:[#allocation7 + $0x8] sm:$0xf]
        %v3607 = vld [vmem:[#allocation7 + $0xc] sm:$0xf]
        %v3608 = vld [vmem:[#allocation7 + $0x10] sm:$0xf]
        %v3609 = vld [vmem:[#allocation7 + $0x14] sm:$0xf]
        %v3610 = vld [vmem:[#allocation7 + $0x18] sm:$0xf]
        %v3611 = vld [vmem:[#allocation7 + $0x1c] sm:$0xf]
        %v3612 = vld [vmem:[#allocation7 + $0x20] sm:$0xf]
        %v3613 = vld [vmem:[#allocation7 + $0x24] sm:$0xf]
        %v3614 = vld [vmem:[#allocation7 + $0x28] sm:$0xf]
        %v3615 = vld [vmem:[#allocation7 + $0x2c] sm:$0xf]
        %v3616 = vld [vmem:[#allocation7 + $0x30] sm:$0xf]
        %v3617 = vld [vmem:[#allocation7 + $0x34] sm:$0xf]
        %v3618 = vld [vmem:[#allocation7 + $0x38] sm:$0xf]
        %v3619 = vld [vmem:[#allocation7 + $0x3c] sm:$0xf]
        %v3620 = vld [vmem:[%s4] sm:$0x1]
        %v3622 = vlaneseq
        %v3623 = vshrl.u32 %v3622, 7
        %v3624 = vsub.s32 0, %v3623
        %v3625 = vrot.slane %v3620, %v3624
        %v3643 = vunpack.c.l.b16 %v3604
        %v3644 = vunpack.c.l.b16 %v3605
        %v3645 = vunpack.c.l.b16 %v3606
        %v3646 = vunpack.c.l.b16 %v3607
        %v3647 = vunpack.c.l.b16 %v3608
        %v3648 = vunpack.c.l.b16 %v3609
        %v3649 = vunpack.c.l.b16 %v3610
        %v3650 = vunpack.c.l.b16 %v3611
        %v3651 = vunpack.c.l.b16 %v3612
        %v3652 = vunpack.c.l.b16 %v3613
        %v3653 = vunpack.c.l.b16 %v3614
        %v3654 = vunpack.c.l.b16 %v3615
        %v3655 = vunpack.c.l.b16 %v3616
        %v3656 = vunpack.c.l.b16 %v3617
        %v3657 = vunpack.c.l.b16 %v3618
        %v3658 = vunpack.c.l.b16 %v3619
        %v3659 = vpack.c.b16 %v3644, %v3643
        %v3660 = vpack.c.b16 %v3646, %v3645
        %v3661 = vpack.c.b16 %v3648, %v3647
        %v3662 = vpack.c.b16 %v3650, %v3649
        %v3663 = vpack.c.b16 %v3652, %v3651
        %v3664 = vpack.c.b16 %v3654, %v3653
        %v3665 = vpack.c.b16 %v3656, %v3655
        %v3666 = vpack.c.b16 %v3658, %v3657
        %3675 = vmatprep.subr.bf16.mxu0 0
        %3676 = vmatpush1.bf16.msra.mxu0 %v3659
        %3677 = vmatprep.subr.bf16.mxu0 0
        %3678 = vmatpush1.bf16.msra.mxu0 %v3660
        %3679 = vmatprep.subr.bf16.mxu0 0
        %3680 = vmatpush1.bf16.msra.mxu0 %v3661
        %3681 = vmatprep.subr.bf16.mxu0 0
        %3682 = vmatpush1.bf16.msra.mxu0 %v3662
        %3683 = vmatprep.subr.bf16.mxu0 0
        %3684 = vmatpush1.bf16.msra.mxu0 %v3663
        %3685 = vmatprep.subr.bf16.mxu0 0
        %3686 = vmatpush1.bf16.msra.mxu0 %v3664
        %3687 = vmatprep.subr.bf16.mxu0 0
        %3688 = vmatpush1.bf16.msra.mxu0 %v3665
        %3689 = vmatprep.subr.bf16.mxu0 0
        %3690 = vmatpush1.bf16.msra.mxu0 %v3666
        %3691 = vmatprep.subr.bf16.mxu0 0
        %3692 = vmatpush1.bf16.msra.mxu0 0
        %3693 = vmatprep.subr.bf16.mxu0 0
        %3694 = vmatpush1.bf16.msra.mxu0 0
        %3695 = vmatprep.subr.bf16.mxu0 0
        %3696 = vmatpush1.bf16.msra.mxu0 0
        %3697 = vmatprep.subr.bf16.mxu0 0
        %3698 = vmatpush1.bf16.msra.mxu0 0
        %3699 = vmatprep.subr.bf16.mxu0 0
        %3700 = vmatpush1.bf16.msra.mxu0 0
        %3701 = vmatprep.subr.bf16.mxu0 0
        %3702 = vmatpush1.bf16.msra.mxu0 0
        %3703 = vmatprep.subr.bf16.mxu0 0
        %3704 = vmatpush1.bf16.msra.mxu0 0
        %3705 = vmatprep.subr.bf16.mxu0 0
        %3706 = vmatpush1.bf16.msra.mxu0 0
        %3707 = vmatprep.mubr.bf16.mxu0 0
        %3708 = vmatmul.mubr.bf16.gmra.mrb[0].mxu0 %v3596
        %v3709 = vpop.f32.mrb[0].mxu0
        %v3710 = vadd.f32 %v3625, %v3709
        %v3711 = vpop.f32.mrb[0].mxu0
        %v3712 = vpop.f32.mrb[0].mxu0
        %v3713 = vadd.f32 %v3625, %v3712
        %v3714 = vpop.f32.mrb[0].mxu0
        %3715 = vmatprep.mubr.bf16.mxu0 0
        %3716 = vmatmul.mubr.bf16.gmra.mrb[0].mxu0 %v3597
        %v3717 = vpop.f32.mrb[0].mxu0
        %v3718 = vadd.f32 %v3625, %v3717
        %v3719 = vpop.f32.mrb[0].mxu0
        %v3720 = vpop.f32.mrb[0].mxu0
        %v3721 = vadd.f32 %v3625, %v3720
        %v3722 = vpop.f32.mrb[0].mxu0
        %3723 = vmatprep.mubr.bf16.mxu0 0
        %3724 = vmatmul.mubr.bf16.gmra.mrb[0].mxu0 %v3598
        %v3725 = vpop.f32.mrb[0].mxu0
        %v3726 = vadd.f32 %v3625, %v3725
        %v3727 = vpop.f32.mrb[0].mxu0
        %v3728 = vpop.f32.mrb[0].mxu0
        %v3729 = vadd.f32 %v3625, %v3728
        %v3730 = vpop.f32.mrb[0].mxu0
        %3731 = vmatprep.mubr.bf16.mxu0 0
        %3732 = vmatmul.mubr.bf16.gmra.mrb[0].mxu0 %v3599
        %v3733 = vpop.f32.mrb[0].mxu0
        %v3734 = vadd.f32 %v3625, %v3733
        %v3735 = vpop.f32.mrb[0].mxu0
        %v3736 = vpop.f32.mrb[0].mxu0
        %v3737 = vadd.f32 %v3625, %v3736
        %v3738 = vpop.f32.mrb[0].mxu0
        %3739 = vmatprep.mubr.bf16.mxu0 0
        %3740 = vmatmul.mubr.bf16.gmra.mrb[0].mxu0 %v3600
        %v3741 = vpop.f32.mrb[0].mxu0
        %v3742 = vadd.f32 %v3625, %v3741
        %v3743 = vpop.f32.mrb[0].mxu0
        %v3744 = vpop.f32.mrb[0].mxu0
        %v3745 = vadd.f32 %v3625, %v3744
        %v3746 = vpop.f32.mrb[0].mxu0
        %3747 = vmatprep.mubr.bf16.mxu0 0
        %3748 = vmatmul.mubr.bf16.gmra.mrb[0].mxu0 %v3601
        %v3749 = vpop.f32.mrb[0].mxu0
        %v3750 = vadd.f32 %v3625, %v3749
        %v3751 = vpop.f32.mrb[0].mxu0
        %v3752 = vpop.f32.mrb[0].mxu0
        %v3753 = vadd.f32 %v3625, %v3752
        %v3754 = vpop.f32.mrb[0].mxu0
        %3755 = vmatprep.mubr.bf16.mxu0 0
        %3756 = vmatmul.mubr.bf16.gmra.mrb[0].mxu0 %v3602
        %v3757 = vpop.f32.mrb[0].mxu0
        %v3758 = vadd.f32 %v3625, %v3757
        %v3759 = vpop.f32.mrb[0].mxu0
        %v3760 = vpop.f32.mrb[0].mxu0
        %v3761 = vadd.f32 %v3625, %v3760
        %v3762 = vpop.f32.mrb[0].mxu0
        %3763 = vmatprep.mubr.bf16.mxu0 0
        %3764 = vmatmul.mubr.bf16.gmra.mrb[0].mxu0 %v3603
        %v3765 = vpop.f32.mrb[0].mxu0
        %v3766 = vadd.f32 %v3625, %v3765
        %v3767 = vpop.f32.mrb[0].mxu0
        %v3768 = vpop.f32.mrb[0].mxu0
        %v3769 = vadd.f32 %v3625, %v3768
        %v3770 = vpop.f32.mrb[0].mxu0
        %3771 = vdwg.mxu0
        %3772 = vst [vmem:[%s298] sm:$0xff] %v3710
        %3773 = vst [vmem:[%s298 + $0x8] sm:$0xff] %v3713
        %3774 = vst [vmem:[%s298 + $0x10] sm:$0xff] %v3718
        %3775 = vst [vmem:[%s298 + $0x18] sm:$0xff] %v3721
        %3776 = vst [vmem:[%s298 + $0x20] sm:$0xff] %v3726
        %3777 = vst [vmem:[%s298 + $0x28] sm:$0xff] %v3729
        %3778 = vst [vmem:[%s298 + $0x30] sm:$0xff] %v3734
        %3779 = vst [vmem:[%s298 + $0x38] sm:$0xff] %v3737
        %3780 = vst [vmem:[%s298 + $0x40] sm:$0xff] %v3742
        %3781 = vst [vmem:[%s298 + $0x48] sm:$0xff] %v3745
        %3782 = vst [vmem:[%s298 + $0x50] sm:$0xff] %v3750
        %3783 = vst [vmem:[%s298 + $0x58] sm:$0xff] %v3753
        %3784 = vst [vmem:[%s298 + $0x60] sm:$0xff] %v3758
        %3785 = vst [vmem:[%s298 + $0x68] sm:$0xff] %v3761
        %3786 = vst [vmem:[%s298 + $0x70] sm:$0xff] %v3766
        %3787 = vst [vmem:[%s298 + $0x78] sm:$0xff] %v3769
        %s3788 = sand.u32 %s163, 1
        %s3789 = scalar_lea.sflag [#allocation4], %s3788
        %s3790 = sand.u32 %s163, 1
        %s3791 = smul.addr %s3790, 128
        %s3792 = scalar_lea.vmem [#allocation8], %s3791
        // Predicated region
        $region57: #{tpu_custom_call.1} parent=43 // pred_check
          %p3793 = pneg %p173
        $region58: #{tpu_custom_call.1} parent=43 // pred_check_branch
          %3795 = sbr.rel (%p3793) target = $region60
        $region59: #{tpu_custom_call.1} parent=43 // pred_region
          %s3797 = ssub.s32 2048, 2048
          %3798 = vsyncadd %s3789, %s3797
          %s3799 = smul.addr %s24, 16
          %s3800 = smul.addr %s3799, 128
          %s3801 = scalar_lea.hbm %s6, %s3800
          %s3802 = sshll.u32 %s3792, 4
          %s3803 = int_to_ptr.vmem [resolvable:$true] %s3802
          %3808 = dma.vmem_to_hbm [thread:$0]  %s3803, 2048, %s3801, %s3789, 128, 128, 8
        $region60: #{tpu_custom_call.1} parent=43 // pred_fallthru
          _
      $region44: #{tpu_custom_call.1} parent=5 // pred_fallthru
        _
      %p3809 = scmp.le.s32.totalorder 2, %s19
      // Predicated region
      $region61: #{tpu_custom_call.1} parent=5 // pred_check
        %p3810 = pneg %p3809
      $region62: #{tpu_custom_call.1} parent=5 // pred_check_branch
        %3812 = sbr.rel (%p3810) target = $region64
      $region63: #{tpu_custom_call.1} parent=5 // pred_region
        %s3813 = ssub.s32 %s19, 2
        // Predicated region
        $region65: #{tpu_custom_call.1} parent=63 // pred_check
          %p3814 = pneg %p179
        $region66: #{tpu_custom_call.1} parent=63 // pred_check_branch
          %3816 = sbr.rel (%p3814) target = $region68
        $region67: #{tpu_custom_call.1} parent=63 // pred_region
          %s3817 = sand.u32 %s164, 1
          %s3818 = scalar_lea.sflag [#allocation4], %s3817
          %s3819 = sand.u32 %s164, 1
          %s3820 = smul.addr %s3819, 128
          %s3821 = scalar_lea.vmem [#allocation8], %s3820
          %3822 = dma.done %s3818, 2048
        $region68: #{tpu_custom_call.1} parent=63 // pred_fallthru
          _
      $region64: #{tpu_custom_call.1} parent=5 // pred_fallthru
        _
    $region6: #{tpu_custom_call.1} parent=1 // loop_footer
      %s23 = sadd.s32 1, %s19
    $region7: #{tpu_custom_call.1} parent=1 // loop_footer_branch
      %18 = sbr.rel target = $region3
    $region8: #{tpu_custom_call.1} parent=1 // loop_exit
      _
    %3823 = vsyncpa [#allocation3], 1
    %s3824 = scalar_lea.sflag [#allocation3], 1
    %3825 = vsyncpa %s3824, 1
    %3826 = vsyncpa [#allocation6], 1
    %3827 = vsyncpa [#allocation4], 1
    %s3828 = scalar_lea.sflag [#allocation4], 1
    %3829 = vsyncpa %s3828, 1

</llo_original>
